<compile_context>
chip_gen: v5e
topology: v5e:2x2
jax: 0.10.0
libtpu: 0.0.40
codegen_flags: <defaults>
</compile_context>

<pallas_src>
import jax
import jax.numpy as jnp
from jax.experimental import pallas as pl
from jax.experimental.pallas import tpu as pltpu

N_SYMM = 37 * 2          # 74  (dist + omega)
N_ASYMM = 37 + 19        # 56  (theta + phi)
ASYMM_OFF = 128          # asymm columns start at a lane-tile boundary in the fused slab
W_FUSED = ASYMM_OFF + N_ASYMM   # 184


def _distance_kernel(x_ij_ref, x_ji_ref, wcat_ref, bcat_ref, ws_ref, bs_ref,
                     symm_ref, asymm_ref):
    # x_ij_ref : (1, TI, TJ, C)   tile at rows i, cols j
    # x_ji_ref : (1, TJ, TI, C)   mirrored tile at rows j, cols i
    # wcat_ref : (C, 184)         fused weights  [0:74]=W_symm^T, [128:184]=W_asymm^T
    # bcat_ref : (1, 184)         fused biases
    # ws_ref   : (C, 74)          W_symm^T (for the mirrored tile)
    # bs_ref   : (1, 74)          b_symm
    # symm_ref : (1, 74, TI, TJ)  channels-major symmetrized logits tile
    # asymm_ref: (1, 56, TI, TJ)  channels-major asymmetric logits tile
    ti = x_ij_ref.shape[1]
    tj = x_ij_ref.shape[2]
    c = x_ij_ref.shape[3]

    # Flatten pairs -> rows of the matmul.  Free relayout when the merged leading dims
    # are sublane-aligned (TJ % 8 == 0 / TI % 8 == 0, guaranteed by the tile choice).
    x_ij = x_ij_ref[0].reshape(ti * tj, c)
    x_ji = x_ji_ref[0].reshape(tj * ti, c)

    # Fused projection for the (i, j) tile: one pass of the LHS through the MXU.
    comb = jnp.dot(x_ij, wcat_ref[...], preferred_element_type=jnp.float32)
    comb = comb + bcat_ref[...].astype(jnp.float32)

    sy_ij = comb[:, :N_SYMM].reshape(ti, tj, N_SYMM)                       # (TI, TJ, 74)
    asym = comb[:, ASYMM_OFF:ASYMM_OFF + N_ASYMM].reshape(ti, tj, N_ASYMM)  # (TI, TJ, 56)

    # Symm projection of the mirrored (j, i) tile.  Bias appears once here and once in
    # comb, matching logits_symm + logits_symm^T (which carries the bias twice).
    sy_ji = jnp.dot(x_ji, ws_ref[...], preferred_element_type=jnp.float32)
    sy_ji = sy_ji + bs_ref[...].astype(jnp.float32)
    sy_ji = sy_ji.reshape(tj, ti, N_SYMM)                                   # (TJ, TI, 74)

    # Tile-local symmetrization: symm[a, d] = sy_ij[a, d] + sy_ji[d, a].
    symm = sy_ij + jnp.transpose(sy_ji, (1, 0, 2))                          # (TI, TJ, 74)

    # Channels-last -> channels-major so stores are lane-dense (..., TJ) slabs and no
    # post-kernel HBM transpose pass is needed.  Decomposed into two well-supported
    # transposes: swap last two dims (XLU batched 2-D transpose), then swap leading dims.
    symm_cf = jnp.swapaxes(jnp.swapaxes(symm, 1, 2), 0, 1)                  # (74, TI, TJ)
    asym_cf = jnp.swapaxes(jnp.swapaxes(asym, 1, 2), 0, 1)                  # (56, TI, TJ)

    symm_ref[0] = symm_cf.astype(symm_ref.dtype)
    asymm_ref[0] = asym_cf.astype(asymm_ref.dtype)


def _pick_tiles(L):
    """Spatial tile sizes (TI, TJ).  TJ is the lane dim of the output blocks (multiple
    of 128 or the full extent); TI is a sublane dim (multiple of 8 or the full extent)."""
    if L % 128 == 0:
        return 64, 128
    return L, L        # small / irregular L: fall back to whole-extent blocks


def _vmem_limit_bytes():
    # Leave headroom below the physical VMEM of the current chip (v7x has only 64 MiB).
    try:
        return int(pltpu.get_tpu_info().vmem_capacity_bytes * 3 // 4)
    except Exception:
        return 48 * 1024 * 1024


def distance_network_forward(x, w_symm, b_symm, w_asymm, b_asymm):
    """x: (B, L, L, C).  w_symm: (74, C), b_symm: (74,), w_asymm: (56, C), b_asymm: (56,).

    Returns (logits_dist, logits_omega, logits_theta, logits_phi) with shapes
    (B,37,L,L), (B,37,L,L), (B,37,L,L), (B,19,L,L) — matching the PyTorch module."""
    B, L, L2, C = x.shape
    assert L == L2, "pair features must be square over the two sequence axes"
    dt = x.dtype

    ti, tj = _pick_tiles(L)
    assert L % ti == 0 and L % tj == 0

    # Fused weight/bias slabs (built once; stay VMEM-resident via constant index_maps).
    wcat = jnp.zeros((C, W_FUSED), dt)
    wcat = wcat.at[:, :N_SYMM].set(jnp.asarray(w_symm, dt).T)
    wcat = wcat.at[:, ASYMM_OFF:].set(jnp.asarray(w_asymm, dt).T)
    bcat = jnp.zeros((1, W_FUSED), dt)
    bcat = bcat.at[:, :N_SYMM].set(jnp.asarray(b_symm, dt))
    bcat = bcat.at[:, ASYMM_OFF:].set(jnp.asarray(b_asymm, dt))
    ws = jnp.asarray(w_symm, dt).T                 # (C, 74)   for the mirrored tile
    bs = jnp.asarray(b_symm, dt)[None, :]          # (1, 74)

    grid = (B, L // ti, L // tj)

    symm, asymm = pl.pallas_call(
        _distance_kernel,
        out_shape=(
            jax.ShapeDtypeStruct((B, N_SYMM, L, L), dt),
            jax.ShapeDtypeStruct((B, N_ASYMM, L, L), dt),
        ),
        grid_spec=pltpu.PrefetchScalarGridSpec(
            num_scalar_prefetch=0,
            grid=grid,
            in_specs=[
                # x tile at rows i, cols j ...
                pl.BlockSpec((1, ti, tj, C), lambda b, i, j: (b, i, j, 0)),
                # ... and the mirrored tile at rows j, cols i (for the symmetrization).
                pl.BlockSpec((1, tj, ti, C), lambda b, i, j: (b, j, i, 0)),
                pl.BlockSpec((C, W_FUSED), lambda b, i, j: (0, 0)),
                pl.BlockSpec((1, W_FUSED), lambda b, i, j: (0, 0)),
                pl.BlockSpec((C, N_SYMM), lambda b, i, j: (0, 0)),
                pl.BlockSpec((1, N_SYMM), lambda b, i, j: (0, 0)),
            ],
            out_specs=[
                pl.BlockSpec((1, N_SYMM, ti, tj), lambda b, i, j: (b, 0, i, j)),
                pl.BlockSpec((1, N_ASYMM, ti, tj), lambda b, i, j: (b, 0, i, j)),
            ],
        ),
        compiler_params=pltpu.CompilerParams(
            dimension_semantics=("parallel", "parallel", "parallel"),
            vmem_limit_bytes=_vmem_limit_bytes(),
        ),
    )(x, x, wcat, bcat, ws, bs)

    # Outputs are already channels-major (NCHW); only cheap channel slicing remains.
    logits_dist = symm[:, :37]
    logits_omega = symm[:, 37:]
    logits_theta = asymm[:, :37]
    logits_phi = asymm[:, 37:]
    return logits_dist, logits_omega, logits_theta, logits_phi


def _reference_forward(x, w_symm, b_symm, w_asymm, b_asymm):
    """Pure-JAX reference matching the PyTorch forward exactly (f32-accurate matmuls)."""
    hi = jax.lax.Precision.HIGHEST
    la = jnp.einsum("bijc,oc->bijo", x, w_asymm, precision=hi) + b_asymm
    logits_theta = jnp.transpose(la[:, :, :, :37], (0, 3, 1, 2))
    logits_phi = jnp.transpose(la[:, :, :, 37:], (0, 3, 1, 2))
    ls = jnp.einsum("bijc,oc->bijo", x, w_symm, precision=hi) + b_symm
    ls = ls + jnp.transpose(ls, (0, 2, 1, 3))
    logits_dist = jnp.transpose(ls[:, :, :, :37], (0, 3, 1, 2))
    logits_omega = jnp.transpose(ls[:, :, :, 37:], (0, 3, 1, 2))
    return logits_dist, logits_omega, logits_theta, logits_phi


if __name__ == "__main__":
    def _check(B, L, C, seed):
        key = jax.random.PRNGKey(seed)
        kx, kws, kbs, kwa, kba = jax.random.split(key, 5)
        x = jax.random.normal(kx, (B, L, L, C), dtype=jnp.float32)
        # NOTE: the PyTorch module zero-initializes both projections (reset_parameter),
        # which would make all outputs zero.  Small random weights exercise the math;
        # forward semantics are independent of the weight values.
        w_symm = 0.1 * jax.random.normal(kws, (N_SYMM, C), dtype=jnp.float32)
        b_symm = 0.1 * jax.random.normal(kbs, (N_SYMM,), dtype=jnp.float32)
        w_asymm = 0.1 * jax.random.normal(kwa, (N_ASYMM, C), dtype=jnp.float32)
        b_asymm = 0.1 * jax.random.normal(kba, (N_ASYMM,), dtype=jnp.float32)

        outs = distance_network_forward(x, w_symm, b_symm, w_asymm, b_asymm)
        outs = jax.block_until_ready(outs)
        refs = _reference_forward(x, w_symm, b_symm, w_asymm, b_asymm)

        names = ["dist", "omega", "theta", "phi"]
        exp_shapes = [(B, 37, L, L), (B, 37, L, L), (B, 37, L, L), (B, 19, L, L)]
        for o, r, n, s in zip(outs, refs, names, exp_shapes):
            assert o.shape == s, f"{n}: shape {o.shape} != {s}"
            err = float(jnp.max(jnp.abs(o - r)))
            assert err < 2e-3, f"{n}: max abs err {err}"

    # Small sanity shape (whole-extent fallback tiles, grid=(2, 1, 1)).
    _check(B=2, L=8, C=32, seed=0)
    # Shape exercising the real tiled path: TI=64, TJ=128, grid=(1, 4, 2), mirrored
    # off-diagonal tiles, lane-dense channels-major stores.
    _check(B=1, L=256, C=32, seed=1)

    print("KERNEL_OK")
</pallas_src>

<mosaic_0001>
module attributes {stable_mosaic.version = 11 : i64} {
  func.func @_distance_kernel(%arg0: i32, %arg1: i32, %arg2: i32, %arg3: memref<1x8x8x32xf32, #tpu.memory_space<vmem>>, %arg4: memref<1x8x8x32xf32, #tpu.memory_space<vmem>>, %arg5: memref<32x184xf32, #tpu.memory_space<vmem>>, %arg6: memref<1x184xf32, #tpu.memory_space<vmem>>, %arg7: memref<32x74xf32, #tpu.memory_space<vmem>>, %arg8: memref<1x74xf32, #tpu.memory_space<vmem>>, %arg9: memref<1x74x8x8xf32, #tpu.memory_space<vmem>>, %arg10: memref<1x56x8x8xf32, #tpu.memory_space<vmem>>) attributes {dimension_semantics = [#tpu.dimension_semantics<parallel>, #tpu.dimension_semantics<parallel>, #tpu.dimension_semantics<parallel>], iteration_bounds = array<i64: 2, 1, 1>, scalar_prefetch = 0 : i64, scratch_operands = 0 : i64, tpu.core_type = #tpu.core_type<tc>, window_params = [{transform_indices = @transform_0, window_bounds = array<i64: 1, 8, 8, 32>}, {transform_indices = @transform_1, window_bounds = array<i64: 1, 8, 8, 32>}, {pipeline_mode = #tpu.pipeline_mode<synchronous>, transform_indices = @transform_2, window_bounds = array<i64: 32, 184>}, {pipeline_mode = #tpu.pipeline_mode<synchronous>, transform_indices = @transform_3, window_bounds = array<i64: 1, 184>}, {pipeline_mode = #tpu.pipeline_mode<synchronous>, transform_indices = @transform_4, window_bounds = array<i64: 32, 74>}, {pipeline_mode = #tpu.pipeline_mode<synchronous>, transform_indices = @transform_5, window_bounds = array<i64: 1, 74>}, {transform_indices = @transform_6, window_bounds = array<i64: 1, 74, 8, 8>}, {transform_indices = @transform_7, window_bounds = array<i64: 1, 56, 8, 8>}]} {
    %c0 = arith.constant 0 : index
    %c0_0 = arith.constant 0 : index
    %c0_1 = arith.constant 0 : index
    %c0_2 = arith.constant 0 : index
    %0 = vector.load %arg3[%c0, %c0_0, %c0_1, %c0_2] : memref<1x8x8x32xf32, #tpu.memory_space<vmem>>, vector<1x8x8x32xf32>
    %1 = vector.shape_cast %0 : vector<1x8x8x32xf32> to vector<8x8x32xf32>
    %2 = vector.shape_cast %1 : vector<8x8x32xf32> to vector<64x32xf32>
    %c0_3 = arith.constant 0 : index
    %c0_4 = arith.constant 0 : index
    %c0_5 = arith.constant 0 : index
    %c0_6 = arith.constant 0 : index
    %3 = vector.load %arg4[%c0_3, %c0_4, %c0_5, %c0_6] : memref<1x8x8x32xf32, #tpu.memory_space<vmem>>, vector<1x8x8x32xf32>
    %4 = vector.shape_cast %3 : vector<1x8x8x32xf32> to vector<8x8x32xf32>
    %5 = vector.shape_cast %4 : vector<8x8x32xf32> to vector<64x32xf32>
    %c0_7 = arith.constant 0 : index
    %c0_8 = arith.constant 0 : index
    %6 = vector.load %arg5[%c0_7, %c0_8] : memref<32x184xf32, #tpu.memory_space<vmem>>, vector<32x184xf32>
    %cst = arith.constant dense<0.000000e+00> : vector<64x184xf32>
    %7 = tpu.matmul %2, %6, %cst {dimension_numbers = #tpu.dot_dimension_numbers<[1], [0], [0], [1], [0, 0, 1, 1], [], []>} : vector<64x32xf32>, vector<32x184xf32>, vector<64x184xf32> -> vector<64x184xf32>
    %c0_9 = arith.constant 0 : index
    %c0_10 = arith.constant 0 : index
    %8 = vector.load %arg6[%c0_9, %c0_10] : memref<1x184xf32, #tpu.memory_space<vmem>>, vector<1x184xf32>
    %9 = vector.broadcast %8 : vector<1x184xf32> to vector<64x184xf32>
    %10 = arith.addf %7, %9 : vector<64x184xf32>
    %11 = vector.extract_strided_slice %10 {offsets = [0, 0], sizes = [64, 74], strides = [1, 1]} : vector<64x184xf32> to vector<64x74xf32>
    %12 = vector.shape_cast %11 : vector<64x74xf32> to vector<8x8x74xf32>
    %13 = vector.extract_strided_slice %10 {offsets = [0, 128], sizes = [64, 56], strides = [1, 1]} : vector<64x184xf32> to vector<64x56xf32>
    %14 = vector.shape_cast %13 : vector<64x56xf32> to vector<8x8x56xf32>
    %c0_11 = arith.constant 0 : index
    %c0_12 = arith.constant 0 : index
    %15 = vector.load %arg7[%c0_11, %c0_12] : memref<32x74xf32, #tpu.memory_space<vmem>>, vector<32x74xf32>
    %cst_13 = arith.constant dense<0.000000e+00> : vector<64x74xf32>
    %16 = tpu.matmul %5, %15, %cst_13 {dimension_numbers = #tpu.dot_dimension_numbers<[1], [0], [0], [1], [0, 0, 1, 1], [], []>} : vector<64x32xf32>, vector<32x74xf32>, vector<64x74xf32> -> vector<64x74xf32>
    %c0_14 = arith.constant 0 : index
    %c0_15 = arith.constant 0 : index
    %17 = vector.load %arg8[%c0_14, %c0_15] : memref<1x74xf32, #tpu.memory_space<vmem>>, vector<1x74xf32>
    %18 = vector.broadcast %17 : vector<1x74xf32> to vector<64x74xf32>
    %19 = arith.addf %16, %18 : vector<64x74xf32>
    %20 = vector.shape_cast %19 : vector<64x74xf32> to vector<8x8x74xf32>
    %21 = tpu.transpose %20, [1, 0, 2] : vector<8x8x74xf32> -> vector<8x8x74xf32>
    %22 = arith.addf %12, %21 : vector<8x8x74xf32>
    %23 = tpu.transpose %22, [0, 2, 1] : vector<8x8x74xf32> -> vector<8x74x8xf32>
    %24 = tpu.transpose %23, [1, 0, 2] : vector<8x74x8xf32> -> vector<74x8x8xf32>
    %25 = tpu.transpose %14, [0, 2, 1] : vector<8x8x56xf32> -> vector<8x56x8xf32>
    %26 = tpu.transpose %25, [1, 0, 2] : vector<8x56x8xf32> -> vector<56x8x8xf32>
    %c0_16 = arith.constant 0 : index
    %c0_17 = arith.constant 0 : index
    %c0_18 = arith.constant 0 : index
    %c0_19 = arith.constant 0 : index
    %27 = vector.load %arg9[%c0_16, %c0_17, %c0_18, %c0_19] : memref<1x74x8x8xf32, #tpu.memory_space<vmem>>, vector<1x74x8x8xf32>
    %28 = vector.shape_cast %27 : vector<1x74x8x8xf32> to vector<74x8x8xf32>
    %29 = vector.shape_cast %24 : vector<74x8x8xf32> to vector<1x74x8x8xf32>
    tpu.vector_store %arg9[%c0_16, %c0_17, %c0_18, %c0_19], %29 {strides = array<i32>} : memref<1x74x8x8xf32, #tpu.memory_space<vmem>>, vector<1x74x8x8xf32>,
    %c0_20 = arith.constant 0 : index
    %c0_21 = arith.constant 0 : index
    %c0_22 = arith.constant 0 : index
    %c0_23 = arith.constant 0 : index
    %30 = vector.load %arg10[%c0_20, %c0_21, %c0_22, %c0_23] : memref<1x56x8x8xf32, #tpu.memory_space<vmem>>, vector<1x56x8x8xf32>
    %31 = vector.shape_cast %30 : vector<1x56x8x8xf32> to vector<56x8x8xf32>
    %32 = vector.shape_cast %26 : vector<56x8x8xf32> to vector<1x56x8x8xf32>
    tpu.vector_store %arg10[%c0_20, %c0_21, %c0_22, %c0_23], %32 {strides = array<i32>} : memref<1x56x8x8xf32, #tpu.memory_space<vmem>>, vector<1x56x8x8xf32>,
    return
  }
  func.func @transform_0(%arg0: i32, %arg1: i32, %arg2: i32) -> (i32, i32, i32, i32) {
    %c0_i32 = arith.constant 0 : i32
    %c0_i32_0 = arith.constant 0 : i32
    return %arg0, %arg1, %arg2, %c0_i32 : i32, i32, i32, i32
  }
  func.func @transform_1(%arg0: i32, %arg1: i32, %arg2: i32) -> (i32, i32, i32, i32) {
    %c0_i32 = arith.constant 0 : i32
    %c0_i32_0 = arith.constant 0 : i32
    return %arg0, %arg2, %arg1, %c0_i32 : i32, i32, i32, i32
  }
  func.func @transform_2(%arg0: i32, %arg1: i32, %arg2: i32) -> (i32, i32) {
    %c0_i32 = arith.constant 0 : i32
    %c0_i32_0 = arith.constant 0 : i32
    %c0_i32_1 = arith.constant 0 : i32
    return %c0_i32, %c0_i32_0 : i32, i32
  }
  func.func @transform_3(%arg0: i32, %arg1: i32, %arg2: i32) -> (i32, i32) {
    %c0_i32 = arith.constant 0 : i32
    %c0_i32_0 = arith.constant 0 : i32
    %c0_i32_1 = arith.constant 0 : i32
    return %c0_i32, %c0_i32_0 : i32, i32
  }
  func.func @transform_4(%arg0: i32, %arg1: i32, %arg2: i32) -> (i32, i32) {
    %c0_i32 = arith.constant 0 : i32
    %c0_i32_0 = arith.constant 0 : i32
    %c0_i32_1 = arith.constant 0 : i32
    return %c0_i32, %c0_i32_0 : i32, i32
  }
  func.func @transform_5(%arg0: i32, %arg1: i32, %arg2: i32) -> (i32, i32) {
    %c0_i32 = arith.constant 0 : i32
    %c0_i32_0 = arith.constant 0 : i32
    %c0_i32_1 = arith.constant 0 : i32
    return %c0_i32, %c0_i32_0 : i32, i32
  }
  func.func @transform_6(%arg0: i32, %arg1: i32, %arg2: i32) -> (i32, i32, i32, i32) {
    %c0_i32 = arith.constant 0 : i32
    %c0_i32_0 = arith.constant 0 : i32
    return %arg0, %c0_i32, %arg1, %arg2 : i32, i32, i32, i32
  }
  func.func @transform_7(%arg0: i32, %arg1: i32, %arg2: i32) -> (i32, i32, i32, i32) {
    %c0_i32 = arith.constant 0 : i32
    %c0_i32_0 = arith.constant 0 : i32
    return %arg0, %c0_i32, %arg1, %arg2 : i32, i32, i32, i32
  }
}

</mosaic_0001>

<llo_original>
// kernel: tpu_custom_call.1
$region0: #{tpu_custom_call.1}
  #allocation0 [shape = 'u32[]', space=smem, size = 0x4, offset = 0x4, fixed_abs, tag = 'smem constant byte address 0x4 - core index']
  #allocation1 [shape = 'u32[72,128]{1,0:T(1,128)}', space=vmem, size = 0x9000, scoped, tag = 'internal scratch']
  %s0 = inlined_call_operand.hbm [shape: f32[2,8,8,32], index: 0, kind: input, shape index: {}]
  %s1 = inlined_call_operand.hbm [shape: f32[2,8,8,32], index: 1, kind: input, shape index: {}]
  %s2 = inlined_call_operand.hbm [shape: f32[32,184], index: 2, kind: input, shape index: {}]
  %s3 = inlined_call_operand.vmem [shape: f32[1,184], index: 3, kind: input, shape index: {}]
  %s4 = inlined_call_operand.hbm [shape: f32[32,74], index: 4, kind: input, shape index: {}]
  %s5 = inlined_call_operand.vmem [shape: f32[1,74], index: 5, kind: input, shape index: {}]
  %s6 = inlined_call_operand.vmem [shape: f32[2,74,8,8], index: 6, kind: output, shape index: {0}]
  %s7 = inlined_call_operand.vmem [shape: f32[2,56,8,8], index: 7, kind: output, shape index: {1}]
  %8 = xla_tuple %s6, %s7
  %s9 = sld [smem:[#allocation0]]
  $region81: #{tpu_custom_call.1} parent=0
    _
  %s11 = ssub.s32 1, %s9
  %s12 = scalar_select 0, %s11, %s9
  $region1: #{tpu_custom_call.1} parent=0
    #allocation2 [shape = 'u8[65536]{0}', space=vmem, size = 0x10000, scoped, tag = 'input window, operand 0']
    #allocation3 [shape = 's32[2]{0}', space=sflag, size = 0x8, scoped, tag = 'scoped memory for tpu_custom_call.1']
    #allocation4 [shape = 'u8[65536]{0}', space=vmem, size = 0x10000, scoped, tag = 'input window, operand 1']
    #allocation5 [shape = 's32[2]{0}', space=sflag, size = 0x8, scoped, tag = 'scoped memory for tpu_custom_call.1']
    #allocation6 [shape = 'u8[32768]{0}', space=vmem, size = 0x8000, scoped, tag = 'input window, operand 2, single buffered']
    #allocation7 [shape = 'u8[16384]{0}', space=vmem, size = 0x4000, scoped, tag = 'input window, operand 4, single buffered']
    #allocation8 [shape = 's32[1]{0}', space=sflag, size = 0x4, scoped, tag = 'scoped memory for tpu_custom_call.1']
    %13 = vsyncpa [#allocation3], 0
    %s14 = scalar_lea.sflag [#allocation3], 1
    %15 = vsyncpa %s14, 0
    %16 = vsyncpa [#allocation5], 0
    %s17 = scalar_lea.sflag [#allocation5], 1
    %18 = vsyncpa %s17, 0
    %19 = vsyncpa [#allocation8], 0
    loop: start=0, step=1, limit=4
    $region2: #{tpu_custom_call.1} parent=1 // loop_pre_header
      _
    $region3: #{tpu_custom_call.1} parent=1 // loop_header
      %s21 = sphi 0, %s25
      %p22 = scmp.ge.s32.totalorder %s21, 4
      %s28 = sphi 0, %s47
      %s29 = sphi 0, %s43
      %s30 = sphi 0, %s39
      %s31 = sphi 0, %s28
      %s32 = sphi 0, %s29
      %s33 = sphi 0, %s30
      %s34 = sphi 0, %s31
      %s35 = sphi 0, %s32
      %s36 = sphi 0, %s33
      %s54 = sphi 0, %s56
      %s57 = sphi 0, %s54
      %s58 = sphi 0, %s57
      %s74 = sphi 0, %s58
      %s84 = sphi 0, %s86
      %s87 = sphi 0, %s84
      %s88 = sphi 0, %s87
      %s104 = sphi 0, %s88
      %s108 = sphi 0, %s108
      %s110 = sphi 0, %s108
      %s111 = sphi 0, %s110
      %s125 = sphi 0, %s111
      %s129 = sphi 0, %s129
      %s131 = sphi 0, %s129
      %s132 = sphi 0, %s131
      %s146 = sphi 0, %s132
      %s150 = sphi 0, %s150
      %s152 = sphi 0, %s150
      %s153 = sphi 0, %s152
      %s167 = sphi 0, %s153
      %s171 = sphi 0, %s171
      %s173 = sphi 0, %s171
      %s174 = sphi 0, %s173
      %s188 = sphi 0, %s174
      %s198 = sphi 0, %s200
      %s201 = sphi 0, %s198
      %s202 = sphi 0, %s201
      %s218 = sphi 0, %s202
      %s228 = sphi 0, %s230
      %s231 = sphi 0, %s228
      %s232 = sphi 0, %s231
      %s248 = sphi 0, %s232
    $region4: #{tpu_custom_call.1} parent=1 // loop_header_branch
      %24 = sbr.rel (%p22) target = $region8
    $region5: #{tpu_custom_call.1} parent=1 // loop_body
      %s26 = ssub.s32 %s21, 1
      %s27 = ssub.s32 %s21, 2
      %s37 = sadd.s32 1, %s30
      %p38 = scmp.ge.s32.totalorder %s37, 1
      %s39 = scalar_select %p38, 0, %s37
      %s40 = sadd.s32 1, %s29
      %s41 = scalar_select %p38, %s40, %s29
      %p42 = scmp.ge.s32.totalorder %s41, 1
      %s43 = scalar_select %p42, 0, %s41
      %s44 = sadd.s32 1, %s28
      %s45 = scalar_select %p42, %s44, %s28
      %p46 = scmp.ge.s32.totalorder %s45, 2
      %s47 = scalar_select %p46, 0, %s45
      %s48 = ssub.s32 %s28, %s47
      %s49 = ssub.s32 %s29, %s43
      %s50 = sor.u32 %s48, %s49
      %s51 = ssub.s32 %s30, %s39
      %s52 = sor.u32 %s50, %s51
      %p53 = scmp.eq.s32.totalorder %s52, 0
      %s55 = sadd.s32 %s54, 1
      %s56 = scalar_select %p53, %s54, %s55
      %p59 = pneg %p53
      %p60 = scmp.eq.s32.totalorder %s21, 1
      %p61 = por %p59, %p60
      %p62 = scmp.ne.s32.totalorder %s54, %s57
      %p63 = scmp.eq.s32.totalorder %s21, 0
      %p64 = por %p62, %p63
      %p65 = scmp.ne.s32.totalorder %s54, %s57
      %p66 = scmp.eq.s32.totalorder %s26, 1
      %p67 = por %p65, %p66
      %p68 = scmp.ne.s32.totalorder %s57, %s58
      %p69 = scmp.eq.s32.totalorder %s26, 0
      %p70 = por %p68, %p69
      %p71 = scmp.ne.s32.totalorder %s57, %s58
      %p72 = scmp.eq.s32.totalorder %s27, 1
      %p73 = por %p71, %p72
      %p75 = scmp.ne.s32.totalorder %s58, %s74
      %p76 = scmp.eq.s32.totalorder %s27, 0
      %p77 = por %p75, %p76
      %s78 = ssub.s32 %s28, %s47
      %s79 = ssub.s32 %s30, %s39
      %s80 = sor.u32 %s78, %s79
      %s81 = ssub.s32 %s29, %s43
      %s82 = sor.u32 %s80, %s81
      %p83 = scmp.eq.s32.totalorder %s82, 0
      %s85 = sadd.s32 %s84, 1
      %s86 = scalar_select %p83, %s84, %s85
      %p89 = pneg %p83
      %p90 = scmp.eq.s32.totalorder %s21, 1
      %p91 = por %p89, %p90
      %p92 = scmp.ne.s32.totalorder %s84, %s87
      %p93 = scmp.eq.s32.totalorder %s21, 0
      %p94 = por %p92, %p93
      %p95 = scmp.ne.s32.totalorder %s84, %s87
      %p96 = scmp.eq.s32.totalorder %s26, 1
      %p97 = por %p95, %p96
      %p98 = scmp.ne.s32.totalorder %s87, %s88
      %p99 = scmp.eq.s32.totalorder %s26, 0
      %p100 = por %p98, %p99
      %p101 = scmp.ne.s32.totalorder %s87, %s88
      %p102 = scmp.eq.s32.totalorder %s27, 1
      %p103 = por %p101, %p102
      %p105 = scmp.ne.s32.totalorder %s88, %s104
      %p106 = scmp.eq.s32.totalorder %s27, 0
      %p107 = por %p105, %p106
      %s109 = sadd.s32 %s108, 1
      %p112 = scmp.eq.s32.totalorder %s21, 1
      %p113 = scmp.ne.s32.totalorder %s108, %s110
      %p114 = scmp.eq.s32.totalorder %s21, 0
      %p115 = por %p113, %p114
      %p116 = scmp.ne.s32.totalorder %s108, %s110
      %p117 = scmp.eq.s32.totalorder %s26, 1
      %p118 = por %p116, %p117
      %p119 = scmp.ne.s32.totalorder %s110, %s111
      %p120 = scmp.eq.s32.totalorder %s26, 0
      %p121 = por %p119, %p120
      %p122 = scmp.ne.s32.totalorder %s110, %s111
      %p123 = scmp.eq.s32.totalorder %s27, 1
      %p124 = por %p122, %p123
      %p126 = scmp.ne.s32.totalorder %s111, %s125
      %p127 = scmp.eq.s32.totalorder %s27, 0
      %p128 = por %p126, %p127
      %s130 = sadd.s32 %s129, 1
      %p133 = scmp.eq.s32.totalorder %s21, 1
      %p134 = scmp.ne.s32.totalorder %s129, %s131
      %p135 = scmp.eq.s32.totalorder %s21, 0
      %p136 = por %p134, %p135
      %p137 = scmp.ne.s32.totalorder %s129, %s131
      %p138 = scmp.eq.s32.totalorder %s26, 1
      %p139 = por %p137, %p138
      %p140 = scmp.ne.s32.totalorder %s131, %s132
      %p141 = scmp.eq.s32.totalorder %s26, 0
      %p142 = por %p140, %p141
      %p143 = scmp.ne.s32.totalorder %s131, %s132
      %p144 = scmp.eq.s32.totalorder %s27, 1
      %p145 = por %p143, %p144
      %p147 = scmp.ne.s32.totalorder %s132, %s146
      %p148 = scmp.eq.s32.totalorder %s27, 0
      %p149 = por %p147, %p148
      %s151 = sadd.s32 %s150, 1
      %p154 = scmp.eq.s32.totalorder %s21, 1
      %p155 = scmp.ne.s32.totalorder %s150, %s152
      %p156 = scmp.eq.s32.totalorder %s21, 0
      %p157 = por %p155, %p156
      %p158 = scmp.ne.s32.totalorder %s150, %s152
      %p159 = scmp.eq.s32.totalorder %s26, 1
      %p160 = por %p158, %p159
      %p161 = scmp.ne.s32.totalorder %s152, %s153
      %p162 = scmp.eq.s32.totalorder %s26, 0
      %p163 = por %p161, %p162
      %p164 = scmp.ne.s32.totalorder %s152, %s153
      %p165 = scmp.eq.s32.totalorder %s27, 1
      %p166 = por %p164, %p165
      %p168 = scmp.ne.s32.totalorder %s153, %s167
      %p169 = scmp.eq.s32.totalorder %s27, 0
      %p170 = por %p168, %p169
      %s172 = sadd.s32 %s171, 1
      %p175 = scmp.eq.s32.totalorder %s21, 1
      %p176 = scmp.ne.s32.totalorder %s171, %s173
      %p177 = scmp.eq.s32.totalorder %s21, 0
      %p178 = por %p176, %p177
      %p179 = scmp.ne.s32.totalorder %s171, %s173
      %p180 = scmp.eq.s32.totalorder %s26, 1
      %p181 = por %p179, %p180
      %p182 = scmp.ne.s32.totalorder %s173, %s174
      %p183 = scmp.eq.s32.totalorder %s26, 0
      %p184 = por %p182, %p183
      %p185 = scmp.ne.s32.totalorder %s173, %s174
      %p186 = scmp.eq.s32.totalorder %s27, 1
      %p187 = por %p185, %p186
      %p189 = scmp.ne.s32.totalorder %s174, %s188
      %p190 = scmp.eq.s32.totalorder %s27, 0
      %p191 = por %p189, %p190
      %s192 = ssub.s32 %s28, %s47
      %s193 = ssub.s32 %s29, %s43
      %s194 = sor.u32 %s192, %s193
      %s195 = ssub.s32 %s30, %s39
      %s196 = sor.u32 %s194, %s195
      %p197 = scmp.eq.s32.totalorder %s196, 0
      %s199 = sadd.s32 %s198, 1
      %s200 = scalar_select %p197, %s198, %s199
      %p203 = pneg %p197
      %p204 = scmp.eq.s32.totalorder %s21, 1
      %p205 = por %p203, %p204
      %p206 = scmp.ne.s32.totalorder %s198, %s201
      %p207 = scmp.eq.s32.totalorder %s21, 0
      %p208 = por %p206, %p207
      %p209 = scmp.ne.s32.totalorder %s198, %s201
      %p210 = scmp.eq.s32.totalorder %s26, 1
      %p211 = por %p209, %p210
      %p212 = scmp.ne.s32.totalorder %s201, %s202
      %p213 = scmp.eq.s32.totalorder %s26, 0
      %p214 = por %p212, %p213
      %p215 = scmp.ne.s32.totalorder %s201, %s202
      %p216 = scmp.eq.s32.totalorder %s27, 1
      %p217 = por %p215, %p216
      %p219 = scmp.ne.s32.totalorder %s202, %s218
      %p220 = scmp.eq.s32.totalorder %s27, 0
      %p221 = por %p219, %p220
      %s222 = ssub.s32 %s28, %s47
      %s223 = ssub.s32 %s29, %s43
      %s224 = sor.u32 %s222, %s223
      %s225 = ssub.s32 %s30, %s39
      %s226 = sor.u32 %s224, %s225
      %p227 = scmp.eq.s32.totalorder %s226, 0
      %s229 = sadd.s32 %s228, 1
      %s230 = scalar_select %p227, %s228, %s229
      %p233 = pneg %p227
      %p234 = scmp.eq.s32.totalorder %s21, 1
      %p235 = por %p233, %p234
      %p236 = scmp.ne.s32.totalorder %s228, %s231
      %p237 = scmp.eq.s32.totalorder %s21, 0
      %p238 = por %p236, %p237
      %p239 = scmp.ne.s32.totalorder %s228, %s231
      %p240 = scmp.eq.s32.totalorder %s26, 1
      %p241 = por %p239, %p240
      %p242 = scmp.ne.s32.totalorder %s231, %s232
      %p243 = scmp.eq.s32.totalorder %s26, 0
      %p244 = por %p242, %p243
      %p245 = scmp.ne.s32.totalorder %s231, %s232
      %p246 = scmp.eq.s32.totalorder %s27, 1
      %p247 = por %p245, %p246
      %p249 = scmp.ne.s32.totalorder %s232, %s248
      %p250 = scmp.eq.s32.totalorder %s27, 0
      %p251 = por %p249, %p250
      %p252 = scmp.le.s32.totalorder 1, %s21
      %p253 = scmp.lt.s32.totalorder %s21, 3
      %p254 = pnand %p252, %p253
      %p255 = pneg %p254
      // Predicated region
      $region9: #{tpu_custom_call.1} parent=5 // pred_check
        _
      $region10: #{tpu_custom_call.1} parent=5 // pred_check_branch
        %257 = sbr.rel (%p254) target = $region12
      $region11: #{tpu_custom_call.1} parent=5 // pred_region
        %s258 = ssub.s32 %s21, 1
        // Predicated region
        $region13: #{tpu_custom_call.1} parent=11 // pred_check
          %p259 = pneg %p121
        $region14: #{tpu_custom_call.1} parent=11 // pred_check_branch
          %261 = sbr.rel (%p259) target = $region16
        $region15: #{tpu_custom_call.1} parent=11 // pred_region
          %263 = vsyncadd [#allocation5], 0
          %s264 = sshll.u32 %s2, 4
          %s265 = int_to_ptr.hbm [resolvable:$true] %s264
          %s266 = sshll.u32 [#allocation6], 4
          %s267 = int_to_ptr.vmem [resolvable:$true] %s266
          %272 = dma.hbm_to_vmem [thread:$0]  %s265, 1024, %s267, [#allocation5], 256, 256, 16
        $region16: #{tpu_custom_call.1} parent=11 // pred_fallthru
          _
        // Predicated region
        $region17: #{tpu_custom_call.1} parent=11 // pred_check
          %p273 = pneg %p142
        $region18: #{tpu_custom_call.1} parent=11 // pred_check_branch
          %275 = sbr.rel (%p273) target = $region20
        $region19: #{tpu_custom_call.1} parent=11 // pred_region
          _
        $region20: #{tpu_custom_call.1} parent=11 // pred_fallthru
          _
        // Predicated region
        $region21: #{tpu_custom_call.1} parent=11 // pred_check
          %p276 = pneg %p163
        $region22: #{tpu_custom_call.1} parent=11 // pred_check_branch
          %278 = sbr.rel (%p276) target = $region24
        $region23: #{tpu_custom_call.1} parent=11 // pred_region
          %280 = vsyncadd [#allocation8], 0
          %s281 = sshll.u32 %s4, 4
          %s282 = int_to_ptr.hbm [resolvable:$true] %s281
          %s283 = sshll.u32 [#allocation7], 4
          %s284 = int_to_ptr.vmem [resolvable:$true] %s283
          %289 = dma.hbm_to_vmem [thread:$0]  %s282, 512, %s284, [#allocation8], 128, 128, 8
        $region24: #{tpu_custom_call.1} parent=11 // pred_fallthru
          _
        // Predicated region
        $region25: #{tpu_custom_call.1} parent=11 // pred_check
          %p290 = pneg %p184
        $region26: #{tpu_custom_call.1} parent=11 // pred_check_branch
          %292 = sbr.rel (%p290) target = $region28
        $region27: #{tpu_custom_call.1} parent=11 // pred_region
          _
        $region28: #{tpu_custom_call.1} parent=11 // pred_fallthru
          _
      $region12: #{tpu_custom_call.1} parent=5 // pred_fallthru
        _
      %p293 = scmp.lt.s32.totalorder %s21, 2
      // Predicated region
      $region29: #{tpu_custom_call.1} parent=5 // pred_check
        %p294 = pneg %p293
      $region30: #{tpu_custom_call.1} parent=5 // pred_check_branch
        %296 = sbr.rel (%p294) target = $region32
      $region31: #{tpu_custom_call.1} parent=5 // pred_region
        // Predicated region
        $region33: #{tpu_custom_call.1} parent=31 // pred_check
          %p297 = pneg %p64
        $region34: #{tpu_custom_call.1} parent=31 // pred_check_branch
          %299 = sbr.rel (%p297) target = $region36
        $region35: #{tpu_custom_call.1} parent=31 // pred_region
          %s300 = sand.u32 %s54, 1
          %s301 = scalar_lea.sflag [#allocation3], %s300
          %s302 = sand.u32 %s54, 1
          %s303 = smul.addr %s302, 64
          %s304 = scalar_lea.vmem [#allocation2], %s303
          %s305 = smul.u32 8, %s29
          %307 = vsyncadd %s301, 0
          %s308 = sadd.s32 %s30, %s305
          %s309 = smul.addr %s28, 8
          %s310 = sadd.s32 %s308, %s309
          %s311 = smul.addr %s310, 8
          %s312 = scalar_lea.hbm %s0, %s311
          %s313 = sshll.u32 %s312, 4
          %s314 = int_to_ptr.hbm [resolvable:$true] %s313
          %s315 = sshll.u32 %s304, 4
          %s316 = int_to_ptr.vmem [resolvable:$true] %s315
          %321 = dma.hbm_to_vmem [thread:$0]  %s314, 1024, %s316, %s301, 128, 128, 8
        $region36: #{tpu_custom_call.1} parent=31 // pred_fallthru
          _
        // Predicated region
        $region37: #{tpu_custom_call.1} parent=31 // pred_check
          %p322 = pneg %p94
        $region38: #{tpu_custom_call.1} parent=31 // pred_check_branch
          %324 = sbr.rel (%p322) target = $region40
        $region39: #{tpu_custom_call.1} parent=31 // pred_region
          %s325 = sand.u32 %s21, 1
          %s326 = scalar_lea.sflag [#allocation5], %s325
          %s327 = sand.u32 %s84, 1
          %s328 = smul.addr %s327, 64
          %s329 = scalar_lea.vmem [#allocation4], %s328
          %s330 = smul.u32 8, %s30
          %332 = vsyncadd %s326, 0
          %s333 = sadd.s32 %s29, %s330
          %s334 = smul.addr %s28, 8
          %s335 = sadd.s32 %s333, %s334
          %s336 = smul.addr %s335, 8
          %s337 = scalar_lea.hbm %s1, %s336
          %s338 = sshll.u32 %s337, 4
          %s339 = int_to_ptr.hbm [resolvable:$true] %s338
          %s340 = sshll.u32 %s329, 4
          %s341 = int_to_ptr.vmem [resolvable:$true] %s340
          %346 = dma.hbm_to_vmem [thread:$0]  %s339, 1024, %s341, %s326, 128, 128, 8
        $region40: #{tpu_custom_call.1} parent=31 // pred_fallthru
          _
      $region32: #{tpu_custom_call.1} parent=5 // pred_fallthru
        _
      %p347 = scmp.le.s32.totalorder 1, %s21
      %p348 = scmp.lt.s32.totalorder %s21, 3
      %p349 = pnand %p347, %p348
      %p350 = pneg %p349
      // Predicated region
      $region41: #{tpu_custom_call.1} parent=5 // pred_check
        _
      $region42: #{tpu_custom_call.1} parent=5 // pred_check_branch
        %352 = sbr.rel (%p349) target = $region44
      $region43: #{tpu_custom_call.1} parent=5 // pred_region
        %s353 = ssub.s32 %s21, 1
        %s354 = sand.u32 %s57, 1
        %s355 = scalar_lea.sflag [#allocation3], %s354
        %s356 = sand.u32 %s57, 1
        %s357 = smul.addr %s356, 64
        %s358 = scalar_lea.vmem [#allocation2], %s357
        // Predicated region
        $region45: #{tpu_custom_call.1} parent=43 // pred_check
          %p359 = pneg %p70
        $region46: #{tpu_custom_call.1} parent=43 // pred_check_branch
          %361 = sbr.rel (%p359) target = $region48
        $region47: #{tpu_custom_call.1} parent=43 // pred_region
          %363 = dma.done %s355, 1024
        $region48: #{tpu_custom_call.1} parent=43 // pred_fallthru
          _
        %s364 = sand.u32 %s26, 1
        %s365 = scalar_lea.sflag [#allocation5], %s364
        %s366 = sand.u32 %s87, 1
        %s367 = smul.addr %s366, 64
        %s368 = scalar_lea.vmem [#allocation4], %s367
        // Predicated region
        $region49: #{tpu_custom_call.1} parent=43 // pred_check
          %p369 = pneg %p100
        $region50: #{tpu_custom_call.1} parent=43 // pred_check_branch
          %371 = sbr.rel (%p369) target = $region52
        $region51: #{tpu_custom_call.1} parent=43 // pred_region
          %373 = dma.done %s365, 1024
        $region52: #{tpu_custom_call.1} parent=43 // pred_fallthru
          _
        // Predicated region
        $region53: #{tpu_custom_call.1} parent=43 // pred_check
          %p374 = pneg %p121
        $region54: #{tpu_custom_call.1} parent=43 // pred_check_branch
          %376 = sbr.rel (%p374) target = $region56
        $region55: #{tpu_custom_call.1} parent=43 // pred_region
          %378 = dma.done [#allocation5], 1024
        $region56: #{tpu_custom_call.1} parent=43 // pred_fallthru
          _
        // Predicated region
        $region57: #{tpu_custom_call.1} parent=43 // pred_check
          %p379 = pneg %p163
        $region58: #{tpu_custom_call.1} parent=43 // pred_check_branch
          %381 = sbr.rel (%p379) target = $region60
        $region59: #{tpu_custom_call.1} parent=43 // pred_region
          %383 = dma.done [#allocation8], 512
        $region60: #{tpu_custom_call.1} parent=43 // pred_fallthru
          _
        %s384 = sand.u32 %s57, 1
        %s385 = scalar_lea.sflag [#allocation3], %s384
        %s386 = sand.u32 %s57, 1
        %s387 = smul.addr %s386, 64
        %s388 = scalar_lea.vmem [#allocation2], %s387
        %p389 = pneg %p70
        %p390 = pneg %p67
        %s391 = sand.u32 %s26, 1
        %s392 = scalar_lea.sflag [#allocation5], %s391
        %s393 = sand.u32 %s87, 1
        %s394 = smul.addr %s393, 64
        %s395 = scalar_lea.vmem [#allocation4], %s394
        %p396 = pneg %p100
        %p397 = pneg %p97
        %p398 = pneg %p121
        %p399 = pneg %p118
        %p400 = pneg %p142
        %p401 = pneg %p139
        %p402 = pneg %p163
        %p403 = pneg %p160
        %p404 = pneg %p184
        %p405 = pneg %p181
        %p406 = pneg %p214
        %p407 = pneg %p211
        %p408 = scmp.lt.s32.totalorder %s31, 1
        %s409 = scalar_select %p408, %s31, 1
        %p410 = scmp.lt.s32.totalorder %s32, 0
        %s411 = scalar_select %p410, %s32, 0
        %p412 = scmp.lt.s32.totalorder %s33, 0
        %s413 = scalar_select %p412, %s33, 0
        %s414 = sadd.s32 %s413, %s411
        %s415 = smul.addr %s409, 74
        %s416 = sadd.s32 %s414, %s415
        %s417 = smul.addr %s416, 8
        %s418 = scalar_lea.vmem %s6, %s417
        %p419 = pneg %p244
        %p420 = pneg %p241
        %p421 = scmp.lt.s32.totalorder %s31, 1
        %s422 = scalar_select %p421, %s31, 1
        %p423 = scmp.lt.s32.totalorder %s32, 0
        %s424 = scalar_select %p423, %s32, 0
        %p425 = scmp.lt.s32.totalorder %s33, 0
        %s426 = scalar_select %p425, %s33, 0
        %s427 = sadd.s32 %s426, %s424
        %s428 = smul.addr %s422, 56
        %s429 = sadd.s32 %s427, %s428
        %s430 = smul.addr %s429, 8
        %s431 = scalar_lea.vmem %s7, %s430
        %s432 = smul.u32 8, %s32
        %s433 = smul.u32 8, %s33
        %p434 = scmp.lt.s32.totalorder %s31, 1
        %s435 = scalar_select %p434, %s31, 1
        %p436 = scmp.lt.s32.totalorder %s32, 0
        %s437 = scalar_select %p436, %s32, 0
        %p438 = scmp.lt.s32.totalorder %s33, 0
        %s439 = scalar_select %p438, %s33, 0
        %s440 = sadd.s32 %s439, %s437
        %s441 = smul.addr %s435, 74
        %s442 = sadd.s32 %s440, %s441
        %s443 = smul.addr %s442, 8
        %s444 = scalar_lea.vmem %s6, %s443
        %p445 = scmp.lt.s32.totalorder %s31, 1
        %s446 = scalar_select %p445, %s31, 1
        %p447 = scmp.lt.s32.totalorder %s32, 0
        %s448 = scalar_select %p447, %s32, 0
        %p449 = scmp.lt.s32.totalorder %s33, 0
        %s450 = scalar_select %p449, %s33, 0
        %s451 = sadd.s32 %s450, %s448
        %s452 = smul.addr %s446, 56
        %s453 = sadd.s32 %s451, %s452
        %s454 = smul.addr %s453, 8
        %s455 = scalar_lea.vmem %s7, %s454
        %v456 = vld [vmem:[%s358] sm:$0xff]
        %v457 = vld [vmem:[%s358 + $0x8] sm:$0xff]
        %v458 = vld [vmem:[%s358 + $0x10] sm:$0xff]
        %v459 = vld [vmem:[%s358 + $0x18] sm:$0xff]
        %v460 = vld [vmem:[%s358 + $0x20] sm:$0xff]
        %v461 = vld [vmem:[%s358 + $0x28] sm:$0xff]
        %v462 = vld [vmem:[%s358 + $0x30] sm:$0xff]
        %v463 = vld [vmem:[%s358 + $0x38] sm:$0xff]
        %v464 = vld [vmem:[%s368] sm:$0xff]
        %v465 = vld [vmem:[%s368 + $0x8] sm:$0xff]
        %v466 = vld [vmem:[%s368 + $0x10] sm:$0xff]
        %v467 = vld [vmem:[%s368 + $0x18] sm:$0xff]
        %v468 = vld [vmem:[%s368 + $0x20] sm:$0xff]
        %v469 = vld [vmem:[%s368 + $0x28] sm:$0xff]
        %v470 = vld [vmem:[%s368 + $0x30] sm:$0xff]
        %v471 = vld [vmem:[%s368 + $0x38] sm:$0xff]
        %v472 = vld [vmem:[#allocation6] sm:$0xff]
        %v473 = vld [vmem:[#allocation6 + $0x8] sm:$0xff]
        %v474 = vld [vmem:[#allocation6 + $0x10] sm:$0xff]
        %v475 = vld [vmem:[#allocation6 + $0x18] sm:$0xff]
        %v476 = vld [vmem:[#allocation6 + $0x20] sm:$0xff]
        %v477 = vld [vmem:[#allocation6 + $0x28] sm:$0xff]
        %v478 = vld [vmem:[#allocation6 + $0x30] sm:$0xff]
        %v479 = vld [vmem:[#allocation6 + $0x38] sm:$0xff]
        %v480 = vld [vmem:[%s3] sm:$0x3]
        %v482 = vperm.slane %v480, 0
        %v483 = vperm.slane %v480, 1
        %vm486 = vcmask 261120
        %v488 = vsel %vm486, %v456, 0
        %v491 = vsel %vm486, %v457, 0
        %v494 = vsel %vm486, %v458, 0
        %v497 = vsel %vm486, %v459, 0
        %v500 = vsel %vm486, %v460, 0
        %v503 = vsel %vm486, %v461, 0
        %v506 = vsel %vm486, %v462, 0
        %v509 = vsel %vm486, %v463, 0
        %511 = vmatpush.msra.mxu0 0.0
        %512 = vmatpush.msra.mxu0 0.0
        %513 = vmatpush.msra.mxu0 0.0
        %514 = vmatpush.msra.mxu0 0.0
        %515 = vmatpush.msra.mxu0 0.0
        %516 = vmatpush.msra.mxu0 0.0
        %517 = vmatpush.msra.mxu0 0.0
        %518 = vmatpush.msra.mxu0 0.0
        %519 = vmatpush.msra.mxu0 0.0
        %520 = vmatpush.msra.mxu0 0.0
        %521 = vmatpush.msra.mxu0 0.0
        %522 = vmatpush.msra.mxu0 0.0
        %523 = vmatpush.msra.mxu0 %v478
        %524 = vmatpush.msra.mxu0 %v476
        %525 = vmatpush.msra.mxu0 %v474
        %526 = vmatpush.msra.mxu0 %v472
        %527 = vmatmul.f32.gmra.mxu0 %v488
        %v528 = vpop.f32.mrf.mxu0
        %v529 = vadd.f32 %v482, %v528
        %530 = vmatmul.f32.gmra.mxu0 %v491
        %v531 = vpop.f32.mrf.mxu0
        %v532 = vadd.f32 %v482, %v531
        %533 = vmatmul.f32.gmra.mxu0 %v494
        %v534 = vpop.f32.mrf.mxu0
        %v535 = vadd.f32 %v482, %v534
        %536 = vmatmul.f32.gmra.mxu0 %v497
        %v537 = vpop.f32.mrf.mxu0
        %v538 = vadd.f32 %v482, %v537
        %539 = vmatmul.f32.gmra.mxu0 %v500
        %v540 = vpop.f32.mrf.mxu0
        %v541 = vadd.f32 %v482, %v540
        %542 = vmatmul.f32.gmra.mxu0 %v503
        %v543 = vpop.f32.mrf.mxu0
        %v544 = vadd.f32 %v482, %v543
        %545 = vmatmul.f32.gmra.mxu0 %v506
        %v546 = vpop.f32.mrf.mxu0
        %v547 = vadd.f32 %v482, %v546
        %548 = vmatmul.f32.gmra.mxu0 %v509
        %v549 = vpop.f32.mrf.mxu0
        %v550 = vadd.f32 %v482, %v549
        %551 = vdwg.mxu0
        %552 = vmatpush.msra.mxu0 0.0
        %553 = vmatpush.msra.mxu0 0.0
        %554 = vmatpush.msra.mxu0 0.0
        %555 = vmatpush.msra.mxu0 0.0
        %556 = vmatpush.msra.mxu0 0.0
        %557 = vmatpush.msra.mxu0 0.0
        %558 = vmatpush.msra.mxu0 0.0
        %559 = vmatpush.msra.mxu0 0.0
        %560 = vmatpush.msra.mxu0 0.0
        %561 = vmatpush.msra.mxu0 0.0
        %562 = vmatpush.msra.mxu0 0.0
        %563 = vmatpush.msra.mxu0 0.0
        %564 = vmatpush.msra.mxu0 %v479
        %565 = vmatpush.msra.mxu0 %v477
        %566 = vmatpush.msra.mxu0 %v475
        %567 = vmatpush.msra.mxu0 %v473
        %568 = vmatmul.f32.gmra.mxu0 %v488
        %v569 = vpop.f32.mrf.mxu0
        %v570 = vadd.f32 %v483, %v569
        %571 = vmatmul.f32.gmra.mxu0 %v491
        %v572 = vpop.f32.mrf.mxu0
        %v573 = vadd.f32 %v483, %v572
        %574 = vmatmul.f32.gmra.mxu0 %v494
        %v575 = vpop.f32.mrf.mxu0
        %v576 = vadd.f32 %v483, %v575
        %577 = vmatmul.f32.gmra.mxu0 %v497
        %v578 = vpop.f32.mrf.mxu0
        %v579 = vadd.f32 %v483, %v578
        %580 = vmatmul.f32.gmra.mxu0 %v500
        %v581 = vpop.f32.mrf.mxu0
        %v582 = vadd.f32 %v483, %v581
        %583 = vmatmul.f32.gmra.mxu0 %v503
        %v584 = vpop.f32.mrf.mxu0
        %v585 = vadd.f32 %v483, %v584
        %586 = vmatmul.f32.gmra.mxu0 %v506
        %v587 = vpop.f32.mrf.mxu0
        %v588 = vadd.f32 %v483, %v587
        %589 = vmatmul.f32.gmra.mxu0 %v509
        %v590 = vpop.f32.mrf.mxu0
        %v591 = vadd.f32 %v483, %v590
        %592 = vdwg.mxu0
        %v593 = vld [vmem:[#allocation7] sm:$0xff]
        %v594 = vld [vmem:[#allocation7 + $0x8] sm:$0xff]
        %v595 = vld [vmem:[#allocation7 + $0x10] sm:$0xff]
        %v596 = vld [vmem:[#allocation7 + $0x18] sm:$0xff]
        %v597 = vld [vmem:[%s5] sm:$0x1]
        %v599 = vperm.slane %v597, 0
        %v602 = vsel %vm486, %v464, 0
        %v605 = vsel %vm486, %v465, 0
        %v608 = vsel %vm486, %v466, 0
        %v611 = vsel %vm486, %v467, 0
        %v614 = vsel %vm486, %v468, 0
        %v617 = vsel %vm486, %v469, 0
        %v620 = vsel %vm486, %v470, 0
        %v623 = vsel %vm486, %v471, 0
        %625 = vmatpush.msra.mxu0 0.0
        %626 = vmatpush.msra.mxu0 0.0
        %627 = vmatpush.msra.mxu0 0.0
        %628 = vmatpush.msra.mxu0 0.0
        %629 = vmatpush.msra.mxu0 0.0
        %630 = vmatpush.msra.mxu0 0.0
        %631 = vmatpush.msra.mxu0 0.0
        %632 = vmatpush.msra.mxu0 0.0
        %633 = vmatpush.msra.mxu0 0.0
        %634 = vmatpush.msra.mxu0 0.0
        %635 = vmatpush.msra.mxu0 0.0
        %636 = vmatpush.msra.mxu0 0.0
        %637 = vmatpush.msra.mxu0 %v596
        %638 = vmatpush.msra.mxu0 %v595
        %639 = vmatpush.msra.mxu0 %v594
        %640 = vmatpush.msra.mxu0 %v593
        %641 = vmatmul.f32.gmra.mxu0 %v602
        %v642 = vpop.f32.mrf.mxu0
        %v643 = vadd.f32 %v599, %v642
        %644 = vmatmul.f32.gmra.mxu0 %v605
        %v645 = vpop.f32.mrf.mxu0
        %v646 = vadd.f32 %v599, %v645
        %647 = vmatmul.f32.gmra.mxu0 %v608
        %v648 = vpop.f32.mrf.mxu0
        %v649 = vadd.f32 %v599, %v648
        %650 = vmatmul.f32.gmra.mxu0 %v611
        %v651 = vpop.f32.mrf.mxu0
        %v652 = vadd.f32 %v599, %v651
        %653 = vmatmul.f32.gmra.mxu0 %v614
        %v654 = vpop.f32.mrf.mxu0
        %v655 = vadd.f32 %v599, %v654
        %656 = vmatmul.f32.gmra.mxu0 %v617
        %v657 = vpop.f32.mrf.mxu0
        %v658 = vadd.f32 %v599, %v657
        %659 = vmatmul.f32.gmra.mxu0 %v620
        %v660 = vpop.f32.mrf.mxu0
        %v661 = vadd.f32 %v599, %v660
        %662 = vmatmul.f32.gmra.mxu0 %v623
        %v663 = vpop.f32.mrf.mxu0
        %v664 = vadd.f32 %v599, %v663
        %665 = vdwg.mxu0
        %v666 = vrot.slane %v649, 4
        %vm667 = vcmask 1047556
        %v668 = vsel %vm667, %v666, %v643
        %v669 = vrot.slane %v643, 4
        %v670 = vsel %vm667, %v649, %v669
        %v672 = vunpack.c.l.s4 1983009808
        %v673 = vunpack.c.0.s8 %v672
        %v674 = vperm.slane %v668, %v673
        %v676 = vunpack.c.l.s4 1983009808
        %v677 = vunpack.c.0.s8 %v676
        %v678 = vperm.slane %v670, %v677
        %v679 = vrot.slane %v652, 4
        %v680 = vsel %vm667, %v679, %v646
        %v681 = vrot.slane %v646, 4
        %v682 = vsel %vm667, %v652, %v681
        %v684 = vunpack.c.l.s4 1983009808
        %v685 = vunpack.c.0.s8 %v684
        %v686 = vperm.slane %v680, %v685
        %v688 = vunpack.c.l.s4 1983009808
        %v689 = vunpack.c.0.s8 %v688
        %v690 = vperm.slane %v682, %v689
        %v691 = vrot.slane %v661, 4
        %v692 = vsel %vm667, %v691, %v655
        %v693 = vrot.slane %v655, 4
        %v694 = vsel %vm667, %v661, %v693
        %v696 = vunpack.c.l.s4 1983009808
        %v697 = vunpack.c.0.s8 %v696
        %v698 = vperm.slane %v692, %v697
        %v700 = vunpack.c.l.s4 1983009808
        %v701 = vunpack.c.0.s8 %v700
        %v702 = vperm.slane %v694, %v701
        %v703 = vrot.slane %v664, 4
        %v704 = vsel %vm667, %v703, %v658
        %v705 = vrot.slane %v658, 4
        %v706 = vsel %vm667, %v664, %v705
        %v708 = vunpack.c.l.s4 1983009808
        %v709 = vunpack.c.0.s8 %v708
        %v710 = vperm.slane %v704, %v709
        %v712 = vunpack.c.l.s4 1983009808
        %v713 = vunpack.c.0.s8 %v712
        %v714 = vperm.slane %v706, %v713
        %v715 = vrot.slane %v686, 4
        %v716 = vsel %vm667, %v715, %v674
        %v717 = vrot.slane %v674, 4
        %v718 = vsel %vm667, %v686, %v717
        %v720 = vunpack.c.l.s4 1934713408
        %v721 = vunpack.c.0.s8 %v720
        %v722 = vperm.slane %v716, %v721
        %v724 = vunpack.c.l.s4 1934713408
        %v725 = vunpack.c.0.s8 %v724
        %v726 = vperm.slane %v718, %v725
        %v727 = vrot.slane %v690, 4
        %v728 = vsel %vm667, %v727, %v678
        %v729 = vrot.slane %v678, 4
        %v730 = vsel %vm667, %v690, %v729
        %v732 = vunpack.c.l.s4 1934713408
        %v733 = vunpack.c.0.s8 %v732
        %v734 = vperm.slane %v728, %v733
        %v736 = vunpack.c.l.s4 1934713408
        %v737 = vunpack.c.0.s8 %v736
        %v738 = vperm.slane %v730, %v737
        %v739 = vrot.slane %v710, 4
        %v740 = vsel %vm667, %v739, %v698
        %v741 = vrot.slane %v698, 4
        %v742 = vsel %vm667, %v710, %v741
        %v744 = vunpack.c.l.s4 1934713408
        %v745 = vunpack.c.0.s8 %v744
        %v746 = vperm.slane %v740, %v745
        %v748 = vunpack.c.l.s4 1934713408
        %v749 = vunpack.c.0.s8 %v748
        %v750 = vperm.slane %v742, %v749
        %v751 = vrot.slane %v714, 4
        %v752 = vsel %vm667, %v751, %v702
        %v753 = vrot.slane %v702, 4
        %v754 = vsel %vm667, %v714, %v753
        %v756 = vunpack.c.l.s4 1934713408
        %v757 = vunpack.c.0.s8 %v756
        %v758 = vperm.slane %v752, %v757
        %v760 = vunpack.c.l.s4 1934713408
        %v761 = vunpack.c.0.s8 %v760
        %v762 = vperm.slane %v754, %v761
        %v763 = vrot.slane %v746, 4
        %v764 = vsel %vm667, %v763, %v722
        %v765 = vrot.slane %v722, 4
        %v766 = vsel %vm667, %v746, %v765
        %v767 = vrot.slane %v750, 4
        %v768 = vsel %vm667, %v767, %v726
        %v769 = vrot.slane %v726, 4
        %v770 = vsel %vm667, %v750, %v769
        %v771 = vrot.slane %v758, 4
        %v772 = vsel %vm667, %v771, %v734
        %v773 = vrot.slane %v734, 4
        %v774 = vsel %vm667, %v758, %v773
        %v775 = vrot.slane %v762, 4
        %v776 = vsel %vm667, %v775, %v738
        %v777 = vrot.slane %v738, 4
        %v778 = vsel %vm667, %v762, %v777
        %v779 = vadd.f32 %v529, %v764
        %v780 = vadd.f32 %v532, %v766
        %v781 = vadd.f32 %v535, %v768
        %v782 = vadd.f32 %v538, %v770
        %v783 = vadd.f32 %v541, %v772
        %v784 = vadd.f32 %v544, %v774
        %v785 = vadd.f32 %v547, %v776
        %v786 = vadd.f32 %v550, %v778
        %787 = vxpose.xlu0.b32.start [1/16] %v779, 128
        %788 = vxpose.xlu0.b32.cont [2/16] 0.0, 128
        %789 = vxpose.xlu0.b32.cont [3/16] 0.0, 128
        %790 = vxpose.xlu0.b32.cont [4/16] 0.0, 128
        %791 = vxpose.xlu0.b32.cont [5/16] 0.0, 128
        %792 = vxpose.xlu0.b32.cont [6/16] 0.0, 128
        %793 = vxpose.xlu0.b32.cont [7/16] 0.0, 128
        %794 = vxpose.xlu0.b32.cont [8/16] 0.0, 128
        %795 = vxpose.xlu0.b32.cont [9/16] 0.0, 128
        %796 = vxpose.xlu0.b32.cont [10/16] 0.0, 128
        %797 = vxpose.xlu0.b32.cont [11/16] 0.0, 128
        %798 = vxpose.xlu0.b32.cont [12/16] 0.0, 128
        %799 = vxpose.xlu0.b32.cont [13/16] 0.0, 128
        %800 = vxpose.xlu0.b32.cont [14/16] 0.0, 128
        %801 = vxpose.xlu0.b32.cont [15/16] 0.0, 128
        %802 = vxpose.xlu0.b32.end [16/16] 0.0, 128
        %v803 = vpop.trf.xlu0
        %v804 = vpop.trf.xlu0
        %v805 = vpop.trf.xlu0
        %v806 = vpop.trf.xlu0
        %v807 = vpop.trf.xlu0
        %v808 = vpop.trf.xlu0
        %v809 = vpop.trf.xlu0
        %v810 = vpop.trf.xlu0
        %v811 = vpop.trf.xlu0
        %v812 = vpop.trf.xlu0
        %v813 = vpop.trf.xlu0
        %v814 = vpop.trf.xlu0
        %v815 = vpop.trf.xlu0
        %v816 = vpop.trf.xlu0
        %v817 = vpop.trf.xlu0
        %v818 = vpop.trf.xlu0
        %819 = vxpose.xlu0.b32.start [1/16] %v780, 128
        %820 = vxpose.xlu0.b32.cont [2/16] 0.0, 128
        %821 = vxpose.xlu0.b32.cont [3/16] 0.0, 128
        %822 = vxpose.xlu0.b32.cont [4/16] 0.0, 128
        %823 = vxpose.xlu0.b32.cont [5/16] 0.0, 128
        %824 = vxpose.xlu0.b32.cont [6/16] 0.0, 128
        %825 = vxpose.xlu0.b32.cont [7/16] 0.0, 128
        %826 = vxpose.xlu0.b32.cont [8/16] 0.0, 128
        %827 = vxpose.xlu0.b32.cont [9/16] 0.0, 128
        %828 = vxpose.xlu0.b32.cont [10/16] 0.0, 128
        %829 = vxpose.xlu0.b32.cont [11/16] 0.0, 128
        %830 = vxpose.xlu0.b32.cont [12/16] 0.0, 128
        %831 = vxpose.xlu0.b32.cont [13/16] 0.0, 128
        %832 = vxpose.xlu0.b32.cont [14/16] 0.0, 128
        %833 = vxpose.xlu0.b32.cont [15/16] 0.0, 128
        %834 = vxpose.xlu0.b32.end [16/16] 0.0, 128
        %v835 = vpop.trf.xlu0
        %v836 = vpop.trf.xlu0
        %v837 = vpop.trf.xlu0
        %v838 = vpop.trf.xlu0
        %v839 = vpop.trf.xlu0
        %v840 = vpop.trf.xlu0
        %v841 = vpop.trf.xlu0
        %v842 = vpop.trf.xlu0
        %v843 = vpop.trf.xlu0
        %v844 = vpop.trf.xlu0
        %v845 = vpop.trf.xlu0
        %v846 = vpop.trf.xlu0
        %v847 = vpop.trf.xlu0
        %v848 = vpop.trf.xlu0
        %v849 = vpop.trf.xlu0
        %v850 = vpop.trf.xlu0
        %851 = vxpose.xlu0.b32.start [1/16] %v781, 128
        %852 = vxpose.xlu0.b32.cont [2/16] 0.0, 128
        %853 = vxpose.xlu0.b32.cont [3/16] 0.0, 128
        %854 = vxpose.xlu0.b32.cont [4/16] 0.0, 128
        %855 = vxpose.xlu0.b32.cont [5/16] 0.0, 128
        %856 = vxpose.xlu0.b32.cont [6/16] 0.0, 128
        %857 = vxpose.xlu0.b32.cont [7/16] 0.0, 128
        %858 = vxpose.xlu0.b32.cont [8/16] 0.0, 128
        %859 = vxpose.xlu0.b32.cont [9/16] 0.0, 128
        %860 = vxpose.xlu0.b32.cont [10/16] 0.0, 128
        %861 = vxpose.xlu0.b32.cont [11/16] 0.0, 128
        %862 = vxpose.xlu0.b32.cont [12/16] 0.0, 128
        %863 = vxpose.xlu0.b32.cont [13/16] 0.0, 128
        %864 = vxpose.xlu0.b32.cont [14/16] 0.0, 128
        %865 = vxpose.xlu0.b32.cont [15/16] 0.0, 128
        %866 = vxpose.xlu0.b32.end [16/16] 0.0, 128
        %v867 = vpop.trf.xlu0
        %v868 = vpop.trf.xlu0
        %v869 = vpop.trf.xlu0
        %v870 = vpop.trf.xlu0
        %v871 = vpop.trf.xlu0
        %v872 = vpop.trf.xlu0
        %v873 = vpop.trf.xlu0
        %v874 = vpop.trf.xlu0
        %v875 = vpop.trf.xlu0
        %v876 = vpop.trf.xlu0
        %v877 = vpop.trf.xlu0
        %v878 = vpop.trf.xlu0
        %v879 = vpop.trf.xlu0
        %v880 = vpop.trf.xlu0
        %v881 = vpop.trf.xlu0
        %v882 = vpop.trf.xlu0
        %883 = vxpose.xlu0.b32.start [1/16] %v782, 128
        %884 = vxpose.xlu0.b32.cont [2/16] 0.0, 128
        %885 = vxpose.xlu0.b32.cont [3/16] 0.0, 128
        %886 = vxpose.xlu0.b32.cont [4/16] 0.0, 128
        %887 = vxpose.xlu0.b32.cont [5/16] 0.0, 128
        %888 = vxpose.xlu0.b32.cont [6/16] 0.0, 128
        %889 = vxpose.xlu0.b32.cont [7/16] 0.0, 128
        %890 = vxpose.xlu0.b32.cont [8/16] 0.0, 128
        %891 = vxpose.xlu0.b32.cont [9/16] 0.0, 128
        %892 = vxpose.xlu0.b32.cont [10/16] 0.0, 128
        %893 = vxpose.xlu0.b32.cont [11/16] 0.0, 128
        %894 = vxpose.xlu0.b32.cont [12/16] 0.0, 128
        %895 = vxpose.xlu0.b32.cont [13/16] 0.0, 128
        %896 = vxpose.xlu0.b32.cont [14/16] 0.0, 128
        %897 = vxpose.xlu0.b32.cont [15/16] 0.0, 128
        %898 = vxpose.xlu0.b32.end [16/16] 0.0, 128
        %v899 = vpop.trf.xlu0
        %v900 = vpop.trf.xlu0
        %v901 = vpop.trf.xlu0
        %v902 = vpop.trf.xlu0
        %v903 = vpop.trf.xlu0
        %v904 = vpop.trf.xlu0
        %v905 = vpop.trf.xlu0
        %v906 = vpop.trf.xlu0
        %v907 = vpop.trf.xlu0
        %v908 = vpop.trf.xlu0
        %v909 = vpop.trf.xlu0
        %v910 = vpop.trf.xlu0
        %v911 = vpop.trf.xlu0
        %v912 = vpop.trf.xlu0
        %v913 = vpop.trf.xlu0
        %v914 = vpop.trf.xlu0
        %915 = vxpose.xlu0.b32.start [1/16] %v783, 128
        %916 = vxpose.xlu0.b32.cont [2/16] 0.0, 128
        %917 = vxpose.xlu0.b32.cont [3/16] 0.0, 128
        %918 = vxpose.xlu0.b32.cont [4/16] 0.0, 128
        %919 = vxpose.xlu0.b32.cont [5/16] 0.0, 128
        %920 = vxpose.xlu0.b32.cont [6/16] 0.0, 128
        %921 = vxpose.xlu0.b32.cont [7/16] 0.0, 128
        %922 = vxpose.xlu0.b32.cont [8/16] 0.0, 128
        %923 = vxpose.xlu0.b32.cont [9/16] 0.0, 128
        %924 = vxpose.xlu0.b32.cont [10/16] 0.0, 128
        %925 = vxpose.xlu0.b32.cont [11/16] 0.0, 128
        %926 = vxpose.xlu0.b32.cont [12/16] 0.0, 128
        %927 = vxpose.xlu0.b32.cont [13/16] 0.0, 128
        %928 = vxpose.xlu0.b32.cont [14/16] 0.0, 128
        %929 = vxpose.xlu0.b32.cont [15/16] 0.0, 128
        %930 = vxpose.xlu0.b32.end [16/16] 0.0, 128
        %v931 = vpop.trf.xlu0
        %v932 = vpop.trf.xlu0
        %v933 = vpop.trf.xlu0
        %v934 = vpop.trf.xlu0
        %v935 = vpop.trf.xlu0
        %v936 = vpop.trf.xlu0
        %v937 = vpop.trf.xlu0
        %v938 = vpop.trf.xlu0
        %v939 = vpop.trf.xlu0
        %v940 = vpop.trf.xlu0
        %v941 = vpop.trf.xlu0
        %v942 = vpop.trf.xlu0
        %v943 = vpop.trf.xlu0
        %v944 = vpop.trf.xlu0
        %v945 = vpop.trf.xlu0
        %v946 = vpop.trf.xlu0
        %947 = vxpose.xlu0.b32.start [1/16] %v784, 128
        %948 = vxpose.xlu0.b32.cont [2/16] 0.0, 128
        %949 = vxpose.xlu0.b32.cont [3/16] 0.0, 128
        %950 = vxpose.xlu0.b32.cont [4/16] 0.0, 128
        %951 = vxpose.xlu0.b32.cont [5/16] 0.0, 128
        %952 = vxpose.xlu0.b32.cont [6/16] 0.0, 128
        %953 = vxpose.xlu0.b32.cont [7/16] 0.0, 128
        %954 = vxpose.xlu0.b32.cont [8/16] 0.0, 128
        %955 = vxpose.xlu0.b32.cont [9/16] 0.0, 128
        %956 = vxpose.xlu0.b32.cont [10/16] 0.0, 128
        %957 = vxpose.xlu0.b32.cont [11/16] 0.0, 128
        %958 = vxpose.xlu0.b32.cont [12/16] 0.0, 128
        %959 = vxpose.xlu0.b32.cont [13/16] 0.0, 128
        %960 = vxpose.xlu0.b32.cont [14/16] 0.0, 128
        %961 = vxpose.xlu0.b32.cont [15/16] 0.0, 128
        %962 = vxpose.xlu0.b32.end [16/16] 0.0, 128
        %v963 = vpop.trf.xlu0
        %v964 = vpop.trf.xlu0
        %v965 = vpop.trf.xlu0
        %v966 = vpop.trf.xlu0
        %v967 = vpop.trf.xlu0
        %v968 = vpop.trf.xlu0
        %v969 = vpop.trf.xlu0
        %v970 = vpop.trf.xlu0
        %v971 = vpop.trf.xlu0
        %v972 = vpop.trf.xlu0
        %v973 = vpop.trf.xlu0
        %v974 = vpop.trf.xlu0
        %v975 = vpop.trf.xlu0
        %v976 = vpop.trf.xlu0
        %v977 = vpop.trf.xlu0
        %v978 = vpop.trf.xlu0
        %979 = vxpose.xlu0.b32.start [1/16] %v785, 128
        %980 = vxpose.xlu0.b32.cont [2/16] 0.0, 128
        %981 = vxpose.xlu0.b32.cont [3/16] 0.0, 128
        %982 = vxpose.xlu0.b32.cont [4/16] 0.0, 128
        %983 = vxpose.xlu0.b32.cont [5/16] 0.0, 128
        %984 = vxpose.xlu0.b32.cont [6/16] 0.0, 128
        %985 = vxpose.xlu0.b32.cont [7/16] 0.0, 128
        %986 = vxpose.xlu0.b32.cont [8/16] 0.0, 128
        %987 = vxpose.xlu0.b32.cont [9/16] 0.0, 128
        %988 = vxpose.xlu0.b32.cont [10/16] 0.0, 128
        %989 = vxpose.xlu0.b32.cont [11/16] 0.0, 128
        %990 = vxpose.xlu0.b32.cont [12/16] 0.0, 128
        %991 = vxpose.xlu0.b32.cont [13/16] 0.0, 128
        %992 = vxpose.xlu0.b32.cont [14/16] 0.0, 128
        %993 = vxpose.xlu0.b32.cont [15/16] 0.0, 128
        %994 = vxpose.xlu0.b32.end [16/16] 0.0, 128
        %v995 = vpop.trf.xlu0
        %v996 = vpop.trf.xlu0
        %v997 = vpop.trf.xlu0
        %v998 = vpop.trf.xlu0
        %v999 = vpop.trf.xlu0
        %v1000 = vpop.trf.xlu0
        %v1001 = vpop.trf.xlu0
        %v1002 = vpop.trf.xlu0
        %v1003 = vpop.trf.xlu0
        %v1004 = vpop.trf.xlu0
        %v1005 = vpop.trf.xlu0
        %v1006 = vpop.trf.xlu0
        %v1007 = vpop.trf.xlu0
        %v1008 = vpop.trf.xlu0
        %v1009 = vpop.trf.xlu0
        %v1010 = vpop.trf.xlu0
        %1011 = vxpose.xlu0.b32.start [1/16] %v786, 128
        %1012 = vxpose.xlu0.b32.cont [2/16] 0.0, 128
        %1013 = vxpose.xlu0.b32.cont [3/16] 0.0, 128
        %1014 = vxpose.xlu0.b32.cont [4/16] 0.0, 128
        %1015 = vxpose.xlu0.b32.cont [5/16] 0.0, 128
        %1016 = vxpose.xlu0.b32.cont [6/16] 0.0, 128
        %1017 = vxpose.xlu0.b32.cont [7/16] 0.0, 128
        %1018 = vxpose.xlu0.b32.cont [8/16] 0.0, 128
        %1019 = vxpose.xlu0.b32.cont [9/16] 0.0, 128
        %1020 = vxpose.xlu0.b32.cont [10/16] 0.0, 128
        %1021 = vxpose.xlu0.b32.cont [11/16] 0.0, 128
        %1022 = vxpose.xlu0.b32.cont [12/16] 0.0, 128
        %1023 = vxpose.xlu0.b32.cont [13/16] 0.0, 128
        %1024 = vxpose.xlu0.b32.cont [14/16] 0.0, 128
        %1025 = vxpose.xlu0.b32.cont [15/16] 0.0, 128
        %1026 = vxpose.xlu0.b32.end [16/16] 0.0, 128
        %v1027 = vpop.trf.xlu0
        %v1028 = vpop.trf.xlu0
        %v1029 = vpop.trf.xlu0
        %v1030 = vpop.trf.xlu0
        %v1031 = vpop.trf.xlu0
        %v1032 = vpop.trf.xlu0
        %v1033 = vpop.trf.xlu0
        %v1034 = vpop.trf.xlu0
        %v1035 = vpop.trf.xlu0
        %v1036 = vpop.trf.xlu0
        %v1037 = vpop.trf.xlu0
        %v1038 = vpop.trf.xlu0
        %v1039 = vpop.trf.xlu0
        %v1040 = vpop.trf.xlu0
        %v1041 = vpop.trf.xlu0
        %v1042 = vpop.trf.xlu0
        %v1043 = vrot.slane %v867, 4
        %v1044 = vsel %vm667, %v1043, %v803
        %v1045 = vrot.slane %v803, 4
        %v1046 = vsel %vm667, %v867, %v1045
        %v1048 = vunpack.c.l.s4 1983009808
        %v1049 = vunpack.c.0.s8 %v1048
        %v1050 = vperm.slane %v1044, %v1049
        %v1052 = vunpack.c.l.s4 1983009808
        %v1053 = vunpack.c.0.s8 %v1052
        %v1054 = vperm.slane %v1046, %v1053
        %v1055 = vrot.slane %v899, 4
        %v1056 = vsel %vm667, %v1055, %v835
        %v1057 = vrot.slane %v835, 4
        %v1058 = vsel %vm667, %v899, %v1057
        %v1060 = vunpack.c.l.s4 1983009808
        %v1061 = vunpack.c.0.s8 %v1060
        %v1062 = vperm.slane %v1056, %v1061
        %v1064 = vunpack.c.l.s4 1983009808
        %v1065 = vunpack.c.0.s8 %v1064
        %v1066 = vperm.slane %v1058, %v1065
        %v1067 = vrot.slane %v995, 4
        %v1068 = vsel %vm667, %v1067, %v931
        %v1069 = vrot.slane %v931, 4
        %v1070 = vsel %vm667, %v995, %v1069
        %v1072 = vunpack.c.l.s4 1983009808
        %v1073 = vunpack.c.0.s8 %v1072
        %v1074 = vperm.slane %v1068, %v1073
        %v1076 = vunpack.c.l.s4 1983009808
        %v1077 = vunpack.c.0.s8 %v1076
        %v1078 = vperm.slane %v1070, %v1077
        %v1079 = vrot.slane %v1027, 4
        %v1080 = vsel %vm667, %v1079, %v963
        %v1081 = vrot.slane %v963, 4
        %v1082 = vsel %vm667, %v1027, %v1081
        %v1084 = vunpack.c.l.s4 1983009808
        %v1085 = vunpack.c.0.s8 %v1084
        %v1086 = vperm.slane %v1080, %v1085
        %v1088 = vunpack.c.l.s4 1983009808
        %v1089 = vunpack.c.0.s8 %v1088
        %v1090 = vperm.slane %v1082, %v1089
        %v1091 = vrot.slane %v1062, 4
        %v1092 = vsel %vm667, %v1091, %v1050
        %v1093 = vrot.slane %v1050, 4
        %v1094 = vsel %vm667, %v1062, %v1093
        %v1096 = vunpack.c.l.s4 1934713408
        %v1097 = vunpack.c.0.s8 %v1096
        %v1098 = vperm.slane %v1092, %v1097
        %v1100 = vunpack.c.l.s4 1934713408
        %v1101 = vunpack.c.0.s8 %v1100
        %v1102 = vperm.slane %v1094, %v1101
        %v1103 = vrot.slane %v1066, 4
        %v1104 = vsel %vm667, %v1103, %v1054
        %v1105 = vrot.slane %v1054, 4
        %v1106 = vsel %vm667, %v1066, %v1105
        %v1108 = vunpack.c.l.s4 1934713408
        %v1109 = vunpack.c.0.s8 %v1108
        %v1110 = vperm.slane %v1104, %v1109
        %v1112 = vunpack.c.l.s4 1934713408
        %v1113 = vunpack.c.0.s8 %v1112
        %v1114 = vperm.slane %v1106, %v1113
        %v1115 = vrot.slane %v1086, 4
        %v1116 = vsel %vm667, %v1115, %v1074
        %v1117 = vrot.slane %v1074, 4
        %v1118 = vsel %vm667, %v1086, %v1117
        %v1120 = vunpack.c.l.s4 1934713408
        %v1121 = vunpack.c.0.s8 %v1120
        %v1122 = vperm.slane %v1116, %v1121
        %v1124 = vunpack.c.l.s4 1934713408
        %v1125 = vunpack.c.0.s8 %v1124
        %v1126 = vperm.slane %v1118, %v1125
        %v1127 = vrot.slane %v1090, 4
        %v1128 = vsel %vm667, %v1127, %v1078
        %v1129 = vrot.slane %v1078, 4
        %v1130 = vsel %vm667, %v1090, %v1129
        %v1132 = vunpack.c.l.s4 1934713408
        %v1133 = vunpack.c.0.s8 %v1132
        %v1134 = vperm.slane %v1128, %v1133
        %v1136 = vunpack.c.l.s4 1934713408
        %v1137 = vunpack.c.0.s8 %v1136
        %v1138 = vperm.slane %v1130, %v1137
        %v1139 = vrot.slane %v1122, 4
        %v1140 = vsel %vm667, %v1139, %v1098
        %v1141 = vrot.slane %v1098, 4
        %v1142 = vsel %vm667, %v1122, %v1141
        %v1143 = vrot.slane %v1126, 4
        %v1144 = vsel %vm667, %v1143, %v1102
        %v1145 = vrot.slane %v1102, 4
        %v1146 = vsel %vm667, %v1126, %v1145
        %v1147 = vrot.slane %v1134, 4
        %v1148 = vsel %vm667, %v1147, %v1110
        %v1149 = vrot.slane %v1110, 4
        %v1150 = vsel %vm667, %v1134, %v1149
        %v1151 = vrot.slane %v1138, 4
        %v1152 = vsel %vm667, %v1151, %v1114
        %v1153 = vrot.slane %v1114, 4
        %v1154 = vsel %vm667, %v1138, %v1153
        %v1155 = vrot.slane %v868, 4
        %v1156 = vsel %vm667, %v1155, %v804
        %v1157 = vrot.slane %v804, 4
        %v1158 = vsel %vm667, %v868, %v1157
        %v1160 = vunpack.c.l.s4 1983009808
        %v1161 = vunpack.c.0.s8 %v1160
        %v1162 = vperm.slane %v1156, %v1161
        %v1164 = vunpack.c.l.s4 1983009808
        %v1165 = vunpack.c.0.s8 %v1164
        %v1166 = vperm.slane %v1158, %v1165
        %v1167 = vrot.slane %v900, 4
        %v1168 = vsel %vm667, %v1167, %v836
        %v1169 = vrot.slane %v836, 4
        %v1170 = vsel %vm667, %v900, %v1169
        %v1172 = vunpack.c.l.s4 1983009808
        %v1173 = vunpack.c.0.s8 %v1172
        %v1174 = vperm.slane %v1168, %v1173
        %v1176 = vunpack.c.l.s4 1983009808
        %v1177 = vunpack.c.0.s8 %v1176
        %v1178 = vperm.slane %v1170, %v1177
        %v1179 = vrot.slane %v996, 4
        %v1180 = vsel %vm667, %v1179, %v932
        %v1181 = vrot.slane %v932, 4
        %v1182 = vsel %vm667, %v996, %v1181
        %v1184 = vunpack.c.l.s4 1983009808
        %v1185 = vunpack.c.0.s8 %v1184
        %v1186 = vperm.slane %v1180, %v1185
        %v1188 = vunpack.c.l.s4 1983009808
        %v1189 = vunpack.c.0.s8 %v1188
        %v1190 = vperm.slane %v1182, %v1189
        %v1191 = vrot.slane %v1028, 4
        %v1192 = vsel %vm667, %v1191, %v964
        %v1193 = vrot.slane %v964, 4
        %v1194 = vsel %vm667, %v1028, %v1193
        %v1196 = vunpack.c.l.s4 1983009808
        %v1197 = vunpack.c.0.s8 %v1196
        %v1198 = vperm.slane %v1192, %v1197
        %v1200 = vunpack.c.l.s4 1983009808
        %v1201 = vunpack.c.0.s8 %v1200
        %v1202 = vperm.slane %v1194, %v1201
        %v1203 = vrot.slane %v1174, 4
        %v1204 = vsel %vm667, %v1203, %v1162
        %v1205 = vrot.slane %v1162, 4
        %v1206 = vsel %vm667, %v1174, %v1205
        %v1208 = vunpack.c.l.s4 1934713408
        %v1209 = vunpack.c.0.s8 %v1208
        %v1210 = vperm.slane %v1204, %v1209
        %v1212 = vunpack.c.l.s4 1934713408
        %v1213 = vunpack.c.0.s8 %v1212
        %v1214 = vperm.slane %v1206, %v1213
        %v1215 = vrot.slane %v1178, 4
        %v1216 = vsel %vm667, %v1215, %v1166
        %v1217 = vrot.slane %v1166, 4
        %v1218 = vsel %vm667, %v1178, %v1217
        %v1220 = vunpack.c.l.s4 1934713408
        %v1221 = vunpack.c.0.s8 %v1220
        %v1222 = vperm.slane %v1216, %v1221
        %v1224 = vunpack.c.l.s4 1934713408
        %v1225 = vunpack.c.0.s8 %v1224
        %v1226 = vperm.slane %v1218, %v1225
        %v1227 = vrot.slane %v1198, 4
        %v1228 = vsel %vm667, %v1227, %v1186
        %v1229 = vrot.slane %v1186, 4
        %v1230 = vsel %vm667, %v1198, %v1229
        %v1232 = vunpack.c.l.s4 1934713408
        %v1233 = vunpack.c.0.s8 %v1232
        %v1234 = vperm.slane %v1228, %v1233
        %v1236 = vunpack.c.l.s4 1934713408
        %v1237 = vunpack.c.0.s8 %v1236
        %v1238 = vperm.slane %v1230, %v1237
        %v1239 = vrot.slane %v1202, 4
        %v1240 = vsel %vm667, %v1239, %v1190
        %v1241 = vrot.slane %v1190, 4
        %v1242 = vsel %vm667, %v1202, %v1241
        %v1244 = vunpack.c.l.s4 1934713408
        %v1245 = vunpack.c.0.s8 %v1244
        %v1246 = vperm.slane %v1240, %v1245
        %v1248 = vunpack.c.l.s4 1934713408
        %v1249 = vunpack.c.0.s8 %v1248
        %v1250 = vperm.slane %v1242, %v1249
        %v1251 = vrot.slane %v1234, 4
        %v1252 = vsel %vm667, %v1251, %v1210
        %v1253 = vrot.slane %v1210, 4
        %v1254 = vsel %vm667, %v1234, %v1253
        %v1255 = vrot.slane %v1238, 4
        %v1256 = vsel %vm667, %v1255, %v1214
        %v1257 = vrot.slane %v1214, 4
        %v1258 = vsel %vm667, %v1238, %v1257
        %v1259 = vrot.slane %v1246, 4
        %v1260 = vsel %vm667, %v1259, %v1222
        %v1261 = vrot.slane %v1222, 4
        %v1262 = vsel %vm667, %v1246, %v1261
        %v1263 = vrot.slane %v1250, 4
        %v1264 = vsel %vm667, %v1263, %v1226
        %v1265 = vrot.slane %v1226, 4
        %v1266 = vsel %vm667, %v1250, %v1265
        %v1267 = vrot.slane %v869, 4
        %v1268 = vsel %vm667, %v1267, %v805
        %v1269 = vrot.slane %v805, 4
        %v1270 = vsel %vm667, %v869, %v1269
        %v1272 = vunpack.c.l.s4 1983009808
        %v1273 = vunpack.c.0.s8 %v1272
        %v1274 = vperm.slane %v1268, %v1273
        %v1276 = vunpack.c.l.s4 1983009808
        %v1277 = vunpack.c.0.s8 %v1276
        %v1278 = vperm.slane %v1270, %v1277
        %v1279 = vrot.slane %v901, 4
        %v1280 = vsel %vm667, %v1279, %v837
        %v1281 = vrot.slane %v837, 4
        %v1282 = vsel %vm667, %v901, %v1281
        %v1284 = vunpack.c.l.s4 1983009808
        %v1285 = vunpack.c.0.s8 %v1284
        %v1286 = vperm.slane %v1280, %v1285
        %v1288 = vunpack.c.l.s4 1983009808
        %v1289 = vunpack.c.0.s8 %v1288
        %v1290 = vperm.slane %v1282, %v1289
        %v1291 = vrot.slane %v997, 4
        %v1292 = vsel %vm667, %v1291, %v933
        %v1293 = vrot.slane %v933, 4
        %v1294 = vsel %vm667, %v997, %v1293
        %v1296 = vunpack.c.l.s4 1983009808
        %v1297 = vunpack.c.0.s8 %v1296
        %v1298 = vperm.slane %v1292, %v1297
        %v1300 = vunpack.c.l.s4 1983009808
        %v1301 = vunpack.c.0.s8 %v1300
        %v1302 = vperm.slane %v1294, %v1301
        %v1303 = vrot.slane %v1029, 4
        %v1304 = vsel %vm667, %v1303, %v965
        %v1305 = vrot.slane %v965, 4
        %v1306 = vsel %vm667, %v1029, %v1305
        %v1308 = vunpack.c.l.s4 1983009808
        %v1309 = vunpack.c.0.s8 %v1308
        %v1310 = vperm.slane %v1304, %v1309
        %v1312 = vunpack.c.l.s4 1983009808
        %v1313 = vunpack.c.0.s8 %v1312
        %v1314 = vperm.slane %v1306, %v1313
        %v1315 = vrot.slane %v1286, 4
        %v1316 = vsel %vm667, %v1315, %v1274
        %v1317 = vrot.slane %v1274, 4
        %v1318 = vsel %vm667, %v1286, %v1317
        %v1320 = vunpack.c.l.s4 1934713408
        %v1321 = vunpack.c.0.s8 %v1320
        %v1322 = vperm.slane %v1316, %v1321
        %v1324 = vunpack.c.l.s4 1934713408
        %v1325 = vunpack.c.0.s8 %v1324
        %v1326 = vperm.slane %v1318, %v1325
        %v1327 = vrot.slane %v1290, 4
        %v1328 = vsel %vm667, %v1327, %v1278
        %v1329 = vrot.slane %v1278, 4
        %v1330 = vsel %vm667, %v1290, %v1329
        %v1332 = vunpack.c.l.s4 1934713408
        %v1333 = vunpack.c.0.s8 %v1332
        %v1334 = vperm.slane %v1328, %v1333
        %v1336 = vunpack.c.l.s4 1934713408
        %v1337 = vunpack.c.0.s8 %v1336
        %v1338 = vperm.slane %v1330, %v1337
        %v1339 = vrot.slane %v1310, 4
        %v1340 = vsel %vm667, %v1339, %v1298
        %v1341 = vrot.slane %v1298, 4
        %v1342 = vsel %vm667, %v1310, %v1341
        %v1344 = vunpack.c.l.s4 1934713408
        %v1345 = vunpack.c.0.s8 %v1344
        %v1346 = vperm.slane %v1340, %v1345
        %v1348 = vunpack.c.l.s4 1934713408
        %v1349 = vunpack.c.0.s8 %v1348
        %v1350 = vperm.slane %v1342, %v1349
        %v1351 = vrot.slane %v1314, 4
        %v1352 = vsel %vm667, %v1351, %v1302
        %v1353 = vrot.slane %v1302, 4
        %v1354 = vsel %vm667, %v1314, %v1353
        %v1356 = vunpack.c.l.s4 1934713408
        %v1357 = vunpack.c.0.s8 %v1356
        %v1358 = vperm.slane %v1352, %v1357
        %v1360 = vunpack.c.l.s4 1934713408
        %v1361 = vunpack.c.0.s8 %v1360
        %v1362 = vperm.slane %v1354, %v1361
        %v1363 = vrot.slane %v1346, 4
        %v1364 = vsel %vm667, %v1363, %v1322
        %v1365 = vrot.slane %v1322, 4
        %v1366 = vsel %vm667, %v1346, %v1365
        %v1367 = vrot.slane %v1350, 4
        %v1368 = vsel %vm667, %v1367, %v1326
        %v1369 = vrot.slane %v1326, 4
        %v1370 = vsel %vm667, %v1350, %v1369
        %v1371 = vrot.slane %v1358, 4
        %v1372 = vsel %vm667, %v1371, %v1334
        %v1373 = vrot.slane %v1334, 4
        %v1374 = vsel %vm667, %v1358, %v1373
        %v1375 = vrot.slane %v1362, 4
        %v1376 = vsel %vm667, %v1375, %v1338
        %v1377 = vrot.slane %v1338, 4
        %v1378 = vsel %vm667, %v1362, %v1377
        %v1379 = vrot.slane %v870, 4
        %v1380 = vsel %vm667, %v1379, %v806
        %v1381 = vrot.slane %v806, 4
        %v1382 = vsel %vm667, %v870, %v1381
        %v1384 = vunpack.c.l.s4 1983009808
        %v1385 = vunpack.c.0.s8 %v1384
        %v1386 = vperm.slane %v1380, %v1385
        %v1388 = vunpack.c.l.s4 1983009808
        %v1389 = vunpack.c.0.s8 %v1388
        %v1390 = vperm.slane %v1382, %v1389
        %v1391 = vrot.slane %v902, 4
        %v1392 = vsel %vm667, %v1391, %v838
        %v1393 = vrot.slane %v838, 4
        %v1394 = vsel %vm667, %v902, %v1393
        %v1396 = vunpack.c.l.s4 1983009808
        %v1397 = vunpack.c.0.s8 %v1396
        %v1398 = vperm.slane %v1392, %v1397
        %v1400 = vunpack.c.l.s4 1983009808
        %v1401 = vunpack.c.0.s8 %v1400
        %v1402 = vperm.slane %v1394, %v1401
        %v1403 = vrot.slane %v998, 4
        %v1404 = vsel %vm667, %v1403, %v934
        %v1405 = vrot.slane %v934, 4
        %v1406 = vsel %vm667, %v998, %v1405
        %v1408 = vunpack.c.l.s4 1983009808
        %v1409 = vunpack.c.0.s8 %v1408
        %v1410 = vperm.slane %v1404, %v1409
        %v1412 = vunpack.c.l.s4 1983009808
        %v1413 = vunpack.c.0.s8 %v1412
        %v1414 = vperm.slane %v1406, %v1413
        %v1415 = vrot.slane %v1030, 4
        %v1416 = vsel %vm667, %v1415, %v966
        %v1417 = vrot.slane %v966, 4
        %v1418 = vsel %vm667, %v1030, %v1417
        %v1420 = vunpack.c.l.s4 1983009808
        %v1421 = vunpack.c.0.s8 %v1420
        %v1422 = vperm.slane %v1416, %v1421
        %v1424 = vunpack.c.l.s4 1983009808
        %v1425 = vunpack.c.0.s8 %v1424
        %v1426 = vperm.slane %v1418, %v1425
        %v1427 = vrot.slane %v1398, 4
        %v1428 = vsel %vm667, %v1427, %v1386
        %v1429 = vrot.slane %v1386, 4
        %v1430 = vsel %vm667, %v1398, %v1429
        %v1432 = vunpack.c.l.s4 1934713408
        %v1433 = vunpack.c.0.s8 %v1432
        %v1434 = vperm.slane %v1428, %v1433
        %v1436 = vunpack.c.l.s4 1934713408
        %v1437 = vunpack.c.0.s8 %v1436
        %v1438 = vperm.slane %v1430, %v1437
        %v1439 = vrot.slane %v1402, 4
        %v1440 = vsel %vm667, %v1439, %v1390
        %v1441 = vrot.slane %v1390, 4
        %v1442 = vsel %vm667, %v1402, %v1441
        %v1444 = vunpack.c.l.s4 1934713408
        %v1445 = vunpack.c.0.s8 %v1444
        %v1446 = vperm.slane %v1440, %v1445
        %v1448 = vunpack.c.l.s4 1934713408
        %v1449 = vunpack.c.0.s8 %v1448
        %v1450 = vperm.slane %v1442, %v1449
        %v1451 = vrot.slane %v1422, 4
        %v1452 = vsel %vm667, %v1451, %v1410
        %v1453 = vrot.slane %v1410, 4
        %v1454 = vsel %vm667, %v1422, %v1453
        %v1456 = vunpack.c.l.s4 1934713408
        %v1457 = vunpack.c.0.s8 %v1456
        %v1458 = vperm.slane %v1452, %v1457
        %v1460 = vunpack.c.l.s4 1934713408
        %v1461 = vunpack.c.0.s8 %v1460
        %v1462 = vperm.slane %v1454, %v1461
        %v1463 = vrot.slane %v1426, 4
        %v1464 = vsel %vm667, %v1463, %v1414
        %v1465 = vrot.slane %v1414, 4
        %v1466 = vsel %vm667, %v1426, %v1465
        %v1468 = vunpack.c.l.s4 1934713408
        %v1469 = vunpack.c.0.s8 %v1468
        %v1470 = vperm.slane %v1464, %v1469
        %v1472 = vunpack.c.l.s4 1934713408
        %v1473 = vunpack.c.0.s8 %v1472
        %v1474 = vperm.slane %v1466, %v1473
        %v1475 = vrot.slane %v1458, 4
        %v1476 = vsel %vm667, %v1475, %v1434
        %v1477 = vrot.slane %v1434, 4
        %v1478 = vsel %vm667, %v1458, %v1477
        %v1479 = vrot.slane %v1462, 4
        %v1480 = vsel %vm667, %v1479, %v1438
        %v1481 = vrot.slane %v1438, 4
        %v1482 = vsel %vm667, %v1462, %v1481
        %v1483 = vrot.slane %v1470, 4
        %v1484 = vsel %vm667, %v1483, %v1446
        %v1485 = vrot.slane %v1446, 4
        %v1486 = vsel %vm667, %v1470, %v1485
        %v1487 = vrot.slane %v1474, 4
        %v1488 = vsel %vm667, %v1487, %v1450
        %v1489 = vrot.slane %v1450, 4
        %v1490 = vsel %vm667, %v1474, %v1489
        %v1491 = vrot.slane %v871, 4
        %v1492 = vsel %vm667, %v1491, %v807
        %v1493 = vrot.slane %v807, 4
        %v1494 = vsel %vm667, %v871, %v1493
        %v1496 = vunpack.c.l.s4 1983009808
        %v1497 = vunpack.c.0.s8 %v1496
        %v1498 = vperm.slane %v1492, %v1497
        %v1500 = vunpack.c.l.s4 1983009808
        %v1501 = vunpack.c.0.s8 %v1500
        %v1502 = vperm.slane %v1494, %v1501
        %v1503 = vrot.slane %v903, 4
        %v1504 = vsel %vm667, %v1503, %v839
        %v1505 = vrot.slane %v839, 4
        %v1506 = vsel %vm667, %v903, %v1505
        %v1508 = vunpack.c.l.s4 1983009808
        %v1509 = vunpack.c.0.s8 %v1508
        %v1510 = vperm.slane %v1504, %v1509
        %v1512 = vunpack.c.l.s4 1983009808
        %v1513 = vunpack.c.0.s8 %v1512
        %v1514 = vperm.slane %v1506, %v1513
        %v1515 = vrot.slane %v999, 4
        %v1516 = vsel %vm667, %v1515, %v935
        %v1517 = vrot.slane %v935, 4
        %v1518 = vsel %vm667, %v999, %v1517
        %v1520 = vunpack.c.l.s4 1983009808
        %v1521 = vunpack.c.0.s8 %v1520
        %v1522 = vperm.slane %v1516, %v1521
        %v1524 = vunpack.c.l.s4 1983009808
        %v1525 = vunpack.c.0.s8 %v1524
        %v1526 = vperm.slane %v1518, %v1525
        %v1527 = vrot.slane %v1031, 4
        %v1528 = vsel %vm667, %v1527, %v967
        %v1529 = vrot.slane %v967, 4
        %v1530 = vsel %vm667, %v1031, %v1529
        %v1532 = vunpack.c.l.s4 1983009808
        %v1533 = vunpack.c.0.s8 %v1532
        %v1534 = vperm.slane %v1528, %v1533
        %v1536 = vunpack.c.l.s4 1983009808
        %v1537 = vunpack.c.0.s8 %v1536
        %v1538 = vperm.slane %v1530, %v1537
        %v1539 = vrot.slane %v1510, 4
        %v1540 = vsel %vm667, %v1539, %v1498
        %v1541 = vrot.slane %v1498, 4
        %v1542 = vsel %vm667, %v1510, %v1541
        %v1544 = vunpack.c.l.s4 1934713408
        %v1545 = vunpack.c.0.s8 %v1544
        %v1546 = vperm.slane %v1540, %v1545
        %v1548 = vunpack.c.l.s4 1934713408
        %v1549 = vunpack.c.0.s8 %v1548
        %v1550 = vperm.slane %v1542, %v1549
        %v1551 = vrot.slane %v1514, 4
        %v1552 = vsel %vm667, %v1551, %v1502
        %v1553 = vrot.slane %v1502, 4
        %v1554 = vsel %vm667, %v1514, %v1553
        %v1556 = vunpack.c.l.s4 1934713408
        %v1557 = vunpack.c.0.s8 %v1556
        %v1558 = vperm.slane %v1552, %v1557
        %v1560 = vunpack.c.l.s4 1934713408
        %v1561 = vunpack.c.0.s8 %v1560
        %v1562 = vperm.slane %v1554, %v1561
        %v1563 = vrot.slane %v1534, 4
        %v1564 = vsel %vm667, %v1563, %v1522
        %v1565 = vrot.slane %v1522, 4
        %v1566 = vsel %vm667, %v1534, %v1565
        %v1568 = vunpack.c.l.s4 1934713408
        %v1569 = vunpack.c.0.s8 %v1568
        %v1570 = vperm.slane %v1564, %v1569
        %v1572 = vunpack.c.l.s4 1934713408
        %v1573 = vunpack.c.0.s8 %v1572
        %v1574 = vperm.slane %v1566, %v1573
        %v1575 = vrot.slane %v1538, 4
        %v1576 = vsel %vm667, %v1575, %v1526
        %v1577 = vrot.slane %v1526, 4
        %v1578 = vsel %vm667, %v1538, %v1577
        %v1580 = vunpack.c.l.s4 1934713408
        %v1581 = vunpack.c.0.s8 %v1580
        %v1582 = vperm.slane %v1576, %v1581
        %v1584 = vunpack.c.l.s4 1934713408
        %v1585 = vunpack.c.0.s8 %v1584
        %v1586 = vperm.slane %v1578, %v1585
        %v1587 = vrot.slane %v1570, 4
        %v1588 = vsel %vm667, %v1587, %v1546
        %v1589 = vrot.slane %v1546, 4
        %v1590 = vsel %vm667, %v1570, %v1589
        %v1591 = vrot.slane %v1574, 4
        %v1592 = vsel %vm667, %v1591, %v1550
        %v1593 = vrot.slane %v1550, 4
        %v1594 = vsel %vm667, %v1574, %v1593
        %v1595 = vrot.slane %v1582, 4
        %v1596 = vsel %vm667, %v1595, %v1558
        %v1597 = vrot.slane %v1558, 4
        %v1598 = vsel %vm667, %v1582, %v1597
        %v1599 = vrot.slane %v1586, 4
        %v1600 = vsel %vm667, %v1599, %v1562
        %v1601 = vrot.slane %v1562, 4
        %v1602 = vsel %vm667, %v1586, %v1601
        %v1603 = vrot.slane %v872, 4
        %v1604 = vsel %vm667, %v1603, %v808
        %v1605 = vrot.slane %v808, 4
        %v1606 = vsel %vm667, %v872, %v1605
        %v1608 = vunpack.c.l.s4 1983009808
        %v1609 = vunpack.c.0.s8 %v1608
        %v1610 = vperm.slane %v1604, %v1609
        %v1612 = vunpack.c.l.s4 1983009808
        %v1613 = vunpack.c.0.s8 %v1612
        %v1614 = vperm.slane %v1606, %v1613
        %v1615 = vrot.slane %v904, 4
        %v1616 = vsel %vm667, %v1615, %v840
        %v1617 = vrot.slane %v840, 4
        %v1618 = vsel %vm667, %v904, %v1617
        %v1620 = vunpack.c.l.s4 1983009808
        %v1621 = vunpack.c.0.s8 %v1620
        %v1622 = vperm.slane %v1616, %v1621
        %v1624 = vunpack.c.l.s4 1983009808
        %v1625 = vunpack.c.0.s8 %v1624
        %v1626 = vperm.slane %v1618, %v1625
        %v1627 = vrot.slane %v1000, 4
        %v1628 = vsel %vm667, %v1627, %v936
        %v1629 = vrot.slane %v936, 4
        %v1630 = vsel %vm667, %v1000, %v1629
        %v1632 = vunpack.c.l.s4 1983009808
        %v1633 = vunpack.c.0.s8 %v1632
        %v1634 = vperm.slane %v1628, %v1633
        %v1636 = vunpack.c.l.s4 1983009808
        %v1637 = vunpack.c.0.s8 %v1636
        %v1638 = vperm.slane %v1630, %v1637
        %v1639 = vrot.slane %v1032, 4
        %v1640 = vsel %vm667, %v1639, %v968
        %v1641 = vrot.slane %v968, 4
        %v1642 = vsel %vm667, %v1032, %v1641
        %v1644 = vunpack.c.l.s4 1983009808
        %v1645 = vunpack.c.0.s8 %v1644
        %v1646 = vperm.slane %v1640, %v1645
        %v1648 = vunpack.c.l.s4 1983009808
        %v1649 = vunpack.c.0.s8 %v1648
        %v1650 = vperm.slane %v1642, %v1649
        %v1651 = vrot.slane %v1622, 4
        %v1652 = vsel %vm667, %v1651, %v1610
        %v1653 = vrot.slane %v1610, 4
        %v1654 = vsel %vm667, %v1622, %v1653
        %v1656 = vunpack.c.l.s4 1934713408
        %v1657 = vunpack.c.0.s8 %v1656
        %v1658 = vperm.slane %v1652, %v1657
        %v1660 = vunpack.c.l.s4 1934713408
        %v1661 = vunpack.c.0.s8 %v1660
        %v1662 = vperm.slane %v1654, %v1661
        %v1663 = vrot.slane %v1626, 4
        %v1664 = vsel %vm667, %v1663, %v1614
        %v1665 = vrot.slane %v1614, 4
        %v1666 = vsel %vm667, %v1626, %v1665
        %v1668 = vunpack.c.l.s4 1934713408
        %v1669 = vunpack.c.0.s8 %v1668
        %v1670 = vperm.slane %v1664, %v1669
        %v1672 = vunpack.c.l.s4 1934713408
        %v1673 = vunpack.c.0.s8 %v1672
        %v1674 = vperm.slane %v1666, %v1673
        %v1675 = vrot.slane %v1646, 4
        %v1676 = vsel %vm667, %v1675, %v1634
        %v1677 = vrot.slane %v1634, 4
        %v1678 = vsel %vm667, %v1646, %v1677
        %v1680 = vunpack.c.l.s4 1934713408
        %v1681 = vunpack.c.0.s8 %v1680
        %v1682 = vperm.slane %v1676, %v1681
        %v1684 = vunpack.c.l.s4 1934713408
        %v1685 = vunpack.c.0.s8 %v1684
        %v1686 = vperm.slane %v1678, %v1685
        %v1687 = vrot.slane %v1650, 4
        %v1688 = vsel %vm667, %v1687, %v1638
        %v1689 = vrot.slane %v1638, 4
        %v1690 = vsel %vm667, %v1650, %v1689
        %v1692 = vunpack.c.l.s4 1934713408
        %v1693 = vunpack.c.0.s8 %v1692
        %v1694 = vperm.slane %v1688, %v1693
        %v1696 = vunpack.c.l.s4 1934713408
        %v1697 = vunpack.c.0.s8 %v1696
        %v1698 = vperm.slane %v1690, %v1697
        %v1699 = vrot.slane %v1682, 4
        %v1700 = vsel %vm667, %v1699, %v1658
        %v1701 = vrot.slane %v1658, 4
        %v1702 = vsel %vm667, %v1682, %v1701
        %v1703 = vrot.slane %v1686, 4
        %v1704 = vsel %vm667, %v1703, %v1662
        %v1705 = vrot.slane %v1662, 4
        %v1706 = vsel %vm667, %v1686, %v1705
        %v1707 = vrot.slane %v1694, 4
        %v1708 = vsel %vm667, %v1707, %v1670
        %v1709 = vrot.slane %v1670, 4
        %v1710 = vsel %vm667, %v1694, %v1709
        %v1711 = vrot.slane %v1698, 4
        %v1712 = vsel %vm667, %v1711, %v1674
        %v1713 = vrot.slane %v1674, 4
        %v1714 = vsel %vm667, %v1698, %v1713
        %v1715 = vrot.slane %v873, 4
        %v1716 = vsel %vm667, %v1715, %v809
        %v1717 = vrot.slane %v809, 4
        %v1718 = vsel %vm667, %v873, %v1717
        %v1720 = vunpack.c.l.s4 1983009808
        %v1721 = vunpack.c.0.s8 %v1720
        %v1722 = vperm.slane %v1716, %v1721
        %v1724 = vunpack.c.l.s4 1983009808
        %v1725 = vunpack.c.0.s8 %v1724
        %v1726 = vperm.slane %v1718, %v1725
        %v1727 = vrot.slane %v905, 4
        %v1728 = vsel %vm667, %v1727, %v841
        %v1729 = vrot.slane %v841, 4
        %v1730 = vsel %vm667, %v905, %v1729
        %v1732 = vunpack.c.l.s4 1983009808
        %v1733 = vunpack.c.0.s8 %v1732
        %v1734 = vperm.slane %v1728, %v1733
        %v1736 = vunpack.c.l.s4 1983009808
        %v1737 = vunpack.c.0.s8 %v1736
        %v1738 = vperm.slane %v1730, %v1737
        %v1739 = vrot.slane %v1001, 4
        %v1740 = vsel %vm667, %v1739, %v937
        %v1741 = vrot.slane %v937, 4
        %v1742 = vsel %vm667, %v1001, %v1741
        %v1744 = vunpack.c.l.s4 1983009808
        %v1745 = vunpack.c.0.s8 %v1744
        %v1746 = vperm.slane %v1740, %v1745
        %v1748 = vunpack.c.l.s4 1983009808
        %v1749 = vunpack.c.0.s8 %v1748
        %v1750 = vperm.slane %v1742, %v1749
        %v1751 = vrot.slane %v1033, 4
        %v1752 = vsel %vm667, %v1751, %v969
        %v1753 = vrot.slane %v969, 4
        %v1754 = vsel %vm667, %v1033, %v1753
        %v1756 = vunpack.c.l.s4 1983009808
        %v1757 = vunpack.c.0.s8 %v1756
        %v1758 = vperm.slane %v1752, %v1757
        %v1760 = vunpack.c.l.s4 1983009808
        %v1761 = vunpack.c.0.s8 %v1760
        %v1762 = vperm.slane %v1754, %v1761
        %v1763 = vrot.slane %v1734, 4
        %v1764 = vsel %vm667, %v1763, %v1722
        %v1765 = vrot.slane %v1722, 4
        %v1766 = vsel %vm667, %v1734, %v1765
        %v1768 = vunpack.c.l.s4 1934713408
        %v1769 = vunpack.c.0.s8 %v1768
        %v1770 = vperm.slane %v1764, %v1769
        %v1772 = vunpack.c.l.s4 1934713408
        %v1773 = vunpack.c.0.s8 %v1772
        %v1774 = vperm.slane %v1766, %v1773
        %v1775 = vrot.slane %v1738, 4
        %v1776 = vsel %vm667, %v1775, %v1726
        %v1777 = vrot.slane %v1726, 4
        %v1778 = vsel %vm667, %v1738, %v1777
        %v1780 = vunpack.c.l.s4 1934713408
        %v1781 = vunpack.c.0.s8 %v1780
        %v1782 = vperm.slane %v1776, %v1781
        %v1784 = vunpack.c.l.s4 1934713408
        %v1785 = vunpack.c.0.s8 %v1784
        %v1786 = vperm.slane %v1778, %v1785
        %v1787 = vrot.slane %v1758, 4
        %v1788 = vsel %vm667, %v1787, %v1746
        %v1789 = vrot.slane %v1746, 4
        %v1790 = vsel %vm667, %v1758, %v1789
        %v1792 = vunpack.c.l.s4 1934713408
        %v1793 = vunpack.c.0.s8 %v1792
        %v1794 = vperm.slane %v1788, %v1793
        %v1796 = vunpack.c.l.s4 1934713408
        %v1797 = vunpack.c.0.s8 %v1796
        %v1798 = vperm.slane %v1790, %v1797
        %v1799 = vrot.slane %v1762, 4
        %v1800 = vsel %vm667, %v1799, %v1750
        %v1801 = vrot.slane %v1750, 4
        %v1802 = vsel %vm667, %v1762, %v1801
        %v1804 = vunpack.c.l.s4 1934713408
        %v1805 = vunpack.c.0.s8 %v1804
        %v1806 = vperm.slane %v1800, %v1805
        %v1808 = vunpack.c.l.s4 1934713408
        %v1809 = vunpack.c.0.s8 %v1808
        %v1810 = vperm.slane %v1802, %v1809
        %v1811 = vrot.slane %v1794, 4
        %v1812 = vsel %vm667, %v1811, %v1770
        %v1813 = vrot.slane %v1770, 4
        %v1814 = vsel %vm667, %v1794, %v1813
        %v1815 = vrot.slane %v1798, 4
        %v1816 = vsel %vm667, %v1815, %v1774
        %v1817 = vrot.slane %v1774, 4
        %v1818 = vsel %vm667, %v1798, %v1817
        %v1819 = vrot.slane %v1806, 4
        %v1820 = vsel %vm667, %v1819, %v1782
        %v1821 = vrot.slane %v1782, 4
        %v1822 = vsel %vm667, %v1806, %v1821
        %v1823 = vrot.slane %v1810, 4
        %v1824 = vsel %vm667, %v1823, %v1786
        %v1825 = vrot.slane %v1786, 4
        %v1826 = vsel %vm667, %v1810, %v1825
        %v1827 = vrot.slane %v874, 4
        %v1828 = vsel %vm667, %v1827, %v810
        %v1829 = vrot.slane %v810, 4
        %v1830 = vsel %vm667, %v874, %v1829
        %v1832 = vunpack.c.l.s4 1983009808
        %v1833 = vunpack.c.0.s8 %v1832
        %v1834 = vperm.slane %v1828, %v1833
        %v1836 = vunpack.c.l.s4 1983009808
        %v1837 = vunpack.c.0.s8 %v1836
        %v1838 = vperm.slane %v1830, %v1837
        %v1839 = vrot.slane %v906, 4
        %v1840 = vsel %vm667, %v1839, %v842
        %v1841 = vrot.slane %v842, 4
        %v1842 = vsel %vm667, %v906, %v1841
        %v1844 = vunpack.c.l.s4 1983009808
        %v1845 = vunpack.c.0.s8 %v1844
        %v1846 = vperm.slane %v1840, %v1845
        %v1848 = vunpack.c.l.s4 1983009808
        %v1849 = vunpack.c.0.s8 %v1848
        %v1850 = vperm.slane %v1842, %v1849
        %v1851 = vrot.slane %v1002, 4
        %v1852 = vsel %vm667, %v1851, %v938
        %v1853 = vrot.slane %v938, 4
        %v1854 = vsel %vm667, %v1002, %v1853
        %v1856 = vunpack.c.l.s4 1983009808
        %v1857 = vunpack.c.0.s8 %v1856
        %v1858 = vperm.slane %v1852, %v1857
        %v1860 = vunpack.c.l.s4 1983009808
        %v1861 = vunpack.c.0.s8 %v1860
        %v1862 = vperm.slane %v1854, %v1861
        %v1863 = vrot.slane %v1034, 4
        %v1864 = vsel %vm667, %v1863, %v970
        %v1865 = vrot.slane %v970, 4
        %v1866 = vsel %vm667, %v1034, %v1865
        %v1868 = vunpack.c.l.s4 1983009808
        %v1869 = vunpack.c.0.s8 %v1868
        %v1870 = vperm.slane %v1864, %v1869
        %v1872 = vunpack.c.l.s4 1983009808
        %v1873 = vunpack.c.0.s8 %v1872
        %v1874 = vperm.slane %v1866, %v1873
        %v1875 = vrot.slane %v1846, 4
        %v1876 = vsel %vm667, %v1875, %v1834
        %v1877 = vrot.slane %v1834, 4
        %v1878 = vsel %vm667, %v1846, %v1877
        %v1880 = vunpack.c.l.s4 1934713408
        %v1881 = vunpack.c.0.s8 %v1880
        %v1882 = vperm.slane %v1876, %v1881
        %v1884 = vunpack.c.l.s4 1934713408
        %v1885 = vunpack.c.0.s8 %v1884
        %v1886 = vperm.slane %v1878, %v1885
        %v1887 = vrot.slane %v1850, 4
        %v1888 = vsel %vm667, %v1887, %v1838
        %v1889 = vrot.slane %v1838, 4
        %v1890 = vsel %vm667, %v1850, %v1889
        %v1892 = vunpack.c.l.s4 1934713408
        %v1893 = vunpack.c.0.s8 %v1892
        %v1894 = vperm.slane %v1888, %v1893
        %v1896 = vunpack.c.l.s4 1934713408
        %v1897 = vunpack.c.0.s8 %v1896
        %v1898 = vperm.slane %v1890, %v1897
        %v1899 = vrot.slane %v1870, 4
        %v1900 = vsel %vm667, %v1899, %v1858
        %v1901 = vrot.slane %v1858, 4
        %v1902 = vsel %vm667, %v1870, %v1901
        %v1904 = vunpack.c.l.s4 1934713408
        %v1905 = vunpack.c.0.s8 %v1904
        %v1906 = vperm.slane %v1900, %v1905
        %v1908 = vunpack.c.l.s4 1934713408
        %v1909 = vunpack.c.0.s8 %v1908
        %v1910 = vperm.slane %v1902, %v1909
        %v1911 = vrot.slane %v1874, 4
        %v1912 = vsel %vm667, %v1911, %v1862
        %v1913 = vrot.slane %v1862, 4
        %v1914 = vsel %vm667, %v1874, %v1913
        %v1916 = vunpack.c.l.s4 1934713408
        %v1917 = vunpack.c.0.s8 %v1916
        %v1918 = vperm.slane %v1912, %v1917
        %v1920 = vunpack.c.l.s4 1934713408
        %v1921 = vunpack.c.0.s8 %v1920
        %v1922 = vperm.slane %v1914, %v1921
        %v1923 = vrot.slane %v1906, 4
        %v1924 = vsel %vm667, %v1923, %v1882
        %v1925 = vrot.slane %v1882, 4
        %v1926 = vsel %vm667, %v1906, %v1925
        %v1927 = vrot.slane %v1910, 4
        %v1928 = vsel %vm667, %v1927, %v1886
        %v1929 = vrot.slane %v1886, 4
        %v1930 = vsel %vm667, %v1910, %v1929
        %v1931 = vrot.slane %v1918, 4
        %v1932 = vsel %vm667, %v1931, %v1894
        %v1933 = vrot.slane %v1894, 4
        %v1934 = vsel %vm667, %v1918, %v1933
        %v1935 = vrot.slane %v1922, 4
        %v1936 = vsel %vm667, %v1935, %v1898
        %v1937 = vrot.slane %v1898, 4
        %v1938 = vsel %vm667, %v1922, %v1937
        %v1939 = vrot.slane %v875, 4
        %v1940 = vsel %vm667, %v1939, %v811
        %v1941 = vrot.slane %v811, 4
        %v1942 = vsel %vm667, %v875, %v1941
        %v1944 = vunpack.c.l.s4 1983009808
        %v1945 = vunpack.c.0.s8 %v1944
        %v1946 = vperm.slane %v1940, %v1945
        %v1948 = vunpack.c.l.s4 1983009808
        %v1949 = vunpack.c.0.s8 %v1948
        %v1950 = vperm.slane %v1942, %v1949
        %v1951 = vrot.slane %v907, 4
        %v1952 = vsel %vm667, %v1951, %v843
        %v1953 = vrot.slane %v843, 4
        %v1954 = vsel %vm667, %v907, %v1953
        %v1956 = vunpack.c.l.s4 1983009808
        %v1957 = vunpack.c.0.s8 %v1956
        %v1958 = vperm.slane %v1952, %v1957
        %v1960 = vunpack.c.l.s4 1983009808
        %v1961 = vunpack.c.0.s8 %v1960
        %v1962 = vperm.slane %v1954, %v1961
        %v1963 = vrot.slane %v1003, 4
        %v1964 = vsel %vm667, %v1963, %v939
        %v1965 = vrot.slane %v939, 4
        %v1966 = vsel %vm667, %v1003, %v1965
        %v1968 = vunpack.c.l.s4 1983009808
        %v1969 = vunpack.c.0.s8 %v1968
        %v1970 = vperm.slane %v1964, %v1969
        %v1972 = vunpack.c.l.s4 1983009808
        %v1973 = vunpack.c.0.s8 %v1972
        %v1974 = vperm.slane %v1966, %v1973
        %v1975 = vrot.slane %v1035, 4
        %v1976 = vsel %vm667, %v1975, %v971
        %v1977 = vrot.slane %v971, 4
        %v1978 = vsel %vm667, %v1035, %v1977
        %v1980 = vunpack.c.l.s4 1983009808
        %v1981 = vunpack.c.0.s8 %v1980
        %v1982 = vperm.slane %v1976, %v1981
        %v1984 = vunpack.c.l.s4 1983009808
        %v1985 = vunpack.c.0.s8 %v1984
        %v1986 = vperm.slane %v1978, %v1985
        %v1987 = vrot.slane %v1958, 4
        %v1988 = vsel %vm667, %v1987, %v1946
        %v1989 = vrot.slane %v1946, 4
        %v1990 = vsel %vm667, %v1958, %v1989
        %v1992 = vunpack.c.l.s4 1934713408
        %v1993 = vunpack.c.0.s8 %v1992
        %v1994 = vperm.slane %v1988, %v1993
        %v1996 = vunpack.c.l.s4 1934713408
        %v1997 = vunpack.c.0.s8 %v1996
        %v1998 = vperm.slane %v1990, %v1997
        %v1999 = vrot.slane %v1962, 4
        %v2000 = vsel %vm667, %v1999, %v1950
        %v2001 = vrot.slane %v1950, 4
        %v2002 = vsel %vm667, %v1962, %v2001
        %v2004 = vunpack.c.l.s4 1934713408
        %v2005 = vunpack.c.0.s8 %v2004
        %v2006 = vperm.slane %v2000, %v2005
        %v2008 = vunpack.c.l.s4 1934713408
        %v2009 = vunpack.c.0.s8 %v2008
        %v2010 = vperm.slane %v2002, %v2009
        %v2011 = vrot.slane %v1982, 4
        %v2012 = vsel %vm667, %v2011, %v1970
        %v2013 = vrot.slane %v1970, 4
        %v2014 = vsel %vm667, %v1982, %v2013
        %v2016 = vunpack.c.l.s4 1934713408
        %v2017 = vunpack.c.0.s8 %v2016
        %v2018 = vperm.slane %v2012, %v2017
        %v2020 = vunpack.c.l.s4 1934713408
        %v2021 = vunpack.c.0.s8 %v2020
        %v2022 = vperm.slane %v2014, %v2021
        %v2023 = vrot.slane %v1986, 4
        %v2024 = vsel %vm667, %v2023, %v1974
        %v2025 = vrot.slane %v1974, 4
        %v2026 = vsel %vm667, %v1986, %v2025
        %v2028 = vunpack.c.l.s4 1934713408
        %v2029 = vunpack.c.0.s8 %v2028
        %v2030 = vperm.slane %v2024, %v2029
        %v2032 = vunpack.c.l.s4 1934713408
        %v2033 = vunpack.c.0.s8 %v2032
        %v2034 = vperm.slane %v2026, %v2033
        %v2035 = vrot.slane %v2018, 4
        %v2036 = vsel %vm667, %v2035, %v1994
        %v2037 = vrot.slane %v1994, 4
        %v2038 = vsel %vm667, %v2018, %v2037
        %v2039 = vrot.slane %v2022, 4
        %v2040 = vsel %vm667, %v2039, %v1998
        %v2041 = vrot.slane %v1998, 4
        %v2042 = vsel %vm667, %v2022, %v2041
        %v2043 = vrot.slane %v2030, 4
        %v2044 = vsel %vm667, %v2043, %v2006
        %v2045 = vrot.slane %v2006, 4
        %v2046 = vsel %vm667, %v2030, %v2045
        %v2047 = vrot.slane %v2034, 4
        %v2048 = vsel %vm667, %v2047, %v2010
        %v2049 = vrot.slane %v2010, 4
        %v2050 = vsel %vm667, %v2034, %v2049
        %v2051 = vrot.slane %v876, 4
        %v2052 = vsel %vm667, %v2051, %v812
        %v2054 = vunpack.c.l.s4 1983009808
        %v2055 = vunpack.c.0.s8 %v2054
        %v2056 = vperm.slane %v2052, %v2055
        %v2057 = vrot.slane %v908, 4
        %v2058 = vsel %vm667, %v2057, %v844
        %v2060 = vunpack.c.l.s4 1983009808
        %v2061 = vunpack.c.0.s8 %v2060
        %v2062 = vperm.slane %v2058, %v2061
        %v2063 = vrot.slane %v1004, 4
        %v2064 = vsel %vm667, %v2063, %v940
        %v2066 = vunpack.c.l.s4 1983009808
        %v2067 = vunpack.c.0.s8 %v2066
        %v2068 = vperm.slane %v2064, %v2067
        %v2069 = vrot.slane %v1036, 4
        %v2070 = vsel %vm667, %v2069, %v972
        %v2072 = vunpack.c.l.s4 1983009808
        %v2073 = vunpack.c.0.s8 %v2072
        %v2074 = vperm.slane %v2070, %v2073
        %v2075 = vrot.slane %v2062, 4
        %v2076 = vsel %vm667, %v2075, %v2056
        %v2078 = vunpack.c.l.s4 1934713408
        %v2079 = vunpack.c.0.s8 %v2078
        %v2080 = vperm.slane %v2076, %v2079
        %v2081 = vrot.slane %v2074, 4
        %v2082 = vsel %vm667, %v2081, %v2068
        %v2084 = vunpack.c.l.s4 1934713408
        %v2085 = vunpack.c.0.s8 %v2084
        %v2086 = vperm.slane %v2082, %v2085
        %v2087 = vrot.slane %v2086, 4
        %v2088 = vsel %vm667, %v2087, %v2080
        %v2089 = vrot.slane %v2080, 4
        %v2090 = vsel %vm667, %v2086, %v2089
        %2091 = vxpose.xlu0.b32.start [1/16] %v570, 128
        %2092 = vxpose.xlu0.b32.cont [2/16] 0.0, 128
        %2093 = vxpose.xlu0.b32.cont [3/16] 0.0, 128
        %2094 = vxpose.xlu0.b32.cont [4/16] 0.0, 128
        %2095 = vxpose.xlu0.b32.cont [5/16] 0.0, 128
        %2096 = vxpose.xlu0.b32.cont [6/16] 0.0, 128
        %2097 = vxpose.xlu0.b32.cont [7/16] 0.0, 128
        %2098 = vxpose.xlu0.b32.cont [8/16] 0.0, 128
        %2099 = vxpose.xlu0.b32.cont [9/16] 0.0, 128
        %2100 = vxpose.xlu0.b32.cont [10/16] 0.0, 128
        %2101 = vxpose.xlu0.b32.cont [11/16] 0.0, 128
        %2102 = vxpose.xlu0.b32.cont [12/16] 0.0, 128
        %2103 = vxpose.xlu0.b32.cont [13/16] 0.0, 128
        %2104 = vxpose.xlu0.b32.cont [14/16] 0.0, 128
        %2105 = vxpose.xlu0.b32.cont [15/16] 0.0, 128
        %2106 = vxpose.xlu0.b32.end [16/16] 0.0, 128
        %v2107 = vpop.trf.xlu0
        %v2108 = vpop.trf.xlu0
        %v2109 = vpop.trf.xlu0
        %v2110 = vpop.trf.xlu0
        %v2111 = vpop.trf.xlu0
        %v2112 = vpop.trf.xlu0
        %v2113 = vpop.trf.xlu0
        %v2114 = vpop.trf.xlu0
        %v2115 = vpop.trf.xlu0
        %v2116 = vpop.trf.xlu0
        %v2117 = vpop.trf.xlu0
        %v2118 = vpop.trf.xlu0
        %v2119 = vpop.trf.xlu0
        %v2120 = vpop.trf.xlu0
        %v2121 = vpop.trf.xlu0
        %v2122 = vpop.trf.xlu0
        %2123 = vxpose.xlu0.b32.start [1/16] %v573, 128
        %2124 = vxpose.xlu0.b32.cont [2/16] 0.0, 128
        %2125 = vxpose.xlu0.b32.cont [3/16] 0.0, 128
        %2126 = vxpose.xlu0.b32.cont [4/16] 0.0, 128
        %2127 = vxpose.xlu0.b32.cont [5/16] 0.0, 128
        %2128 = vxpose.xlu0.b32.cont [6/16] 0.0, 128
        %2129 = vxpose.xlu0.b32.cont [7/16] 0.0, 128
        %2130 = vxpose.xlu0.b32.cont [8/16] 0.0, 128
        %2131 = vxpose.xlu0.b32.cont [9/16] 0.0, 128
        %2132 = vxpose.xlu0.b32.cont [10/16] 0.0, 128
        %2133 = vxpose.xlu0.b32.cont [11/16] 0.0, 128
        %2134 = vxpose.xlu0.b32.cont [12/16] 0.0, 128
        %2135 = vxpose.xlu0.b32.cont [13/16] 0.0, 128
        %2136 = vxpose.xlu0.b32.cont [14/16] 0.0, 128
        %2137 = vxpose.xlu0.b32.cont [15/16] 0.0, 128
        %2138 = vxpose.xlu0.b32.end [16/16] 0.0, 128
        %v2139 = vpop.trf.xlu0
        %v2140 = vpop.trf.xlu0
        %v2141 = vpop.trf.xlu0
        %v2142 = vpop.trf.xlu0
        %v2143 = vpop.trf.xlu0
        %v2144 = vpop.trf.xlu0
        %v2145 = vpop.trf.xlu0
        %v2146 = vpop.trf.xlu0
        %v2147 = vpop.trf.xlu0
        %v2148 = vpop.trf.xlu0
        %v2149 = vpop.trf.xlu0
        %v2150 = vpop.trf.xlu0
        %v2151 = vpop.trf.xlu0
        %v2152 = vpop.trf.xlu0
        %v2153 = vpop.trf.xlu0
        %v2154 = vpop.trf.xlu0
        %2155 = vxpose.xlu0.b32.start [1/16] %v576, 128
        %2156 = vxpose.xlu0.b32.cont [2/16] 0.0, 128
        %2157 = vxpose.xlu0.b32.cont [3/16] 0.0, 128
        %2158 = vxpose.xlu0.b32.cont [4/16] 0.0, 128
        %2159 = vxpose.xlu0.b32.cont [5/16] 0.0, 128
        %2160 = vxpose.xlu0.b32.cont [6/16] 0.0, 128
        %2161 = vxpose.xlu0.b32.cont [7/16] 0.0, 128
        %2162 = vxpose.xlu0.b32.cont [8/16] 0.0, 128
        %2163 = vxpose.xlu0.b32.cont [9/16] 0.0, 128
        %2164 = vxpose.xlu0.b32.cont [10/16] 0.0, 128
        %2165 = vxpose.xlu0.b32.cont [11/16] 0.0, 128
        %2166 = vxpose.xlu0.b32.cont [12/16] 0.0, 128
        %2167 = vxpose.xlu0.b32.cont [13/16] 0.0, 128
        %2168 = vxpose.xlu0.b32.cont [14/16] 0.0, 128
        %2169 = vxpose.xlu0.b32.cont [15/16] 0.0, 128
        %2170 = vxpose.xlu0.b32.end [16/16] 0.0, 128
        %v2171 = vpop.trf.xlu0
        %v2172 = vpop.trf.xlu0
        %v2173 = vpop.trf.xlu0
        %v2174 = vpop.trf.xlu0
        %v2175 = vpop.trf.xlu0
        %v2176 = vpop.trf.xlu0
        %v2177 = vpop.trf.xlu0
        %v2178 = vpop.trf.xlu0
        %v2179 = vpop.trf.xlu0
        %v2180 = vpop.trf.xlu0
        %v2181 = vpop.trf.xlu0
        %v2182 = vpop.trf.xlu0
        %v2183 = vpop.trf.xlu0
        %v2184 = vpop.trf.xlu0
        %v2185 = vpop.trf.xlu0
        %v2186 = vpop.trf.xlu0
        %2187 = vxpose.xlu0.b32.start [1/16] %v579, 128
        %2188 = vxpose.xlu0.b32.cont [2/16] 0.0, 128
        %2189 = vxpose.xlu0.b32.cont [3/16] 0.0, 128
        %2190 = vxpose.xlu0.b32.cont [4/16] 0.0, 128
        %2191 = vxpose.xlu0.b32.cont [5/16] 0.0, 128
        %2192 = vxpose.xlu0.b32.cont [6/16] 0.0, 128
        %2193 = vxpose.xlu0.b32.cont [7/16] 0.0, 128
        %2194 = vxpose.xlu0.b32.cont [8/16] 0.0, 128
        %2195 = vxpose.xlu0.b32.cont [9/16] 0.0, 128
        %2196 = vxpose.xlu0.b32.cont [10/16] 0.0, 128
        %2197 = vxpose.xlu0.b32.cont [11/16] 0.0, 128
        %2198 = vxpose.xlu0.b32.cont [12/16] 0.0, 128
        %2199 = vxpose.xlu0.b32.cont [13/16] 0.0, 128
        %2200 = vxpose.xlu0.b32.cont [14/16] 0.0, 128
        %2201 = vxpose.xlu0.b32.cont [15/16] 0.0, 128
        %2202 = vxpose.xlu0.b32.end [16/16] 0.0, 128
        %v2203 = vpop.trf.xlu0
        %v2204 = vpop.trf.xlu0
        %v2205 = vpop.trf.xlu0
        %v2206 = vpop.trf.xlu0
        %v2207 = vpop.trf.xlu0
        %v2208 = vpop.trf.xlu0
        %v2209 = vpop.trf.xlu0
        %v2210 = vpop.trf.xlu0
        %v2211 = vpop.trf.xlu0
        %v2212 = vpop.trf.xlu0
        %v2213 = vpop.trf.xlu0
        %v2214 = vpop.trf.xlu0
        %v2215 = vpop.trf.xlu0
        %v2216 = vpop.trf.xlu0
        %v2217 = vpop.trf.xlu0
        %v2218 = vpop.trf.xlu0
        %2219 = vxpose.xlu0.b32.start [1/16] %v582, 128
        %2220 = vxpose.xlu0.b32.cont [2/16] 0.0, 128
        %2221 = vxpose.xlu0.b32.cont [3/16] 0.0, 128
        %2222 = vxpose.xlu0.b32.cont [4/16] 0.0, 128
        %2223 = vxpose.xlu0.b32.cont [5/16] 0.0, 128
        %2224 = vxpose.xlu0.b32.cont [6/16] 0.0, 128
        %2225 = vxpose.xlu0.b32.cont [7/16] 0.0, 128
        %2226 = vxpose.xlu0.b32.cont [8/16] 0.0, 128
        %2227 = vxpose.xlu0.b32.cont [9/16] 0.0, 128
        %2228 = vxpose.xlu0.b32.cont [10/16] 0.0, 128
        %2229 = vxpose.xlu0.b32.cont [11/16] 0.0, 128
        %2230 = vxpose.xlu0.b32.cont [12/16] 0.0, 128
        %2231 = vxpose.xlu0.b32.cont [13/16] 0.0, 128
        %2232 = vxpose.xlu0.b32.cont [14/16] 0.0, 128
        %2233 = vxpose.xlu0.b32.cont [15/16] 0.0, 128
        %2234 = vxpose.xlu0.b32.end [16/16] 0.0, 128
        %v2235 = vpop.trf.xlu0
        %v2236 = vpop.trf.xlu0
        %v2237 = vpop.trf.xlu0
        %v2238 = vpop.trf.xlu0
        %v2239 = vpop.trf.xlu0
        %v2240 = vpop.trf.xlu0
        %v2241 = vpop.trf.xlu0
        %v2242 = vpop.trf.xlu0
        %v2243 = vpop.trf.xlu0
        %v2244 = vpop.trf.xlu0
        %v2245 = vpop.trf.xlu0
        %v2246 = vpop.trf.xlu0
        %v2247 = vpop.trf.xlu0
        %v2248 = vpop.trf.xlu0
        %v2249 = vpop.trf.xlu0
        %v2250 = vpop.trf.xlu0
        %2251 = vxpose.xlu0.b32.start [1/16] %v585, 128
        %2252 = vxpose.xlu0.b32.cont [2/16] 0.0, 128
        %2253 = vxpose.xlu0.b32.cont [3/16] 0.0, 128
        %2254 = vxpose.xlu0.b32.cont [4/16] 0.0, 128
        %2255 = vxpose.xlu0.b32.cont [5/16] 0.0, 128
        %2256 = vxpose.xlu0.b32.cont [6/16] 0.0, 128
        %2257 = vxpose.xlu0.b32.cont [7/16] 0.0, 128
        %2258 = vxpose.xlu0.b32.cont [8/16] 0.0, 128
        %2259 = vxpose.xlu0.b32.cont [9/16] 0.0, 128
        %2260 = vxpose.xlu0.b32.cont [10/16] 0.0, 128
        %2261 = vxpose.xlu0.b32.cont [11/16] 0.0, 128
        %2262 = vxpose.xlu0.b32.cont [12/16] 0.0, 128
        %2263 = vxpose.xlu0.b32.cont [13/16] 0.0, 128
        %2264 = vxpose.xlu0.b32.cont [14/16] 0.0, 128
        %2265 = vxpose.xlu0.b32.cont [15/16] 0.0, 128
        %2266 = vxpose.xlu0.b32.end [16/16] 0.0, 128
        %v2267 = vpop.trf.xlu0
        %v2268 = vpop.trf.xlu0
        %v2269 = vpop.trf.xlu0
        %v2270 = vpop.trf.xlu0
        %v2271 = vpop.trf.xlu0
        %v2272 = vpop.trf.xlu0
        %v2273 = vpop.trf.xlu0
        %v2274 = vpop.trf.xlu0
        %v2275 = vpop.trf.xlu0
        %v2276 = vpop.trf.xlu0
        %v2277 = vpop.trf.xlu0
        %v2278 = vpop.trf.xlu0
        %v2279 = vpop.trf.xlu0
        %v2280 = vpop.trf.xlu0
        %v2281 = vpop.trf.xlu0
        %v2282 = vpop.trf.xlu0
        %2283 = vxpose.xlu0.b32.start [1/16] %v588, 128
        %2284 = vxpose.xlu0.b32.cont [2/16] 0.0, 128
        %2285 = vxpose.xlu0.b32.cont [3/16] 0.0, 128
        %2286 = vxpose.xlu0.b32.cont [4/16] 0.0, 128
        %2287 = vxpose.xlu0.b32.cont [5/16] 0.0, 128
        %2288 = vxpose.xlu0.b32.cont [6/16] 0.0, 128
        %2289 = vxpose.xlu0.b32.cont [7/16] 0.0, 128
        %2290 = vxpose.xlu0.b32.cont [8/16] 0.0, 128
        %2291 = vxpose.xlu0.b32.cont [9/16] 0.0, 128
        %2292 = vxpose.xlu0.b32.cont [10/16] 0.0, 128
        %2293 = vxpose.xlu0.b32.cont [11/16] 0.0, 128
        %2294 = vxpose.xlu0.b32.cont [12/16] 0.0, 128
        %2295 = vxpose.xlu0.b32.cont [13/16] 0.0, 128
        %2296 = vxpose.xlu0.b32.cont [14/16] 0.0, 128
        %2297 = vxpose.xlu0.b32.cont [15/16] 0.0, 128
        %2298 = vxpose.xlu0.b32.end [16/16] 0.0, 128
        %v2299 = vpop.trf.xlu0
        %v2300 = vpop.trf.xlu0
        %v2301 = vpop.trf.xlu0
        %v2302 = vpop.trf.xlu0
        %v2303 = vpop.trf.xlu0
        %v2304 = vpop.trf.xlu0
        %v2305 = vpop.trf.xlu0
        %v2306 = vpop.trf.xlu0
        %v2307 = vpop.trf.xlu0
        %v2308 = vpop.trf.xlu0
        %v2309 = vpop.trf.xlu0
        %v2310 = vpop.trf.xlu0
        %v2311 = vpop.trf.xlu0
        %v2312 = vpop.trf.xlu0
        %v2313 = vpop.trf.xlu0
        %v2314 = vpop.trf.xlu0
        %2315 = vxpose.xlu0.b32.start [1/16] %v591, 128
        %2316 = vxpose.xlu0.b32.cont [2/16] 0.0, 128
        %2317 = vxpose.xlu0.b32.cont [3/16] 0.0, 128
        %2318 = vxpose.xlu0.b32.cont [4/16] 0.0, 128
        %2319 = vxpose.xlu0.b32.cont [5/16] 0.0, 128
        %2320 = vxpose.xlu0.b32.cont [6/16] 0.0, 128
        %2321 = vxpose.xlu0.b32.cont [7/16] 0.0, 128
        %2322 = vxpose.xlu0.b32.cont [8/16] 0.0, 128
        %2323 = vxpose.xlu0.b32.cont [9/16] 0.0, 128
        %2324 = vxpose.xlu0.b32.cont [10/16] 0.0, 128
        %2325 = vxpose.xlu0.b32.cont [11/16] 0.0, 128
        %2326 = vxpose.xlu0.b32.cont [12/16] 0.0, 128
        %2327 = vxpose.xlu0.b32.cont [13/16] 0.0, 128
        %2328 = vxpose.xlu0.b32.cont [14/16] 0.0, 128
        %2329 = vxpose.xlu0.b32.cont [15/16] 0.0, 128
        %2330 = vxpose.xlu0.b32.end [16/16] 0.0, 128
        %v2331 = vpop.trf.xlu0
        %v2332 = vpop.trf.xlu0
        %v2333 = vpop.trf.xlu0
        %v2334 = vpop.trf.xlu0
        %v2335 = vpop.trf.xlu0
        %v2336 = vpop.trf.xlu0
        %v2337 = vpop.trf.xlu0
        %v2338 = vpop.trf.xlu0
        %v2339 = vpop.trf.xlu0
        %v2340 = vpop.trf.xlu0
        %v2341 = vpop.trf.xlu0
        %v2342 = vpop.trf.xlu0
        %v2343 = vpop.trf.xlu0
        %v2344 = vpop.trf.xlu0
        %v2345 = vpop.trf.xlu0
        %v2346 = vpop.trf.xlu0
        %v2347 = vrot.slane %v2171, 4
        %v2348 = vsel %vm667, %v2347, %v2107
        %v2349 = vrot.slane %v2107, 4
        %v2350 = vsel %vm667, %v2171, %v2349
        %v2352 = vunpack.c.l.s4 1983009808
        %v2353 = vunpack.c.0.s8 %v2352
        %v2354 = vperm.slane %v2348, %v2353
        %v2356 = vunpack.c.l.s4 1983009808
        %v2357 = vunpack.c.0.s8 %v2356
        %v2358 = vperm.slane %v2350, %v2357
        %v2359 = vrot.slane %v2203, 4
        %v2360 = vsel %vm667, %v2359, %v2139
        %v2361 = vrot.slane %v2139, 4
        %v2362 = vsel %vm667, %v2203, %v2361
        %v2364 = vunpack.c.l.s4 1983009808
        %v2365 = vunpack.c.0.s8 %v2364
        %v2366 = vperm.slane %v2360, %v2365
        %v2368 = vunpack.c.l.s4 1983009808
        %v2369 = vunpack.c.0.s8 %v2368
        %v2370 = vperm.slane %v2362, %v2369
        %v2371 = vrot.slane %v2299, 4
        %v2372 = vsel %vm667, %v2371, %v2235
        %v2373 = vrot.slane %v2235, 4
        %v2374 = vsel %vm667, %v2299, %v2373
        %v2376 = vunpack.c.l.s4 1983009808
        %v2377 = vunpack.c.0.s8 %v2376
        %v2378 = vperm.slane %v2372, %v2377
        %v2380 = vunpack.c.l.s4 1983009808
        %v2381 = vunpack.c.0.s8 %v2380
        %v2382 = vperm.slane %v2374, %v2381
        %v2383 = vrot.slane %v2331, 4
        %v2384 = vsel %vm667, %v2383, %v2267
        %v2385 = vrot.slane %v2267, 4
        %v2386 = vsel %vm667, %v2331, %v2385
        %v2388 = vunpack.c.l.s4 1983009808
        %v2389 = vunpack.c.0.s8 %v2388
        %v2390 = vperm.slane %v2384, %v2389
        %v2392 = vunpack.c.l.s4 1983009808
        %v2393 = vunpack.c.0.s8 %v2392
        %v2394 = vperm.slane %v2386, %v2393
        %v2395 = vrot.slane %v2366, 4
        %v2396 = vsel %vm667, %v2395, %v2354
        %v2397 = vrot.slane %v2354, 4
        %v2398 = vsel %vm667, %v2366, %v2397
        %v2400 = vunpack.c.l.s4 1934713408
        %v2401 = vunpack.c.0.s8 %v2400
        %v2402 = vperm.slane %v2396, %v2401
        %v2404 = vunpack.c.l.s4 1934713408
        %v2405 = vunpack.c.0.s8 %v2404
        %v2406 = vperm.slane %v2398, %v2405
        %v2407 = vrot.slane %v2370, 4
        %v2408 = vsel %vm667, %v2407, %v2358
        %v2409 = vrot.slane %v2358, 4
        %v2410 = vsel %vm667, %v2370, %v2409
        %v2412 = vunpack.c.l.s4 1934713408
        %v2413 = vunpack.c.0.s8 %v2412
        %v2414 = vperm.slane %v2408, %v2413
        %v2416 = vunpack.c.l.s4 1934713408
        %v2417 = vunpack.c.0.s8 %v2416
        %v2418 = vperm.slane %v2410, %v2417
        %v2419 = vrot.slane %v2390, 4
        %v2420 = vsel %vm667, %v2419, %v2378
        %v2421 = vrot.slane %v2378, 4
        %v2422 = vsel %vm667, %v2390, %v2421
        %v2424 = vunpack.c.l.s4 1934713408
        %v2425 = vunpack.c.0.s8 %v2424
        %v2426 = vperm.slane %v2420, %v2425
        %v2428 = vunpack.c.l.s4 1934713408
        %v2429 = vunpack.c.0.s8 %v2428
        %v2430 = vperm.slane %v2422, %v2429
        %v2431 = vrot.slane %v2394, 4
        %v2432 = vsel %vm667, %v2431, %v2382
        %v2433 = vrot.slane %v2382, 4
        %v2434 = vsel %vm667, %v2394, %v2433
        %v2436 = vunpack.c.l.s4 1934713408
        %v2437 = vunpack.c.0.s8 %v2436
        %v2438 = vperm.slane %v2432, %v2437
        %v2440 = vunpack.c.l.s4 1934713408
        %v2441 = vunpack.c.0.s8 %v2440
        %v2442 = vperm.slane %v2434, %v2441
        %v2443 = vrot.slane %v2426, 4
        %v2444 = vsel %vm667, %v2443, %v2402
        %v2445 = vrot.slane %v2402, 4
        %v2446 = vsel %vm667, %v2426, %v2445
        %v2447 = vrot.slane %v2430, 4
        %v2448 = vsel %vm667, %v2447, %v2406
        %v2449 = vrot.slane %v2406, 4
        %v2450 = vsel %vm667, %v2430, %v2449
        %v2451 = vrot.slane %v2438, 4
        %v2452 = vsel %vm667, %v2451, %v2414
        %v2453 = vrot.slane %v2414, 4
        %v2454 = vsel %vm667, %v2438, %v2453
        %v2455 = vrot.slane %v2442, 4
        %v2456 = vsel %vm667, %v2455, %v2418
        %v2457 = vrot.slane %v2418, 4
        %v2458 = vsel %vm667, %v2442, %v2457
        %v2459 = vrot.slane %v2172, 4
        %v2460 = vsel %vm667, %v2459, %v2108
        %v2461 = vrot.slane %v2108, 4
        %v2462 = vsel %vm667, %v2172, %v2461
        %v2464 = vunpack.c.l.s4 1983009808
        %v2465 = vunpack.c.0.s8 %v2464
        %v2466 = vperm.slane %v2460, %v2465
        %v2468 = vunpack.c.l.s4 1983009808
        %v2469 = vunpack.c.0.s8 %v2468
        %v2470 = vperm.slane %v2462, %v2469
        %v2471 = vrot.slane %v2204, 4
        %v2472 = vsel %vm667, %v2471, %v2140
        %v2473 = vrot.slane %v2140, 4
        %v2474 = vsel %vm667, %v2204, %v2473
        %v2476 = vunpack.c.l.s4 1983009808
        %v2477 = vunpack.c.0.s8 %v2476
        %v2478 = vperm.slane %v2472, %v2477
        %v2480 = vunpack.c.l.s4 1983009808
        %v2481 = vunpack.c.0.s8 %v2480
        %v2482 = vperm.slane %v2474, %v2481
        %v2483 = vrot.slane %v2300, 4
        %v2484 = vsel %vm667, %v2483, %v2236
        %v2485 = vrot.slane %v2236, 4
        %v2486 = vsel %vm667, %v2300, %v2485
        %v2488 = vunpack.c.l.s4 1983009808
        %v2489 = vunpack.c.0.s8 %v2488
        %v2490 = vperm.slane %v2484, %v2489
        %v2492 = vunpack.c.l.s4 1983009808
        %v2493 = vunpack.c.0.s8 %v2492
        %v2494 = vperm.slane %v2486, %v2493
        %v2495 = vrot.slane %v2332, 4
        %v2496 = vsel %vm667, %v2495, %v2268
        %v2497 = vrot.slane %v2268, 4
        %v2498 = vsel %vm667, %v2332, %v2497
        %v2500 = vunpack.c.l.s4 1983009808
        %v2501 = vunpack.c.0.s8 %v2500
        %v2502 = vperm.slane %v2496, %v2501
        %v2504 = vunpack.c.l.s4 1983009808
        %v2505 = vunpack.c.0.s8 %v2504
        %v2506 = vperm.slane %v2498, %v2505
        %v2507 = vrot.slane %v2478, 4
        %v2508 = vsel %vm667, %v2507, %v2466
        %v2509 = vrot.slane %v2466, 4
        %v2510 = vsel %vm667, %v2478, %v2509
        %v2512 = vunpack.c.l.s4 1934713408
        %v2513 = vunpack.c.0.s8 %v2512
        %v2514 = vperm.slane %v2508, %v2513
        %v2516 = vunpack.c.l.s4 1934713408
        %v2517 = vunpack.c.0.s8 %v2516
        %v2518 = vperm.slane %v2510, %v2517
        %v2519 = vrot.slane %v2482, 4
        %v2520 = vsel %vm667, %v2519, %v2470
        %v2521 = vrot.slane %v2470, 4
        %v2522 = vsel %vm667, %v2482, %v2521
        %v2524 = vunpack.c.l.s4 1934713408
        %v2525 = vunpack.c.0.s8 %v2524
        %v2526 = vperm.slane %v2520, %v2525
        %v2528 = vunpack.c.l.s4 1934713408
        %v2529 = vunpack.c.0.s8 %v2528
        %v2530 = vperm.slane %v2522, %v2529
        %v2531 = vrot.slane %v2502, 4
        %v2532 = vsel %vm667, %v2531, %v2490
        %v2533 = vrot.slane %v2490, 4
        %v2534 = vsel %vm667, %v2502, %v2533
        %v2536 = vunpack.c.l.s4 1934713408
        %v2537 = vunpack.c.0.s8 %v2536
        %v2538 = vperm.slane %v2532, %v2537
        %v2540 = vunpack.c.l.s4 1934713408
        %v2541 = vunpack.c.0.s8 %v2540
        %v2542 = vperm.slane %v2534, %v2541
        %v2543 = vrot.slane %v2506, 4
        %v2544 = vsel %vm667, %v2543, %v2494
        %v2545 = vrot.slane %v2494, 4
        %v2546 = vsel %vm667, %v2506, %v2545
        %v2548 = vunpack.c.l.s4 1934713408
        %v2549 = vunpack.c.0.s8 %v2548
        %v2550 = vperm.slane %v2544, %v2549
        %v2552 = vunpack.c.l.s4 1934713408
        %v2553 = vunpack.c.0.s8 %v2552
        %v2554 = vperm.slane %v2546, %v2553
        %v2555 = vrot.slane %v2538, 4
        %v2556 = vsel %vm667, %v2555, %v2514
        %v2557 = vrot.slane %v2514, 4
        %v2558 = vsel %vm667, %v2538, %v2557
        %v2559 = vrot.slane %v2542, 4
        %v2560 = vsel %vm667, %v2559, %v2518
        %v2561 = vrot.slane %v2518, 4
        %v2562 = vsel %vm667, %v2542, %v2561
        %v2563 = vrot.slane %v2550, 4
        %v2564 = vsel %vm667, %v2563, %v2526
        %v2565 = vrot.slane %v2526, 4
        %v2566 = vsel %vm667, %v2550, %v2565
        %v2567 = vrot.slane %v2554, 4
        %v2568 = vsel %vm667, %v2567, %v2530
        %v2569 = vrot.slane %v2530, 4
        %v2570 = vsel %vm667, %v2554, %v2569
        %v2571 = vrot.slane %v2173, 4
        %v2572 = vsel %vm667, %v2571, %v2109
        %v2573 = vrot.slane %v2109, 4
        %v2574 = vsel %vm667, %v2173, %v2573
        %v2576 = vunpack.c.l.s4 1983009808
        %v2577 = vunpack.c.0.s8 %v2576
        %v2578 = vperm.slane %v2572, %v2577
        %v2580 = vunpack.c.l.s4 1983009808
        %v2581 = vunpack.c.0.s8 %v2580
        %v2582 = vperm.slane %v2574, %v2581
        %v2583 = vrot.slane %v2205, 4
        %v2584 = vsel %vm667, %v2583, %v2141
        %v2585 = vrot.slane %v2141, 4
        %v2586 = vsel %vm667, %v2205, %v2585
        %v2588 = vunpack.c.l.s4 1983009808
        %v2589 = vunpack.c.0.s8 %v2588
        %v2590 = vperm.slane %v2584, %v2589
        %v2592 = vunpack.c.l.s4 1983009808
        %v2593 = vunpack.c.0.s8 %v2592
        %v2594 = vperm.slane %v2586, %v2593
        %v2595 = vrot.slane %v2301, 4
        %v2596 = vsel %vm667, %v2595, %v2237
        %v2597 = vrot.slane %v2237, 4
        %v2598 = vsel %vm667, %v2301, %v2597
        %v2600 = vunpack.c.l.s4 1983009808
        %v2601 = vunpack.c.0.s8 %v2600
        %v2602 = vperm.slane %v2596, %v2601
        %v2604 = vunpack.c.l.s4 1983009808
        %v2605 = vunpack.c.0.s8 %v2604
        %v2606 = vperm.slane %v2598, %v2605
        %v2607 = vrot.slane %v2333, 4
        %v2608 = vsel %vm667, %v2607, %v2269
        %v2609 = vrot.slane %v2269, 4
        %v2610 = vsel %vm667, %v2333, %v2609
        %v2612 = vunpack.c.l.s4 1983009808
        %v2613 = vunpack.c.0.s8 %v2612
        %v2614 = vperm.slane %v2608, %v2613
        %v2616 = vunpack.c.l.s4 1983009808
        %v2617 = vunpack.c.0.s8 %v2616
        %v2618 = vperm.slane %v2610, %v2617
        %v2619 = vrot.slane %v2590, 4
        %v2620 = vsel %vm667, %v2619, %v2578
        %v2621 = vrot.slane %v2578, 4
        %v2622 = vsel %vm667, %v2590, %v2621
        %v2624 = vunpack.c.l.s4 1934713408
        %v2625 = vunpack.c.0.s8 %v2624
        %v2626 = vperm.slane %v2620, %v2625
        %v2628 = vunpack.c.l.s4 1934713408
        %v2629 = vunpack.c.0.s8 %v2628
        %v2630 = vperm.slane %v2622, %v2629
        %v2631 = vrot.slane %v2594, 4
        %v2632 = vsel %vm667, %v2631, %v2582
        %v2633 = vrot.slane %v2582, 4
        %v2634 = vsel %vm667, %v2594, %v2633
        %v2636 = vunpack.c.l.s4 1934713408
        %v2637 = vunpack.c.0.s8 %v2636
        %v2638 = vperm.slane %v2632, %v2637
        %v2640 = vunpack.c.l.s4 1934713408
        %v2641 = vunpack.c.0.s8 %v2640
        %v2642 = vperm.slane %v2634, %v2641
        %v2643 = vrot.slane %v2614, 4
        %v2644 = vsel %vm667, %v2643, %v2602
        %v2645 = vrot.slane %v2602, 4
        %v2646 = vsel %vm667, %v2614, %v2645
        %v2648 = vunpack.c.l.s4 1934713408
        %v2649 = vunpack.c.0.s8 %v2648
        %v2650 = vperm.slane %v2644, %v2649
        %v2652 = vunpack.c.l.s4 1934713408
        %v2653 = vunpack.c.0.s8 %v2652
        %v2654 = vperm.slane %v2646, %v2653
        %v2655 = vrot.slane %v2618, 4
        %v2656 = vsel %vm667, %v2655, %v2606
        %v2657 = vrot.slane %v2606, 4
        %v2658 = vsel %vm667, %v2618, %v2657
        %v2660 = vunpack.c.l.s4 1934713408
        %v2661 = vunpack.c.0.s8 %v2660
        %v2662 = vperm.slane %v2656, %v2661
        %v2664 = vunpack.c.l.s4 1934713408
        %v2665 = vunpack.c.0.s8 %v2664
        %v2666 = vperm.slane %v2658, %v2665
        %v2667 = vrot.slane %v2650, 4
        %v2668 = vsel %vm667, %v2667, %v2626
        %v2669 = vrot.slane %v2626, 4
        %v2670 = vsel %vm667, %v2650, %v2669
        %v2671 = vrot.slane %v2654, 4
        %v2672 = vsel %vm667, %v2671, %v2630
        %v2673 = vrot.slane %v2630, 4
        %v2674 = vsel %vm667, %v2654, %v2673
        %v2675 = vrot.slane %v2662, 4
        %v2676 = vsel %vm667, %v2675, %v2638
        %v2677 = vrot.slane %v2638, 4
        %v2678 = vsel %vm667, %v2662, %v2677
        %v2679 = vrot.slane %v2666, 4
        %v2680 = vsel %vm667, %v2679, %v2642
        %v2681 = vrot.slane %v2642, 4
        %v2682 = vsel %vm667, %v2666, %v2681
        %v2683 = vrot.slane %v2174, 4
        %v2684 = vsel %vm667, %v2683, %v2110
        %v2685 = vrot.slane %v2110, 4
        %v2686 = vsel %vm667, %v2174, %v2685
        %v2688 = vunpack.c.l.s4 1983009808
        %v2689 = vunpack.c.0.s8 %v2688
        %v2690 = vperm.slane %v2684, %v2689
        %v2692 = vunpack.c.l.s4 1983009808
        %v2693 = vunpack.c.0.s8 %v2692
        %v2694 = vperm.slane %v2686, %v2693
        %v2695 = vrot.slane %v2206, 4
        %v2696 = vsel %vm667, %v2695, %v2142
        %v2697 = vrot.slane %v2142, 4
        %v2698 = vsel %vm667, %v2206, %v2697
        %v2700 = vunpack.c.l.s4 1983009808
        %v2701 = vunpack.c.0.s8 %v2700
        %v2702 = vperm.slane %v2696, %v2701
        %v2704 = vunpack.c.l.s4 1983009808
        %v2705 = vunpack.c.0.s8 %v2704
        %v2706 = vperm.slane %v2698, %v2705
        %v2707 = vrot.slane %v2302, 4
        %v2708 = vsel %vm667, %v2707, %v2238
        %v2709 = vrot.slane %v2238, 4
        %v2710 = vsel %vm667, %v2302, %v2709
        %v2712 = vunpack.c.l.s4 1983009808
        %v2713 = vunpack.c.0.s8 %v2712
        %v2714 = vperm.slane %v2708, %v2713
        %v2716 = vunpack.c.l.s4 1983009808
        %v2717 = vunpack.c.0.s8 %v2716
        %v2718 = vperm.slane %v2710, %v2717
        %v2719 = vrot.slane %v2334, 4
        %v2720 = vsel %vm667, %v2719, %v2270
        %v2721 = vrot.slane %v2270, 4
        %v2722 = vsel %vm667, %v2334, %v2721
        %v2724 = vunpack.c.l.s4 1983009808
        %v2725 = vunpack.c.0.s8 %v2724
        %v2726 = vperm.slane %v2720, %v2725
        %v2728 = vunpack.c.l.s4 1983009808
        %v2729 = vunpack.c.0.s8 %v2728
        %v2730 = vperm.slane %v2722, %v2729
        %v2731 = vrot.slane %v2702, 4
        %v2732 = vsel %vm667, %v2731, %v2690
        %v2733 = vrot.slane %v2690, 4
        %v2734 = vsel %vm667, %v2702, %v2733
        %v2736 = vunpack.c.l.s4 1934713408
        %v2737 = vunpack.c.0.s8 %v2736
        %v2738 = vperm.slane %v2732, %v2737
        %v2740 = vunpack.c.l.s4 1934713408
        %v2741 = vunpack.c.0.s8 %v2740
        %v2742 = vperm.slane %v2734, %v2741
        %v2743 = vrot.slane %v2706, 4
        %v2744 = vsel %vm667, %v2743, %v2694
        %v2745 = vrot.slane %v2694, 4
        %v2746 = vsel %vm667, %v2706, %v2745
        %v2748 = vunpack.c.l.s4 1934713408
        %v2749 = vunpack.c.0.s8 %v2748
        %v2750 = vperm.slane %v2744, %v2749
        %v2752 = vunpack.c.l.s4 1934713408
        %v2753 = vunpack.c.0.s8 %v2752
        %v2754 = vperm.slane %v2746, %v2753
        %v2755 = vrot.slane %v2726, 4
        %v2756 = vsel %vm667, %v2755, %v2714
        %v2757 = vrot.slane %v2714, 4
        %v2758 = vsel %vm667, %v2726, %v2757
        %v2760 = vunpack.c.l.s4 1934713408
        %v2761 = vunpack.c.0.s8 %v2760
        %v2762 = vperm.slane %v2756, %v2761
        %v2764 = vunpack.c.l.s4 1934713408
        %v2765 = vunpack.c.0.s8 %v2764
        %v2766 = vperm.slane %v2758, %v2765
        %v2767 = vrot.slane %v2730, 4
        %v2768 = vsel %vm667, %v2767, %v2718
        %v2769 = vrot.slane %v2718, 4
        %v2770 = vsel %vm667, %v2730, %v2769
        %v2772 = vunpack.c.l.s4 1934713408
        %v2773 = vunpack.c.0.s8 %v2772
        %v2774 = vperm.slane %v2768, %v2773
        %v2776 = vunpack.c.l.s4 1934713408
        %v2777 = vunpack.c.0.s8 %v2776
        %v2778 = vperm.slane %v2770, %v2777
        %v2779 = vrot.slane %v2762, 4
        %v2780 = vsel %vm667, %v2779, %v2738
        %v2781 = vrot.slane %v2738, 4
        %v2782 = vsel %vm667, %v2762, %v2781
        %v2783 = vrot.slane %v2766, 4
        %v2784 = vsel %vm667, %v2783, %v2742
        %v2785 = vrot.slane %v2742, 4
        %v2786 = vsel %vm667, %v2766, %v2785
        %v2787 = vrot.slane %v2774, 4
        %v2788 = vsel %vm667, %v2787, %v2750
        %v2789 = vrot.slane %v2750, 4
        %v2790 = vsel %vm667, %v2774, %v2789
        %v2791 = vrot.slane %v2778, 4
        %v2792 = vsel %vm667, %v2791, %v2754
        %v2793 = vrot.slane %v2754, 4
        %v2794 = vsel %vm667, %v2778, %v2793
        %v2795 = vrot.slane %v2175, 4
        %v2796 = vsel %vm667, %v2795, %v2111
        %v2797 = vrot.slane %v2111, 4
        %v2798 = vsel %vm667, %v2175, %v2797
        %v2800 = vunpack.c.l.s4 1983009808
        %v2801 = vunpack.c.0.s8 %v2800
        %v2802 = vperm.slane %v2796, %v2801
        %v2804 = vunpack.c.l.s4 1983009808
        %v2805 = vunpack.c.0.s8 %v2804
        %v2806 = vperm.slane %v2798, %v2805
        %v2807 = vrot.slane %v2207, 4
        %v2808 = vsel %vm667, %v2807, %v2143
        %v2809 = vrot.slane %v2143, 4
        %v2810 = vsel %vm667, %v2207, %v2809
        %v2812 = vunpack.c.l.s4 1983009808
        %v2813 = vunpack.c.0.s8 %v2812
        %v2814 = vperm.slane %v2808, %v2813
        %v2816 = vunpack.c.l.s4 1983009808
        %v2817 = vunpack.c.0.s8 %v2816
        %v2818 = vperm.slane %v2810, %v2817
        %v2819 = vrot.slane %v2303, 4
        %v2820 = vsel %vm667, %v2819, %v2239
        %v2821 = vrot.slane %v2239, 4
        %v2822 = vsel %vm667, %v2303, %v2821
        %v2824 = vunpack.c.l.s4 1983009808
        %v2825 = vunpack.c.0.s8 %v2824
        %v2826 = vperm.slane %v2820, %v2825
        %v2828 = vunpack.c.l.s4 1983009808
        %v2829 = vunpack.c.0.s8 %v2828
        %v2830 = vperm.slane %v2822, %v2829
        %v2831 = vrot.slane %v2335, 4
        %v2832 = vsel %vm667, %v2831, %v2271
        %v2833 = vrot.slane %v2271, 4
        %v2834 = vsel %vm667, %v2335, %v2833
        %v2836 = vunpack.c.l.s4 1983009808
        %v2837 = vunpack.c.0.s8 %v2836
        %v2838 = vperm.slane %v2832, %v2837
        %v2840 = vunpack.c.l.s4 1983009808
        %v2841 = vunpack.c.0.s8 %v2840
        %v2842 = vperm.slane %v2834, %v2841
        %v2843 = vrot.slane %v2814, 4
        %v2844 = vsel %vm667, %v2843, %v2802
        %v2845 = vrot.slane %v2802, 4
        %v2846 = vsel %vm667, %v2814, %v2845
        %v2848 = vunpack.c.l.s4 1934713408
        %v2849 = vunpack.c.0.s8 %v2848
        %v2850 = vperm.slane %v2844, %v2849
        %v2852 = vunpack.c.l.s4 1934713408
        %v2853 = vunpack.c.0.s8 %v2852
        %v2854 = vperm.slane %v2846, %v2853
        %v2855 = vrot.slane %v2818, 4
        %v2856 = vsel %vm667, %v2855, %v2806
        %v2857 = vrot.slane %v2806, 4
        %v2858 = vsel %vm667, %v2818, %v2857
        %v2860 = vunpack.c.l.s4 1934713408
        %v2861 = vunpack.c.0.s8 %v2860
        %v2862 = vperm.slane %v2856, %v2861
        %v2864 = vunpack.c.l.s4 1934713408
        %v2865 = vunpack.c.0.s8 %v2864
        %v2866 = vperm.slane %v2858, %v2865
        %v2867 = vrot.slane %v2838, 4
        %v2868 = vsel %vm667, %v2867, %v2826
        %v2869 = vrot.slane %v2826, 4
        %v2870 = vsel %vm667, %v2838, %v2869
        %v2872 = vunpack.c.l.s4 1934713408
        %v2873 = vunpack.c.0.s8 %v2872
        %v2874 = vperm.slane %v2868, %v2873
        %v2876 = vunpack.c.l.s4 1934713408
        %v2877 = vunpack.c.0.s8 %v2876
        %v2878 = vperm.slane %v2870, %v2877
        %v2879 = vrot.slane %v2842, 4
        %v2880 = vsel %vm667, %v2879, %v2830
        %v2881 = vrot.slane %v2830, 4
        %v2882 = vsel %vm667, %v2842, %v2881
        %v2884 = vunpack.c.l.s4 1934713408
        %v2885 = vunpack.c.0.s8 %v2884
        %v2886 = vperm.slane %v2880, %v2885
        %v2888 = vunpack.c.l.s4 1934713408
        %v2889 = vunpack.c.0.s8 %v2888
        %v2890 = vperm.slane %v2882, %v2889
        %v2891 = vrot.slane %v2874, 4
        %v2892 = vsel %vm667, %v2891, %v2850
        %v2893 = vrot.slane %v2850, 4
        %v2894 = vsel %vm667, %v2874, %v2893
        %v2895 = vrot.slane %v2878, 4
        %v2896 = vsel %vm667, %v2895, %v2854
        %v2897 = vrot.slane %v2854, 4
        %v2898 = vsel %vm667, %v2878, %v2897
        %v2899 = vrot.slane %v2886, 4
        %v2900 = vsel %vm667, %v2899, %v2862
        %v2901 = vrot.slane %v2862, 4
        %v2902 = vsel %vm667, %v2886, %v2901
        %v2903 = vrot.slane %v2890, 4
        %v2904 = vsel %vm667, %v2903, %v2866
        %v2905 = vrot.slane %v2866, 4
        %v2906 = vsel %vm667, %v2890, %v2905
        %v2907 = vrot.slane %v2176, 4
        %v2908 = vsel %vm667, %v2907, %v2112
        %v2909 = vrot.slane %v2112, 4
        %v2910 = vsel %vm667, %v2176, %v2909
        %v2912 = vunpack.c.l.s4 1983009808
        %v2913 = vunpack.c.0.s8 %v2912
        %v2914 = vperm.slane %v2908, %v2913
        %v2916 = vunpack.c.l.s4 1983009808
        %v2917 = vunpack.c.0.s8 %v2916
        %v2918 = vperm.slane %v2910, %v2917
        %v2919 = vrot.slane %v2208, 4
        %v2920 = vsel %vm667, %v2919, %v2144
        %v2921 = vrot.slane %v2144, 4
        %v2922 = vsel %vm667, %v2208, %v2921
        %v2924 = vunpack.c.l.s4 1983009808
        %v2925 = vunpack.c.0.s8 %v2924
        %v2926 = vperm.slane %v2920, %v2925
        %v2928 = vunpack.c.l.s4 1983009808
        %v2929 = vunpack.c.0.s8 %v2928
        %v2930 = vperm.slane %v2922, %v2929
        %v2931 = vrot.slane %v2304, 4
        %v2932 = vsel %vm667, %v2931, %v2240
        %v2933 = vrot.slane %v2240, 4
        %v2934 = vsel %vm667, %v2304, %v2933
        %v2936 = vunpack.c.l.s4 1983009808
        %v2937 = vunpack.c.0.s8 %v2936
        %v2938 = vperm.slane %v2932, %v2937
        %v2940 = vunpack.c.l.s4 1983009808
        %v2941 = vunpack.c.0.s8 %v2940
        %v2942 = vperm.slane %v2934, %v2941
        %v2943 = vrot.slane %v2336, 4
        %v2944 = vsel %vm667, %v2943, %v2272
        %v2945 = vrot.slane %v2272, 4
        %v2946 = vsel %vm667, %v2336, %v2945
        %v2948 = vunpack.c.l.s4 1983009808
        %v2949 = vunpack.c.0.s8 %v2948
        %v2950 = vperm.slane %v2944, %v2949
        %v2952 = vunpack.c.l.s4 1983009808
        %v2953 = vunpack.c.0.s8 %v2952
        %v2954 = vperm.slane %v2946, %v2953
        %v2955 = vrot.slane %v2926, 4
        %v2956 = vsel %vm667, %v2955, %v2914
        %v2957 = vrot.slane %v2914, 4
        %v2958 = vsel %vm667, %v2926, %v2957
        %v2960 = vunpack.c.l.s4 1934713408
        %v2961 = vunpack.c.0.s8 %v2960
        %v2962 = vperm.slane %v2956, %v2961
        %v2964 = vunpack.c.l.s4 1934713408
        %v2965 = vunpack.c.0.s8 %v2964
        %v2966 = vperm.slane %v2958, %v2965
        %v2967 = vrot.slane %v2930, 4
        %v2968 = vsel %vm667, %v2967, %v2918
        %v2969 = vrot.slane %v2918, 4
        %v2970 = vsel %vm667, %v2930, %v2969
        %v2972 = vunpack.c.l.s4 1934713408
        %v2973 = vunpack.c.0.s8 %v2972
        %v2974 = vperm.slane %v2968, %v2973
        %v2976 = vunpack.c.l.s4 1934713408
        %v2977 = vunpack.c.0.s8 %v2976
        %v2978 = vperm.slane %v2970, %v2977
        %v2979 = vrot.slane %v2950, 4
        %v2980 = vsel %vm667, %v2979, %v2938
        %v2981 = vrot.slane %v2938, 4
        %v2982 = vsel %vm667, %v2950, %v2981
        %v2984 = vunpack.c.l.s4 1934713408
        %v2985 = vunpack.c.0.s8 %v2984
        %v2986 = vperm.slane %v2980, %v2985
        %v2988 = vunpack.c.l.s4 1934713408
        %v2989 = vunpack.c.0.s8 %v2988
        %v2990 = vperm.slane %v2982, %v2989
        %v2991 = vrot.slane %v2954, 4
        %v2992 = vsel %vm667, %v2991, %v2942
        %v2993 = vrot.slane %v2942, 4
        %v2994 = vsel %vm667, %v2954, %v2993
        %v2996 = vunpack.c.l.s4 1934713408
        %v2997 = vunpack.c.0.s8 %v2996
        %v2998 = vperm.slane %v2992, %v2997
        %v3000 = vunpack.c.l.s4 1934713408
        %v3001 = vunpack.c.0.s8 %v3000
        %v3002 = vperm.slane %v2994, %v3001
        %v3003 = vrot.slane %v2986, 4
        %v3004 = vsel %vm667, %v3003, %v2962
        %v3005 = vrot.slane %v2962, 4
        %v3006 = vsel %vm667, %v2986, %v3005
        %v3007 = vrot.slane %v2990, 4
        %v3008 = vsel %vm667, %v3007, %v2966
        %v3009 = vrot.slane %v2966, 4
        %v3010 = vsel %vm667, %v2990, %v3009
        %v3011 = vrot.slane %v2998, 4
        %v3012 = vsel %vm667, %v3011, %v2974
        %v3013 = vrot.slane %v2974, 4
        %v3014 = vsel %vm667, %v2998, %v3013
        %v3015 = vrot.slane %v3002, 4
        %v3016 = vsel %vm667, %v3015, %v2978
        %v3017 = vrot.slane %v2978, 4
        %v3018 = vsel %vm667, %v3002, %v3017
        %v3019 = vrot.slane %v2177, 4
        %v3020 = vsel %vm667, %v3019, %v2113
        %v3021 = vrot.slane %v2113, 4
        %v3022 = vsel %vm667, %v2177, %v3021
        %v3024 = vunpack.c.l.s4 1983009808
        %v3025 = vunpack.c.0.s8 %v3024
        %v3026 = vperm.slane %v3020, %v3025
        %v3028 = vunpack.c.l.s4 1983009808
        %v3029 = vunpack.c.0.s8 %v3028
        %v3030 = vperm.slane %v3022, %v3029
        %v3031 = vrot.slane %v2209, 4
        %v3032 = vsel %vm667, %v3031, %v2145
        %v3033 = vrot.slane %v2145, 4
        %v3034 = vsel %vm667, %v2209, %v3033
        %v3036 = vunpack.c.l.s4 1983009808
        %v3037 = vunpack.c.0.s8 %v3036
        %v3038 = vperm.slane %v3032, %v3037
        %v3040 = vunpack.c.l.s4 1983009808
        %v3041 = vunpack.c.0.s8 %v3040
        %v3042 = vperm.slane %v3034, %v3041
        %v3043 = vrot.slane %v2305, 4
        %v3044 = vsel %vm667, %v3043, %v2241
        %v3045 = vrot.slane %v2241, 4
        %v3046 = vsel %vm667, %v2305, %v3045
        %v3048 = vunpack.c.l.s4 1983009808
        %v3049 = vunpack.c.0.s8 %v3048
        %v3050 = vperm.slane %v3044, %v3049
        %v3052 = vunpack.c.l.s4 1983009808
        %v3053 = vunpack.c.0.s8 %v3052
        %v3054 = vperm.slane %v3046, %v3053
        %v3055 = vrot.slane %v2337, 4
        %v3056 = vsel %vm667, %v3055, %v2273
        %v3057 = vrot.slane %v2273, 4
        %v3058 = vsel %vm667, %v2337, %v3057
        %v3060 = vunpack.c.l.s4 1983009808
        %v3061 = vunpack.c.0.s8 %v3060
        %v3062 = vperm.slane %v3056, %v3061
        %v3064 = vunpack.c.l.s4 1983009808
        %v3065 = vunpack.c.0.s8 %v3064
        %v3066 = vperm.slane %v3058, %v3065
        %v3067 = vrot.slane %v3038, 4
        %v3068 = vsel %vm667, %v3067, %v3026
        %v3069 = vrot.slane %v3026, 4
        %v3070 = vsel %vm667, %v3038, %v3069
        %v3072 = vunpack.c.l.s4 1934713408
        %v3073 = vunpack.c.0.s8 %v3072
        %v3074 = vperm.slane %v3068, %v3073
        %v3076 = vunpack.c.l.s4 1934713408
        %v3077 = vunpack.c.0.s8 %v3076
        %v3078 = vperm.slane %v3070, %v3077
        %v3079 = vrot.slane %v3042, 4
        %v3080 = vsel %vm667, %v3079, %v3030
        %v3081 = vrot.slane %v3030, 4
        %v3082 = vsel %vm667, %v3042, %v3081
        %v3084 = vunpack.c.l.s4 1934713408
        %v3085 = vunpack.c.0.s8 %v3084
        %v3086 = vperm.slane %v3080, %v3085
        %v3088 = vunpack.c.l.s4 1934713408
        %v3089 = vunpack.c.0.s8 %v3088
        %v3090 = vperm.slane %v3082, %v3089
        %v3091 = vrot.slane %v3062, 4
        %v3092 = vsel %vm667, %v3091, %v3050
        %v3093 = vrot.slane %v3050, 4
        %v3094 = vsel %vm667, %v3062, %v3093
        %v3096 = vunpack.c.l.s4 1934713408
        %v3097 = vunpack.c.0.s8 %v3096
        %v3098 = vperm.slane %v3092, %v3097
        %v3100 = vunpack.c.l.s4 1934713408
        %v3101 = vunpack.c.0.s8 %v3100
        %v3102 = vperm.slane %v3094, %v3101
        %v3103 = vrot.slane %v3066, 4
        %v3104 = vsel %vm667, %v3103, %v3054
        %v3105 = vrot.slane %v3054, 4
        %v3106 = vsel %vm667, %v3066, %v3105
        %v3108 = vunpack.c.l.s4 1934713408
        %v3109 = vunpack.c.0.s8 %v3108
        %v3110 = vperm.slane %v3104, %v3109
        %v3112 = vunpack.c.l.s4 1934713408
        %v3113 = vunpack.c.0.s8 %v3112
        %v3114 = vperm.slane %v3106, %v3113
        %v3115 = vrot.slane %v3098, 4
        %v3116 = vsel %vm667, %v3115, %v3074
        %v3117 = vrot.slane %v3074, 4
        %v3118 = vsel %vm667, %v3098, %v3117
        %v3119 = vrot.slane %v3102, 4
        %v3120 = vsel %vm667, %v3119, %v3078
        %v3121 = vrot.slane %v3078, 4
        %v3122 = vsel %vm667, %v3102, %v3121
        %v3123 = vrot.slane %v3110, 4
        %v3124 = vsel %vm667, %v3123, %v3086
        %v3125 = vrot.slane %v3086, 4
        %v3126 = vsel %vm667, %v3110, %v3125
        %v3127 = vrot.slane %v3114, 4
        %v3128 = vsel %vm667, %v3127, %v3090
        %v3129 = vrot.slane %v3090, 4
        %v3130 = vsel %vm667, %v3114, %v3129
        %vm3131 = vcmask 64512
        %3132 = vst.msk [vmem:[%s444] sm:$0xff] %vm3131, %v1140
        %3133 = vst.msk [vmem:[%s444 + $0x8] sm:$0xff] %vm3131, %v1142
        %3134 = vst.msk [vmem:[%s444 + $0x10] sm:$0xff] %vm3131, %v1144
        %3135 = vst.msk [vmem:[%s444 + $0x18] sm:$0xff] %vm3131, %v1146
        %3136 = vst.msk [vmem:[%s444 + $0x20] sm:$0xff] %vm3131, %v1148
        %3137 = vst.msk [vmem:[%s444 + $0x28] sm:$0xff] %vm3131, %v1150
        %3138 = vst.msk [vmem:[%s444 + $0x30] sm:$0xff] %vm3131, %v1152
        %3139 = vst.msk [vmem:[%s444 + $0x38] sm:$0xff] %vm3131, %v1154
        %3140 = vst.msk [vmem:[%s444 + $0x40] sm:$0xff] %vm3131, %v1252
        %3141 = vst.msk [vmem:[%s444 + $0x48] sm:$0xff] %vm3131, %v1254
        %3142 = vst.msk [vmem:[%s444 + $0x50] sm:$0xff] %vm3131, %v1256
        %3143 = vst.msk [vmem:[%s444 + $0x58] sm:$0xff] %vm3131, %v1258
        %3144 = vst.msk [vmem:[%s444 + $0x60] sm:$0xff] %vm3131, %v1260
        %3145 = vst.msk [vmem:[%s444 + $0x68] sm:$0xff] %vm3131, %v1262
        %3146 = vst.msk [vmem:[%s444 + $0x70] sm:$0xff] %vm3131, %v1264
        %3147 = vst.msk [vmem:[%s444 + $0x78] sm:$0xff] %vm3131, %v1266
        %3148 = vst.msk [vmem:[%s444 + $0x80] sm:$0xff] %vm3131, %v1364
        %3149 = vst.msk [vmem:[%s444 + $0x88] sm:$0xff] %vm3131, %v1366
        %3150 = vst.msk [vmem:[%s444 + $0x90] sm:$0xff] %vm3131, %v1368
        %3151 = vst.msk [vmem:[%s444 + $0x98] sm:$0xff] %vm3131, %v1370
        %3152 = vst.msk [vmem:[%s444 + $0xa0] sm:$0xff] %vm3131, %v1372
        %3153 = vst.msk [vmem:[%s444 + $0xa8] sm:$0xff] %vm3131, %v1374
        %3154 = vst.msk [vmem:[%s444 + $0xb0] sm:$0xff] %vm3131, %v1376
        %3155 = vst.msk [vmem:[%s444 + $0xb8] sm:$0xff] %vm3131, %v1378
        %3156 = vst.msk [vmem:[%s444 + $0xc0] sm:$0xff] %vm3131, %v1476
        %3157 = vst.msk [vmem:[%s444 + $0xc8] sm:$0xff] %vm3131, %v1478
        %3158 = vst.msk [vmem:[%s444 + $0xd0] sm:$0xff] %vm3131, %v1480
        %3159 = vst.msk [vmem:[%s444 + $0xd8] sm:$0xff] %vm3131, %v1482
        %3160 = vst.msk [vmem:[%s444 + $0xe0] sm:$0xff] %vm3131, %v1484
        %3161 = vst.msk [vmem:[%s444 + $0xe8] sm:$0xff] %vm3131, %v1486
        %3162 = vst.msk [vmem:[%s444 + $0xf0] sm:$0xff] %vm3131, %v1488
        %3163 = vst.msk [vmem:[%s444 + $0xf8] sm:$0xff] %vm3131, %v1490
        %3164 = vst.msk [vmem:[%s444 + $0x100] sm:$0xff] %vm3131, %v1588
        %3165 = vst.msk [vmem:[%s444 + $0x108] sm:$0xff] %vm3131, %v1590
        %3166 = vst.msk [vmem:[%s444 + $0x110] sm:$0xff] %vm3131, %v1592
        %3167 = vst.msk [vmem:[%s444 + $0x118] sm:$0xff] %vm3131, %v1594
        %3168 = vst.msk [vmem:[%s444 + $0x120] sm:$0xff] %vm3131, %v1596
        %3169 = vst.msk [vmem:[%s444 + $0x128] sm:$0xff] %vm3131, %v1598
        %3170 = vst.msk [vmem:[%s444 + $0x130] sm:$0xff] %vm3131, %v1600
        %3171 = vst.msk [vmem:[%s444 + $0x138] sm:$0xff] %vm3131, %v1602
        %3172 = vst.msk [vmem:[%s444 + $0x140] sm:$0xff] %vm3131, %v1700
        %3173 = vst.msk [vmem:[%s444 + $0x148] sm:$0xff] %vm3131, %v1702
        %3174 = vst.msk [vmem:[%s444 + $0x150] sm:$0xff] %vm3131, %v1704
        %3175 = vst.msk [vmem:[%s444 + $0x158] sm:$0xff] %vm3131, %v1706
        %3176 = vst.msk [vmem:[%s444 + $0x160] sm:$0xff] %vm3131, %v1708
        %3177 = vst.msk [vmem:[%s444 + $0x168] sm:$0xff] %vm3131, %v1710
        %3178 = vst.msk [vmem:[%s444 + $0x170] sm:$0xff] %vm3131, %v1712
        %3179 = vst.msk [vmem:[%s444 + $0x178] sm:$0xff] %vm3131, %v1714
        %3180 = vst.msk [vmem:[%s444 + $0x180] sm:$0xff] %vm3131, %v1812
        %3181 = vst.msk [vmem:[%s444 + $0x188] sm:$0xff] %vm3131, %v1814
        %3182 = vst.msk [vmem:[%s444 + $0x190] sm:$0xff] %vm3131, %v1816
        %3183 = vst.msk [vmem:[%s444 + $0x198] sm:$0xff] %vm3131, %v1818
        %3184 = vst.msk [vmem:[%s444 + $0x1a0] sm:$0xff] %vm3131, %v1820
        %3185 = vst.msk [vmem:[%s444 + $0x1a8] sm:$0xff] %vm3131, %v1822
        %3186 = vst.msk [vmem:[%s444 + $0x1b0] sm:$0xff] %vm3131, %v1824
        %3187 = vst.msk [vmem:[%s444 + $0x1b8] sm:$0xff] %vm3131, %v1826
        %3188 = vst.msk [vmem:[%s444 + $0x1c0] sm:$0xff] %vm3131, %v1924
        %3189 = vst.msk [vmem:[%s444 + $0x1c8] sm:$0xff] %vm3131, %v1926
        %3190 = vst.msk [vmem:[%s444 + $0x1d0] sm:$0xff] %vm3131, %v1928
        %3191 = vst.msk [vmem:[%s444 + $0x1d8] sm:$0xff] %vm3131, %v1930
        %3192 = vst.msk [vmem:[%s444 + $0x1e0] sm:$0xff] %vm3131, %v1932
        %3193 = vst.msk [vmem:[%s444 + $0x1e8] sm:$0xff] %vm3131, %v1934
        %3194 = vst.msk [vmem:[%s444 + $0x1f0] sm:$0xff] %vm3131, %v1936
        %3195 = vst.msk [vmem:[%s444 + $0x1f8] sm:$0xff] %vm3131, %v1938
        %3196 = vst.msk [vmem:[%s444 + $0x200] sm:$0xff] %vm3131, %v2036
        %3197 = vst.msk [vmem:[%s444 + $0x208] sm:$0xff] %vm3131, %v2038
        %3198 = vst.msk [vmem:[%s444 + $0x210] sm:$0xff] %vm3131, %v2040
        %3199 = vst.msk [vmem:[%s444 + $0x218] sm:$0xff] %vm3131, %v2042
        %3200 = vst.msk [vmem:[%s444 + $0x220] sm:$0xff] %vm3131, %v2044
        %3201 = vst.msk [vmem:[%s444 + $0x228] sm:$0xff] %vm3131, %v2046
        %3202 = vst.msk [vmem:[%s444 + $0x230] sm:$0xff] %vm3131, %v2048
        %3203 = vst.msk [vmem:[%s444 + $0x238] sm:$0xff] %vm3131, %v2050
        %3204 = vst.msk [vmem:[%s444 + $0x240] sm:$0xff] %vm3131, %v2088
        %3205 = vst.msk [vmem:[%s444 + $0x248] sm:$0xff] %vm3131, %v2090
        %3206 = vst.msk [vmem:[%s455] sm:$0xff] %vm3131, %v2444
        %3207 = vst.msk [vmem:[%s455 + $0x8] sm:$0xff] %vm3131, %v2446
        %3208 = vst.msk [vmem:[%s455 + $0x10] sm:$0xff] %vm3131, %v2448
        %3209 = vst.msk [vmem:[%s455 + $0x18] sm:$0xff] %vm3131, %v2450
        %3210 = vst.msk [vmem:[%s455 + $0x20] sm:$0xff] %vm3131, %v2452
        %3211 = vst.msk [vmem:[%s455 + $0x28] sm:$0xff] %vm3131, %v2454
        %3212 = vst.msk [vmem:[%s455 + $0x30] sm:$0xff] %vm3131, %v2456
        %3213 = vst.msk [vmem:[%s455 + $0x38] sm:$0xff] %vm3131, %v2458
        %3214 = vst.msk [vmem:[%s455 + $0x40] sm:$0xff] %vm3131, %v2556
        %3215 = vst.msk [vmem:[%s455 + $0x48] sm:$0xff] %vm3131, %v2558
        %3216 = vst.msk [vmem:[%s455 + $0x50] sm:$0xff] %vm3131, %v2560
        %3217 = vst.msk [vmem:[%s455 + $0x58] sm:$0xff] %vm3131, %v2562
        %3218 = vst.msk [vmem:[%s455 + $0x60] sm:$0xff] %vm3131, %v2564
        %3219 = vst.msk [vmem:[%s455 + $0x68] sm:$0xff] %vm3131, %v2566
        %3220 = vst.msk [vmem:[%s455 + $0x70] sm:$0xff] %vm3131, %v2568
        %3221 = vst.msk [vmem:[%s455 + $0x78] sm:$0xff] %vm3131, %v2570
        %3222 = vst.msk [vmem:[%s455 + $0x80] sm:$0xff] %vm3131, %v2668
        %3223 = vst.msk [vmem:[%s455 + $0x88] sm:$0xff] %vm3131, %v2670
        %3224 = vst.msk [vmem:[%s455 + $0x90] sm:$0xff] %vm3131, %v2672
        %3225 = vst.msk [vmem:[%s455 + $0x98] sm:$0xff] %vm3131, %v2674
        %3226 = vst.msk [vmem:[%s455 + $0xa0] sm:$0xff] %vm3131, %v2676
        %3227 = vst.msk [vmem:[%s455 + $0xa8] sm:$0xff] %vm3131, %v2678
        %3228 = vst.msk [vmem:[%s455 + $0xb0] sm:$0xff] %vm3131, %v2680
        %3229 = vst.msk [vmem:[%s455 + $0xb8] sm:$0xff] %vm3131, %v2682
        %3230 = vst.msk [vmem:[%s455 + $0xc0] sm:$0xff] %vm3131, %v2780
        %3231 = vst.msk [vmem:[%s455 + $0xc8] sm:$0xff] %vm3131, %v2782
        %3232 = vst.msk [vmem:[%s455 + $0xd0] sm:$0xff] %vm3131, %v2784
        %3233 = vst.msk [vmem:[%s455 + $0xd8] sm:$0xff] %vm3131, %v2786
        %3234 = vst.msk [vmem:[%s455 + $0xe0] sm:$0xff] %vm3131, %v2788
        %3235 = vst.msk [vmem:[%s455 + $0xe8] sm:$0xff] %vm3131, %v2790
        %3236 = vst.msk [vmem:[%s455 + $0xf0] sm:$0xff] %vm3131, %v2792
        %3237 = vst.msk [vmem:[%s455 + $0xf8] sm:$0xff] %vm3131, %v2794
        %3238 = vst.msk [vmem:[%s455 + $0x100] sm:$0xff] %vm3131, %v2892
        %3239 = vst.msk [vmem:[%s455 + $0x108] sm:$0xff] %vm3131, %v2894
        %3240 = vst.msk [vmem:[%s455 + $0x110] sm:$0xff] %vm3131, %v2896
        %3241 = vst.msk [vmem:[%s455 + $0x118] sm:$0xff] %vm3131, %v2898
        %3242 = vst.msk [vmem:[%s455 + $0x120] sm:$0xff] %vm3131, %v2900
        %3243 = vst.msk [vmem:[%s455 + $0x128] sm:$0xff] %vm3131, %v2902
        %3244 = vst.msk [vmem:[%s455 + $0x130] sm:$0xff] %vm3131, %v2904
        %3245 = vst.msk [vmem:[%s455 + $0x138] sm:$0xff] %vm3131, %v2906
        %3246 = vst.msk [vmem:[%s455 + $0x140] sm:$0xff] %vm3131, %v3004
        %3247 = vst.msk [vmem:[%s455 + $0x148] sm:$0xff] %vm3131, %v3006
        %3248 = vst.msk [vmem:[%s455 + $0x150] sm:$0xff] %vm3131, %v3008
        %3249 = vst.msk [vmem:[%s455 + $0x158] sm:$0xff] %vm3131, %v3010
        %3250 = vst.msk [vmem:[%s455 + $0x160] sm:$0xff] %vm3131, %v3012
        %3251 = vst.msk [vmem:[%s455 + $0x168] sm:$0xff] %vm3131, %v3014
        %3252 = vst.msk [vmem:[%s455 + $0x170] sm:$0xff] %vm3131, %v3016
        %3253 = vst.msk [vmem:[%s455 + $0x178] sm:$0xff] %vm3131, %v3018
        %3254 = vst.msk [vmem:[%s455 + $0x180] sm:$0xff] %vm3131, %v3116
        %3255 = vst.msk [vmem:[%s455 + $0x188] sm:$0xff] %vm3131, %v3118
        %3256 = vst.msk [vmem:[%s455 + $0x190] sm:$0xff] %vm3131, %v3120
        %3257 = vst.msk [vmem:[%s455 + $0x198] sm:$0xff] %vm3131, %v3122
        %3258 = vst.msk [vmem:[%s455 + $0x1a0] sm:$0xff] %vm3131, %v3124
        %3259 = vst.msk [vmem:[%s455 + $0x1a8] sm:$0xff] %vm3131, %v3126
        %3260 = vst.msk [vmem:[%s455 + $0x1b0] sm:$0xff] %vm3131, %v3128
        %3261 = vst.msk [vmem:[%s455 + $0x1b8] sm:$0xff] %vm3131, %v3130
        %p3262 = scmp.lt.s32.totalorder %s31, 1
        %s3263 = scalar_select %p3262, %s31, 1
        %p3264 = scmp.lt.s32.totalorder %s32, 0
        %s3265 = scalar_select %p3264, %s32, 0
        %p3266 = scmp.lt.s32.totalorder %s33, 0
        %s3267 = scalar_select %p3266, %s33, 0
        %s3268 = sadd.s32 %s3267, %s3265
        %s3269 = smul.addr %s3263, 74
        %s3270 = sadd.s32 %s3268, %s3269
        %s3271 = smul.addr %s3270, 8
        %s3272 = scalar_lea.vmem %s6, %s3271
        %p3273 = scmp.lt.s32.totalorder %s31, 1
        %s3274 = scalar_select %p3273, %s31, 1
        %p3275 = scmp.lt.s32.totalorder %s32, 0
        %s3276 = scalar_select %p3275, %s32, 0
        %p3277 = scmp.lt.s32.totalorder %s33, 0
        %s3278 = scalar_select %p3277, %s33, 0
        %s3279 = sadd.s32 %s3278, %s3276
        %s3280 = smul.addr %s3274, 56
        %s3281 = sadd.s32 %s3279, %s3280
        %s3282 = smul.addr %s3281, 8
        %s3283 = scalar_lea.vmem %s7, %s3282
        // Predicated region
        $region61: #{tpu_custom_call.1} parent=43 // pred_check
          %p3284 = pneg %p211
        $region62: #{tpu_custom_call.1} parent=43 // pred_check_branch
          %3286 = sbr.rel (%p3284) target = $region64
        $region63: #{tpu_custom_call.1} parent=43 // pred_region
          _
        $region64: #{tpu_custom_call.1} parent=43 // pred_fallthru
          _
        // Predicated region
        $region65: #{tpu_custom_call.1} parent=43 // pred_check
          %p3287 = pneg %p241
        $region66: #{tpu_custom_call.1} parent=43 // pred_check_branch
          %3289 = sbr.rel (%p3287) target = $region68
        $region67: #{tpu_custom_call.1} parent=43 // pred_region
          _
        $region68: #{tpu_custom_call.1} parent=43 // pred_fallthru
          _
      $region44: #{tpu_custom_call.1} parent=5 // pred_fallthru
        _
      %p3290 = scmp.le.s32.totalorder 2, %s21
      // Predicated region
      $region69: #{tpu_custom_call.1} parent=5 // pred_check
        %p3291 = pneg %p3290
      $region70: #{tpu_custom_call.1} parent=5 // pred_check_branch
        %3293 = sbr.rel (%p3291) target = $region72
      $region71: #{tpu_custom_call.1} parent=5 // pred_region
        %s3294 = ssub.s32 %s21, 2
        // Predicated region
        $region73: #{tpu_custom_call.1} parent=71 // pred_check
          %p3295 = pneg %p217
        $region74: #{tpu_custom_call.1} parent=71 // pred_check_branch
          %3297 = sbr.rel (%p3295) target = $region76
        $region75: #{tpu_custom_call.1} parent=71 // pred_region
          %p3298 = scmp.lt.s32.totalorder %s34, 1
          %s3299 = scalar_select %p3298, %s34, 1
          %p3300 = scmp.lt.s32.totalorder %s35, 0
          %s3301 = scalar_select %p3300, %s35, 0
          %p3302 = scmp.lt.s32.totalorder %s36, 0
          %s3303 = scalar_select %p3302, %s36, 0
          %s3304 = sadd.s32 %s3303, %s3301
          %s3305 = smul.addr %s3299, 74
          %s3306 = sadd.s32 %s3304, %s3305
          %s3307 = smul.addr %s3306, 8
          %s3308 = scalar_lea.vmem %s6, %s3307
        $region76: #{tpu_custom_call.1} parent=71 // pred_fallthru
          _
        // Predicated region
        $region77: #{tpu_custom_call.1} parent=71 // pred_check
          %p3309 = pneg %p247
        $region78: #{tpu_custom_call.1} parent=71 // pred_check_branch
          %3311 = sbr.rel (%p3309) target = $region80
        $region79: #{tpu_custom_call.1} parent=71 // pred_region
          %p3312 = scmp.lt.s32.totalorder %s34, 1
          %s3313 = scalar_select %p3312, %s34, 1
          %p3314 = scmp.lt.s32.totalorder %s35, 0
          %s3315 = scalar_select %p3314, %s35, 0
          %p3316 = scmp.lt.s32.totalorder %s36, 0
          %s3317 = scalar_select %p3316, %s36, 0
          %s3318 = sadd.s32 %s3317, %s3315
          %s3319 = smul.addr %s3313, 56
          %s3320 = sadd.s32 %s3318, %s3319
          %s3321 = smul.addr %s3320, 8
          %s3322 = scalar_lea.vmem %s7, %s3321
        $region80: #{tpu_custom_call.1} parent=71 // pred_fallthru
          _
      $region72: #{tpu_custom_call.1} parent=5 // pred_fallthru
        _
    $region6: #{tpu_custom_call.1} parent=1 // loop_footer
      %s25 = sadd.s32 1, %s21
    $region7: #{tpu_custom_call.1} parent=1 // loop_footer_branch
      %20 = sbr.rel target = $region3
    $region8: #{tpu_custom_call.1} parent=1 // loop_exit
      _
    %3323 = vsyncpa [#allocation3], 1
    %s3324 = scalar_lea.sflag [#allocation3], 1
    %3325 = vsyncpa %s3324, 1
    %3326 = vsyncpa [#allocation5], 1
    %s3327 = scalar_lea.sflag [#allocation5], 1
    %3328 = vsyncpa %s3327, 1
    %3329 = vsyncpa [#allocation8], 1

</llo_original>
